<compile_context>
chip_gen: v6e
topology: v6e:2x2x1
jax: 0.10.0
libtpu: 0.0.40
codegen_flags: <defaults>
</compile_context>

<pallas_src>
import math
import functools

import numpy as np
import jax
import jax.numpy as jnp
from jax import lax
from jax.experimental import pallas as pl
from jax.experimental.pallas import tpu as pltpu

EPS = 1e-9
NUM_DECISIONS = 4          # decision head width: nn.Linear(s_dim, 4)


def _round_up(x, m):
    return ((x + m - 1) // m) * m


# ----------------------------------------------------------------------------
# In-kernel helpers
# ----------------------------------------------------------------------------
def _res(x, w1, b1, w2, b2):
    """ResLayer: x + ReLU(Linear(ReLU(Linear(x))))."""
    h = jnp.maximum(jnp.dot(x, w1, preferred_element_type=jnp.float32) + b1, 0.0)
    h = jnp.maximum(jnp.dot(h, w2, preferred_element_type=jnp.float32) + b2, 0.0)
    return h + x


def _softmax_last(y):
    y = y - jnp.max(y, axis=-1, keepdims=True)
    e = jnp.exp(y)
    return e / jnp.sum(e, axis=-1, keepdims=True)


def _softmax0(y):
    y = y - jnp.max(y, axis=0, keepdims=True)
    e = jnp.exp(y)
    return e / jnp.sum(e, axis=0, keepdims=True)


# ----------------------------------------------------------------------------
# The single fused kernel
# ----------------------------------------------------------------------------
def _fused_kernel(x_ref, nonterm_ref, d_ref, root_ref, vocabT_ref,
                  tw_ref, tb_ref, mw_ref, mb_ref,
                  rm_wo_ref, rm_bo_ref, dec_wo_ref, dec_bo_ref,
                  wnt_ref, bnt_ref, wd_ref, bd_ref,
                  r12nt_ref, r34d_ref, wcolsnt_ref, wcolsd_ref,
                  r4T_ref, dec_rep_ref, eye_dc_ref, base_scale_ref,
                  out_ref, *, NT, V, R_c, R_d, R_root, R_u):
    f32 = jnp.float32
    nonterm = nonterm_ref[...]                                   # (NT+T, s), loaded once

    # ---- term path: term_mlp -> vocab logits -> softmax --------------------
    t = nonterm[NT:, :]                                          # (T, s), sublane-aligned slice
    t = jnp.dot(t, tw_ref[0], preferred_element_type=f32) + tb_ref[0]
    t = _res(t, tw_ref[1], tb_ref[1], tw_ref[2], tb_ref[2])
    t = _res(t, tw_ref[3], tb_ref[3], tw_ref[4], tb_ref[4])
    t = _res(t, tw_ref[5], tb_ref[5], tw_ref[6], tb_ref[6])
    term_prob = _softmax_last(
        jnp.dot(t, vocabT_ref[...], preferred_element_type=f32))  # (T, V)

    # in-kernel vocabulary gather: one-hot(x) then one MXU matmul
    x_row = x_ref[...]                                             # (1, b*n) int32
    vio = lax.broadcasted_iota(jnp.int32, (V, x_row.shape[1]), 0)
    onehot = (vio == x_row).astype(f32)                            # (V, b*n)
    U = jnp.dot(term_prob, onehot, preferred_element_type=f32)     # (T, b*n); U[p,i]=P(x_i | p)

    # ---- fused grammar projections (six ReLU linears -> two matmuls) -------
    nt_proj = jnp.maximum(
        jnp.dot(nonterm, wnt_ref[...], preferred_element_type=f32) + bnt_ref[...], 0.0)  # (NT+T, 4s)
    d_proj = jnp.maximum(
        jnp.dot(d_ref[...], wd_ref[...], preferred_element_type=f32) + bd_ref[...], 0.0)  # (D, 2s)

    # rule-head softmaxes (last axis); r12/r34 padded into the parent row block
    head_c12 = _softmax_last(
        jnp.dot(nt_proj[:NT, :], r12nt_ref[...], preferred_element_type=f32))   # (NT, r1+r2)
    head_d12 = _softmax_last(
        jnp.dot(d_proj, r34d_ref[...], preferred_element_type=f32))             # (D, r3+r4)

    # rule-column softmaxes (axis 0): one block-weight push + one softmax each
    colsN = _softmax0(
        jnp.dot(nt_proj, wcolsnt_ref[...], preferred_element_type=f32))         # (NT+T, ncols)
    colsD = _softmax0(
        jnp.dot(d_proj, wcolsd_ref[...], preferred_element_type=f32))           # (D, r2+r4)

    # ---- decision MLP + dc-column scaling (precomputed constants) ----------
    dh = _res(r4T_ref[...], mw_ref[5], mb_ref[5], mw_ref[6], mb_ref[6])         # (r4, s)
    decision = _softmax_last(
        jnp.dot(dh, dec_wo_ref[...], preferred_element_type=f32) + dec_bo_ref[...])  # (r4, 4)
    # scale[0, off_dc + d*r4 + j] = decision[j, d]; 1.0 in the non-dc columns.
    rep = jnp.dot(decision, dec_rep_ref[...], preferred_element_type=f32)       # (r4, ncols)
    scale = base_scale_ref[...] + jnp.sum(eye_dc_ref[...] * rep, axis=0, keepdims=True)
    colsN = colsN * scale

    # ---- root MLP -----------------------------------------------------------
    h = jnp.dot(root_ref[...], mw_ref[0], preferred_element_type=f32) + mb_ref[0]
    h = _res(h, mw_ref[1], mb_ref[1], mw_ref[2], mb_ref[2])
    h = _res(h, mw_ref[3], mb_ref[3], mw_ref[4], mb_ref[4])
    root = _softmax_last(
        jnp.dot(h, rm_wo_ref[...], preferred_element_type=f32) + rm_bo_ref[...])  # (1, NT)

    # ---- rule contractions, log(+eps), packed lane-dense stores -------------
    g_c = lax.dot_general(colsN[:NT, :], head_c12, (((0,), (0,)), ((), ())),
                          preferred_element_type=f32)                           # (ncols, r1+r2)
    g_d = lax.dot_general(colsD, head_d12, (((0,), (0,)), ((), ())),
                          preferred_element_type=f32)                           # (r2+r4, r3+r4)
    root_row = jnp.dot(root, head_c12, preferred_element_type=f32)              # (1, r1+r2)
    g_u = lax.dot_general(U, colsN[NT:, :], (((0,), (0,)), ((), ())),
                          preferred_element_type=f32)                           # (b*n, ncols)

    out_ref[R_c:R_c + g_c.shape[0], 0:g_c.shape[1]] = jnp.log(g_c + EPS)
    out_ref[R_d:R_d + g_d.shape[0], 0:g_d.shape[1]] = jnp.log(g_d + EPS)
    out_ref[R_root:R_root + 1, 0:root_row.shape[1]] = jnp.log(root_row + EPS)
    out_ref[R_u:R_u + g_u.shape[0], 0:g_u.shape[1]] = jnp.log(g_u + EPS)


def fused_forward_pallas(cfg, fused, x_row):
    NT, V = cfg['NT'], cfg['V']
    r1, r2, r3, r4 = cfg['r1'], cfg['r2'], cfg['r3'], cfg['r4']
    bn = x_row.shape[1]
    ncols = 2 * (r1 + r3) + r2 + NUM_DECISIONS * r4
    assert max(ncols, r1 + r2, r3 + r4) <= 128, "toy-config packing assumes <=128 lanes"

    # row offsets of the packed output slab (all sublane-aligned)
    R_c = 0
    R_d = _round_up(ncols, 8)
    R_root = _round_up(R_d + r2 + r4, 8)
    R_u = _round_up(R_root + 1, 8)
    rows = _round_up(R_u + bn, 8)

    kernel = functools.partial(_fused_kernel, NT=NT, V=V,
                               R_c=R_c, R_d=R_d, R_root=R_root, R_u=R_u)
    slab = pl.pallas_call(
        kernel,
        out_shape=jax.ShapeDtypeStruct((rows, 128), jnp.float32),
        compiler_params=pltpu.CompilerParams(vmem_limit_bytes=32 * 1024 * 1024),
    )(x_row, fused['nonterm'], fused['d_emb'], fused['root_emb'], fused['vocabT'],
      fused['tw'], fused['tb'], fused['mw'], fused['mb'],
      fused['rm_wo'], fused['rm_bo'], fused['dec_wo'], fused['dec_bo'],
      fused['wnt'], fused['bnt'], fused['wd'], fused['bd'],
      fused['r12nt'], fused['r34d'], fused['wcols_nt'], fused['wcols_d'],
      fused['r4T'], fused['dec_rep'], fused['eye_dc'], fused['base_scale'])
    return slab, (R_c, R_d, R_root, R_u, ncols)


# ----------------------------------------------------------------------------
# Parameter initialization (deterministic, xavier-uniform-like, torch layout)
# ----------------------------------------------------------------------------
def init_params(key, cfg):
    NT, T, D = cfg['NT'], cfg['T'], cfg['D']
    s, V = cfg['s_dim'], cfg['V']
    keys = iter(jax.random.split(key, 64))

    def xavier(shape):
        fan_out, fan_in = shape[0], shape[1]
        bound = math.sqrt(6.0 / (fan_in + fan_out))
        return jax.random.uniform(next(keys), shape, jnp.float32, -bound, bound)

    def lin(in_dim, out_dim):
        bound = math.sqrt(6.0 / (in_dim + out_dim))
        w = jax.random.uniform(next(keys), (in_dim, out_dim), jnp.float32, -bound, bound)
        bb = 1.0 / math.sqrt(in_dim)
        bias = jax.random.uniform(next(keys), (1, out_dim), jnp.float32, -bb, bb)
        return {'w': w, 'b': bias}

    def res(dim):
        return {'lin1': lin(dim, dim), 'lin2': lin(dim, dim)}

    p = {
        'nonterm_emb': xavier((NT + T, s)),
        # term_emb / left_d / right_d MLPs exist in the torch module but are unused in forward()
        'd_emb': xavier((D, s)),
        'root_emb': xavier((1, s)),
        'vocab_emb': xavier((V, s)),
        'r1_emb': xavier((s, cfg['r1'])),
        'r2_emb': xavier((s, cfg['r2'])),
        'r3_emb': xavier((s, cfg['r3'])),
        'r4_emb': xavier((s, cfg['r4'])),
        'term_mlp': {'lin0': lin(s, s), 'res1': res(s), 'res2': res(s), 'res3': res(s)},
        'root_mlp': {'lin0': lin(s, s), 'res1': res(s), 'res2': res(s), 'out': lin(s, NT)},
        'decision': {'res1': res(s), 'out': lin(s, NUM_DECISIONS)},
        'left_c': lin(s, s), 'right_c': lin(s, s),
        'parent_c': lin(s, s), 'parent_d': lin(s, s),
        'cc_mlp': lin(s, s), 'cd_mlp': lin(s, s),
    }
    return p


def fuse_params(cfg, p):
    """One-time weight concatenation / block-weight construction."""
    s = cfg['s_dim']
    r1, r2, r3, r4 = cfg['r1'], cfg['r2'], cfg['r3'], cfg['r4']
    ncols = 2 * (r1 + r3) + r2 + NUM_DECISIONS * r4
    off_dc = 2 * (r1 + r3) + r2

    cat = lambda *ms: jnp.concatenate(ms, axis=1)
    zeros = lambda r, c: jnp.zeros((r, c), jnp.float32)

    r1e, r2e, r3e, r4e = p['r1_emb'], p['r2_emb'], p['r3_emb'], p['r4_emb']

    def res_ws(r):
        return [r['lin1']['w'], r['lin2']['w']]

    def res_bs(r):
        return [r['lin1']['b'], r['lin2']['b']]

    tm, rm, dec = p['term_mlp'], p['root_mlp'], p['decision']

    # block-structured rule-column weight (4s, ncols); row blocks match the
    # fused nt-projection column blocks [parent_c | left_c | right_c | cc_mlp]
    blk_parent = zeros(s, ncols)
    blk_left = cat(r1e, r3e, zeros(s, ncols - (r1 + r3)))
    blk_right = cat(zeros(s, r1 + r3), r1e, r3e, zeros(s, ncols - 2 * (r1 + r3)))
    blk_cc = cat(zeros(s, 2 * (r1 + r3)), r2e, *([r4e] * NUM_DECISIONS))
    wcols_nt = jnp.concatenate([blk_parent, blk_left, blk_right, blk_cc], axis=0)

    # (2s, r2+r4): only the cd_mlp row block is non-zero -> columns [cd | dd]
    wcols_d = jnp.concatenate([zeros(s, r2 + r4), cat(r2e, r4e)], axis=0)

    # r12 / r34 padded into the parent row block (no lane slicing in-kernel)
    r12nt = jnp.concatenate([cat(r1e, r2e), zeros(3 * s, r1 + r2)], axis=0)   # (4s, r1+r2)
    r34d = jnp.concatenate([cat(r3e, r4e), zeros(s, r3 + r4)], axis=0)        # (2s, r3+r4)

    # precomputed decision-scaling constants (hoisted out of the kernel)
    dec_rep = np.zeros((NUM_DECISIONS, ncols), np.float32)
    eye_dc = np.zeros((r4, ncols), np.float32)
    base = np.zeros((1, ncols), np.float32)
    base[0, :off_dc] = 1.0
    for d in range(NUM_DECISIONS):
        dec_rep[d, off_dc + d * r4: off_dc + (d + 1) * r4] = 1.0
        for j in range(r4):
            eye_dc[j, off_dc + d * r4 + j] = 1.0

    return {
        'nonterm': p['nonterm_emb'],
        'd_emb': p['d_emb'],
        'root_emb': p['root_emb'],
        'vocabT': p['vocab_emb'].T,                                   # pre-transposed once
        'r4T': p['r4_emb'].T,
        # six ReLU projection linears fused into two wide weight blocks
        'wnt': cat(p['parent_c']['w'], p['left_c']['w'], p['right_c']['w'], p['cc_mlp']['w']),
        'bnt': cat(p['parent_c']['b'], p['left_c']['b'], p['right_c']['b'], p['cc_mlp']['b']),
        'wd': cat(p['parent_d']['w'], p['cd_mlp']['w']),
        'bd': cat(p['parent_d']['b'], p['cd_mlp']['b']),
        'r12nt': r12nt, 'r34d': r34d,
        'wcols_nt': wcols_nt, 'wcols_d': wcols_d,
        'dec_rep': jnp.asarray(dec_rep),
        'eye_dc': jnp.asarray(eye_dc),
        'base_scale': jnp.asarray(base),
        # term_mlp stack: [lin0, res1.lin1, res1.lin2, res2.lin1, res2.lin2, res3.lin1, res3.lin2]
        'tw': jnp.stack([tm['lin0']['w']] + res_ws(tm['res1']) + res_ws(tm['res2']) + res_ws(tm['res3'])),
        'tb': jnp.stack([tm['lin0']['b']] + res_bs(tm['res1']) + res_bs(tm['res2']) + res_bs(tm['res3'])),
        # root_mlp (0..4) + decision res layer (5, 6) stack
        'mw': jnp.stack([rm['lin0']['w']] + res_ws(rm['res1']) + res_ws(rm['res2']) + res_ws(dec['res1'])),
        'mb': jnp.stack([rm['lin0']['b']] + res_bs(rm['res1']) + res_bs(rm['res2']) + res_bs(dec['res1'])),
        'rm_wo': rm['out']['w'], 'rm_bo': rm['out']['b'],
        'dec_wo': dec['out']['w'], 'dec_bo': dec['out']['b'],
    }


# ----------------------------------------------------------------------------
# Forward pass (mirrors TNLCFRS.forward)
# ----------------------------------------------------------------------------
def forward(cfg, fused, x):
    r1, r2, r3, r4 = cfg['r1'], cfg['r2'], cfg['r3'], cfg['r4']
    b, n = x.shape
    x_row = x.reshape(1, b * n).astype(jnp.int32)

    slab, (R_c, R_d, R_root, R_u, ncols) = fused_forward_pallas(cfg, fused, x_row)

    out_c = slab[R_c:R_c + ncols, :r1 + r2]          # NT contractions (log)
    out_cd = slab[R_d:R_d + r2 + r4, :r3 + r4]       # cd/dd contractions (log)
    out_root = slab[R_root:R_root + 1, :r1 + r2]     # root row (log)
    out_u = slab[R_u:R_u + b * n, :ncols]            # unary projections (log)

    rep = lambda a: jnp.broadcast_to(a[None], (b,) + a.shape)

    # ---- cd/dd contractions ----
    head_cd1 = rep(out_cd[:r2, :r3])
    head_cd2 = rep(out_cd[:r2, r3:])
    head_dd1 = rep(out_cd[r2:, :r3])
    head_dd2 = rep(out_cd[r2:, r3:])

    # ---- NT contractions; rows follow [left_c|left_d|right_c|right_d|cc|dc*dec] ----
    o = 0
    lc = out_c[o:o + r1]; o += r1
    ld = out_c[o:o + r3]; o += r3
    rc = out_c[o:o + r1]; o += r1
    rd = out_c[o:o + r3]; o += r3
    ccb = out_c[o:o + r2]; o += r2
    dcb = out_c[o:o + NUM_DECISIONS * r4]

    head_cl1 = rep(lc[:, :r1])
    head_cl2 = jnp.broadcast_to(lc[:, r1:][None, None], (b, 1, r1, r2))
    head_dl1 = rep(ld[:, :r1]); head_dl2 = rep(ld[:, r1:])
    head_cr1 = rep(rc[:, :r1]); head_cr2 = rep(rc[:, r1:])
    head_dr1 = rep(rd[:, :r1]); head_dr2 = rep(rd[:, r1:])
    head_cc1 = rep(ccb[:, :r1]); head_cc2 = rep(ccb[:, r1:])
    head_dc1 = rep(jnp.transpose(dcb[:, :r1].reshape(NUM_DECISIONS, r4, r1), (1, 0, 2)))
    head_dc2 = rep(jnp.transpose(dcb[:, r1:].reshape(NUM_DECISIONS, r4, r2), (1, 0, 2)))

    # ---- root row ----
    root_c = jnp.broadcast_to(out_root[:, :r1], (b, r1))
    root_d = jnp.broadcast_to(out_root[:, r1:], (b, r2))

    # ---- unary projection slab ----
    u = out_u.reshape(b, n, -1)
    o = 0
    unary_l = u[..., o:o + r1]; o += r1
    unary_ld = u[..., o:o + r3]; o += r3
    unary_r = u[..., o:o + r1]; o += r1
    unary_rd = u[..., o:o + r3]; o += r3
    unary_c = u[..., o:o + r2]; o += r2
    unary_d = u[..., o:o + NUM_DECISIONS * r4].reshape(b, n, NUM_DECISIONS, r4)

    return {
        'head_dd1': head_dd1, 'head_cd1': head_cd1,
        'head_dd2': head_dd2, 'head_cd2': head_cd2,
        'unary_l': unary_l, 'unary_ld': unary_ld,
        'unary_r': unary_r, 'unary_rd': unary_rd,
        'unary_c': unary_c, 'unary_d': unary_d,
        'head_cl1': head_cl1, 'head_cl2': head_cl2,
        'head_cr1': head_cr1, 'head_cr2': head_cr2,
        'head_dl1': head_dl1, 'head_dl2': head_dl2,
        'head_dr1': head_dr1, 'head_dr2': head_dr2,
        'head_cc1': head_cc1, 'head_cc2': head_cc2,
        'head_dc1': head_dc1, 'head_dc2': head_dc2,
        'root_c': root_c, 'root_d': root_d,
        'kl': jnp.asarray(0, jnp.int32),
    }


# ----------------------------------------------------------------------------
if __name__ == "__main__":
    cfg = dict(NT=8, T=16, D=8, r1=8, r2=8, r3=8, r4=8, s_dim=32, V=100)
    b, n = 2, 8

    key = jax.random.PRNGKey(0)
    pkey, xkey = jax.random.split(key)
    params = init_params(pkey, cfg)
    fused = fuse_params(cfg, params)
    x = jax.random.randint(xkey, (b, n), 0, cfg['V'], dtype=jnp.int32)

    fwd = jax.jit(functools.partial(forward, cfg))
    out = fwd(fused, x)
    out = jax.block_until_ready(out)

    expected = {
        'head_dd1': (b, 8, 8), 'head_cd1': (b, 8, 8),
        'head_dd2': (b, 8, 8), 'head_cd2': (b, 8, 8),
        'unary_l': (b, n, 8), 'unary_ld': (b, n, 8),
        'unary_r': (b, n, 8), 'unary_rd': (b, n, 8),
        'unary_c': (b, n, 8), 'unary_d': (b, n, 4, 8),
        'head_cl1': (b, 8, 8), 'head_cl2': (b, 1, 8, 8),
        'head_cr1': (b, 8, 8), 'head_cr2': (b, 8, 8),
        'head_dl1': (b, 8, 8), 'head_dl2': (b, 8, 8),
        'head_dr1': (b, 8, 8), 'head_dr2': (b, 8, 8),
        'head_cc1': (b, 8, 8), 'head_cc2': (b, 8, 8),
        'head_dc1': (b, 8, 4, 8), 'head_dc2': (b, 8, 4, 8),
        'root_c': (b, 8), 'root_d': (b, 8),
        'kl': (),
    }
    for k, shp in expected.items():
        assert tuple(out[k].shape) == shp, (k, out[k].shape, shp)
        assert bool(jnp.all(jnp.isfinite(out[k].astype(jnp.float32)))), k

    print("KERNEL_OK")
</pallas_src>

<mosaic_0001>
module attributes {stable_mosaic.version = 11 : i64} {
  func.func @_fused_kernel(%arg0: memref<1x16xi32, #tpu.memory_space<vmem>>, %arg1: memref<24x32xf32, #tpu.memory_space<vmem>>, %arg2: memref<8x32xf32, #tpu.memory_space<vmem>>, %arg3: memref<1x32xf32, #tpu.memory_space<vmem>>, %arg4: memref<32x100xf32, #tpu.memory_space<vmem>>, %arg5: memref<7x32x32xf32, #tpu.memory_space<vmem>>, %arg6: memref<7x1x32xf32, #tpu.memory_space<vmem>>, %arg7: memref<7x32x32xf32, #tpu.memory_space<vmem>>, %arg8: memref<7x1x32xf32, #tpu.memory_space<vmem>>, %arg9: memref<32x8xf32, #tpu.memory_space<vmem>>, %arg10: memref<1x8xf32, #tpu.memory_space<vmem>>, %arg11: memref<32x4xf32, #tpu.memory_space<vmem>>, %arg12: memref<1x4xf32, #tpu.memory_space<vmem>>, %arg13: memref<32x128xf32, #tpu.memory_space<vmem>>, %arg14: memref<1x128xf32, #tpu.memory_space<vmem>>, %arg15: memref<32x64xf32, #tpu.memory_space<vmem>>, %arg16: memref<1x64xf32, #tpu.memory_space<vmem>>, %arg17: memref<128x16xf32, #tpu.memory_space<vmem>>, %arg18: memref<64x16xf32, #tpu.memory_space<vmem>>, %arg19: memref<128x72xf32, #tpu.memory_space<vmem>>, %arg20: memref<64x16xf32, #tpu.memory_space<vmem>>, %arg21: memref<8x32xf32, #tpu.memory_space<vmem>>, %arg22: memref<4x72xf32, #tpu.memory_space<vmem>>, %arg23: memref<8x72xf32, #tpu.memory_space<vmem>>, %arg24: memref<1x72xf32, #tpu.memory_space<vmem>>, %arg25: memref<112x128xf32, #tpu.memory_space<vmem>>) attributes {dimension_semantics = [], scalar_prefetch = 0 : i64, scratch_operands = 0 : i64, tpu.core_type = #tpu.core_type<tc>} {
    %c0 = arith.constant 0 : index
    %c0_0 = arith.constant 0 : index
    %0 = vector.load %arg1[%c0, %c0_0] : memref<24x32xf32, #tpu.memory_space<vmem>>, vector<24x32xf32>
    %1 = vector.extract_strided_slice %0 {offsets = [8, 0], sizes = [16, 32], strides = [1, 1]} : vector<24x32xf32> to vector<16x32xf32>
    %c0_1 = arith.constant 0 : index
    %c0_2 = arith.constant 0 : index
    %c0_3 = arith.constant 0 : index
    %2 = vector.load %arg5[%c0_1, %c0_2, %c0_3] : memref<7x32x32xf32, #tpu.memory_space<vmem>>, vector<1x32x32xf32>
    %3 = vector.shape_cast %2 : vector<1x32x32xf32> to vector<32x32xf32>
    %cst = arith.constant dense<0.000000e+00> : vector<16x32xf32>
    %4 = tpu.matmul %1, %3, %cst {dimension_numbers = #tpu.dot_dimension_numbers<[1], [0], [0], [1], [0, 0, 1, 1], [], []>} : vector<16x32xf32>, vector<32x32xf32>, vector<16x32xf32> -> vector<16x32xf32>
    %c0_4 = arith.constant 0 : index
    %c0_5 = arith.constant 0 : index
    %c0_6 = arith.constant 0 : index
    %5 = vector.load %arg6[%c0_4, %c0_5, %c0_6] : memref<7x1x32xf32, #tpu.memory_space<vmem>>, vector<1x1x32xf32>
    %6 = vector.shape_cast %5 : vector<1x1x32xf32> to vector<1x32xf32>
    %7 = vector.broadcast %6 : vector<1x32xf32> to vector<16x32xf32>
    %8 = arith.addf %4, %7 : vector<16x32xf32>
    %c1 = arith.constant 1 : index
    %c0_7 = arith.constant 0 : index
    %c0_8 = arith.constant 0 : index
    %9 = vector.load %arg5[%c1, %c0_7, %c0_8] : memref<7x32x32xf32, #tpu.memory_space<vmem>>, vector<1x32x32xf32>
    %10 = vector.shape_cast %9 : vector<1x32x32xf32> to vector<32x32xf32>
    %c1_9 = arith.constant 1 : index
    %c0_10 = arith.constant 0 : index
    %c0_11 = arith.constant 0 : index
    %11 = vector.load %arg6[%c1_9, %c0_10, %c0_11] : memref<7x1x32xf32, #tpu.memory_space<vmem>>, vector<1x1x32xf32>
    %12 = vector.shape_cast %11 : vector<1x1x32xf32> to vector<1x32xf32>
    %c2 = arith.constant 2 : index
    %c0_12 = arith.constant 0 : index
    %c0_13 = arith.constant 0 : index
    %13 = vector.load %arg5[%c2, %c0_12, %c0_13] : memref<7x32x32xf32, #tpu.memory_space<vmem>>, vector<1x32x32xf32>
    %14 = vector.shape_cast %13 : vector<1x32x32xf32> to vector<32x32xf32>
    %c2_14 = arith.constant 2 : index
    %c0_15 = arith.constant 0 : index
    %c0_16 = arith.constant 0 : index
    %15 = vector.load %arg6[%c2_14, %c0_15, %c0_16] : memref<7x1x32xf32, #tpu.memory_space<vmem>>, vector<1x1x32xf32>
    %16 = vector.shape_cast %15 : vector<1x1x32xf32> to vector<1x32xf32>
    %cst_17 = arith.constant dense<0.000000e+00> : vector<16x32xf32>
    %17 = tpu.matmul %8, %10, %cst_17 {dimension_numbers = #tpu.dot_dimension_numbers<[1], [0], [0], [1], [0, 0, 1, 1], [], []>} : vector<16x32xf32>, vector<32x32xf32>, vector<16x32xf32> -> vector<16x32xf32>
    %18 = vector.broadcast %12 : vector<1x32xf32> to vector<16x32xf32>
    %19 = arith.addf %17, %18 : vector<16x32xf32>
    %cst_18 = arith.constant 0.000000e+00 : f32
    %20 = vector.broadcast %cst_18 : f32 to vector<16x32xf32>
    %21 = arith.maximumf %19, %20 : vector<16x32xf32>
    %cst_19 = arith.constant dense<0.000000e+00> : vector<16x32xf32>
    %22 = tpu.matmul %21, %14, %cst_19 {dimension_numbers = #tpu.dot_dimension_numbers<[1], [0], [0], [1], [0, 0, 1, 1], [], []>} : vector<16x32xf32>, vector<32x32xf32>, vector<16x32xf32> -> vector<16x32xf32>
    %23 = vector.broadcast %16 : vector<1x32xf32> to vector<16x32xf32>
    %24 = arith.addf %22, %23 : vector<16x32xf32>
    %cst_20 = arith.constant 0.000000e+00 : f32
    %25 = vector.broadcast %cst_20 : f32 to vector<16x32xf32>
    %26 = arith.maximumf %24, %25 : vector<16x32xf32>
    %27 = arith.addf %26, %8 : vector<16x32xf32>
    %c3 = arith.constant 3 : index
    %c0_21 = arith.constant 0 : index
    %c0_22 = arith.constant 0 : index
    %28 = vector.load %arg5[%c3, %c0_21, %c0_22] : memref<7x32x32xf32, #tpu.memory_space<vmem>>, vector<1x32x32xf32>
    %29 = vector.shape_cast %28 : vector<1x32x32xf32> to vector<32x32xf32>
    %c3_23 = arith.constant 3 : index
    %c0_24 = arith.constant 0 : index
    %c0_25 = arith.constant 0 : index
    %30 = vector.load %arg6[%c3_23, %c0_24, %c0_25] : memref<7x1x32xf32, #tpu.memory_space<vmem>>, vector<1x1x32xf32>
    %31 = vector.shape_cast %30 : vector<1x1x32xf32> to vector<1x32xf32>
    %c4 = arith.constant 4 : index
    %c0_26 = arith.constant 0 : index
    %c0_27 = arith.constant 0 : index
    %32 = vector.load %arg5[%c4, %c0_26, %c0_27] : memref<7x32x32xf32, #tpu.memory_space<vmem>>, vector<1x32x32xf32>
    %33 = vector.shape_cast %32 : vector<1x32x32xf32> to vector<32x32xf32>
    %c4_28 = arith.constant 4 : index
    %c0_29 = arith.constant 0 : index
    %c0_30 = arith.constant 0 : index
    %34 = vector.load %arg6[%c4_28, %c0_29, %c0_30] : memref<7x1x32xf32, #tpu.memory_space<vmem>>, vector<1x1x32xf32>
    %35 = vector.shape_cast %34 : vector<1x1x32xf32> to vector<1x32xf32>
    %cst_31 = arith.constant dense<0.000000e+00> : vector<16x32xf32>
    %36 = tpu.matmul %27, %29, %cst_31 {dimension_numbers = #tpu.dot_dimension_numbers<[1], [0], [0], [1], [0, 0, 1, 1], [], []>} : vector<16x32xf32>, vector<32x32xf32>, vector<16x32xf32> -> vector<16x32xf32>
    %37 = vector.broadcast %31 : vector<1x32xf32> to vector<16x32xf32>
    %38 = arith.addf %36, %37 : vector<16x32xf32>
    %cst_32 = arith.constant 0.000000e+00 : f32
    %39 = vector.broadcast %cst_32 : f32 to vector<16x32xf32>
    %40 = arith.maximumf %38, %39 : vector<16x32xf32>
    %cst_33 = arith.constant dense<0.000000e+00> : vector<16x32xf32>
    %41 = tpu.matmul %40, %33, %cst_33 {dimension_numbers = #tpu.dot_dimension_numbers<[1], [0], [0], [1], [0, 0, 1, 1], [], []>} : vector<16x32xf32>, vector<32x32xf32>, vector<16x32xf32> -> vector<16x32xf32>
    %42 = vector.broadcast %35 : vector<1x32xf32> to vector<16x32xf32>
    %43 = arith.addf %41, %42 : vector<16x32xf32>
    %cst_34 = arith.constant 0.000000e+00 : f32
    %44 = vector.broadcast %cst_34 : f32 to vector<16x32xf32>
    %45 = arith.maximumf %43, %44 : vector<16x32xf32>
    %46 = arith.addf %45, %27 : vector<16x32xf32>
    %c5 = arith.constant 5 : index
    %c0_35 = arith.constant 0 : index
    %c0_36 = arith.constant 0 : index
    %47 = vector.load %arg5[%c5, %c0_35, %c0_36] : memref<7x32x32xf32, #tpu.memory_space<vmem>>, vector<1x32x32xf32>
    %48 = vector.shape_cast %47 : vector<1x32x32xf32> to vector<32x32xf32>
    %c5_37 = arith.constant 5 : index
    %c0_38 = arith.constant 0 : index
    %c0_39 = arith.constant 0 : index
    %49 = vector.load %arg6[%c5_37, %c0_38, %c0_39] : memref<7x1x32xf32, #tpu.memory_space<vmem>>, vector<1x1x32xf32>
    %50 = vector.shape_cast %49 : vector<1x1x32xf32> to vector<1x32xf32>
    %c6 = arith.constant 6 : index
    %c0_40 = arith.constant 0 : index
    %c0_41 = arith.constant 0 : index
    %51 = vector.load %arg5[%c6, %c0_40, %c0_41] : memref<7x32x32xf32, #tpu.memory_space<vmem>>, vector<1x32x32xf32>
    %52 = vector.shape_cast %51 : vector<1x32x32xf32> to vector<32x32xf32>
    %c6_42 = arith.constant 6 : index
    %c0_43 = arith.constant 0 : index
    %c0_44 = arith.constant 0 : index
    %53 = vector.load %arg6[%c6_42, %c0_43, %c0_44] : memref<7x1x32xf32, #tpu.memory_space<vmem>>, vector<1x1x32xf32>
    %54 = vector.shape_cast %53 : vector<1x1x32xf32> to vector<1x32xf32>
    %cst_45 = arith.constant dense<0.000000e+00> : vector<16x32xf32>
    %55 = tpu.matmul %46, %48, %cst_45 {dimension_numbers = #tpu.dot_dimension_numbers<[1], [0], [0], [1], [0, 0, 1, 1], [], []>} : vector<16x32xf32>, vector<32x32xf32>, vector<16x32xf32> -> vector<16x32xf32>
    %56 = vector.broadcast %50 : vector<1x32xf32> to vector<16x32xf32>
    %57 = arith.addf %55, %56 : vector<16x32xf32>
    %cst_46 = arith.constant 0.000000e+00 : f32
    %58 = vector.broadcast %cst_46 : f32 to vector<16x32xf32>
    %59 = arith.maximumf %57, %58 : vector<16x32xf32>
    %cst_47 = arith.constant dense<0.000000e+00> : vector<16x32xf32>
    %60 = tpu.matmul %59, %52, %cst_47 {dimension_numbers = #tpu.dot_dimension_numbers<[1], [0], [0], [1], [0, 0, 1, 1], [], []>} : vector<16x32xf32>, vector<32x32xf32>, vector<16x32xf32> -> vector<16x32xf32>
    %61 = vector.broadcast %54 : vector<1x32xf32> to vector<16x32xf32>
    %62 = arith.addf %60, %61 : vector<16x32xf32>
    %cst_48 = arith.constant 0.000000e+00 : f32
    %63 = vector.broadcast %cst_48 : f32 to vector<16x32xf32>
    %64 = arith.maximumf %62, %63 : vector<16x32xf32>
    %65 = arith.addf %64, %46 : vector<16x32xf32>
    %c0_49 = arith.constant 0 : index
    %c0_50 = arith.constant 0 : index
    %66 = vector.load %arg4[%c0_49, %c0_50] : memref<32x100xf32, #tpu.memory_space<vmem>>, vector<32x100xf32>
    %cst_51 = arith.constant dense<0.000000e+00> : vector<16x100xf32>
    %67 = tpu.matmul %65, %66, %cst_51 {dimension_numbers = #tpu.dot_dimension_numbers<[1], [0], [0], [1], [0, 0, 1, 1], [], []>} : vector<16x32xf32>, vector<32x100xf32>, vector<16x100xf32> -> vector<16x100xf32>
    %cst_52 = arith.constant dense<0xFF800000> : vector<16xf32>
    %68 = vector.multi_reduction <maximumf>, %67, %cst_52 [1] : vector<16x100xf32> to vector<16xf32>
    %69 = vector.shape_cast %68 : vector<16xf32> to vector<16x1xf32>
    %70 = vector.broadcast %69 : vector<16x1xf32> to vector<16x100xf32>
    %71 = arith.subf %67, %70 : vector<16x100xf32>
    %72 = math.exp %71 : vector<16x100xf32>
    %cst_53 = arith.constant dense<0.000000e+00> : vector<16xf32>
    %73 = vector.multi_reduction <add>, %72, %cst_53 [1] : vector<16x100xf32> to vector<16xf32>
    %74 = vector.shape_cast %73 : vector<16xf32> to vector<16x1xf32>
    %75 = vector.broadcast %74 : vector<16x1xf32> to vector<16x100xf32>
    %76 = arith.divf %72, %75 : vector<16x100xf32>
    %c0_54 = arith.constant 0 : index
    %c0_55 = arith.constant 0 : index
    %77 = vector.load %arg0[%c0_54, %c0_55] : memref<1x16xi32, #tpu.memory_space<vmem>>, vector<1x16xi32>
    %78 = tpu.iota {dimensions = array<i32: 0>} : vector<100x16xi32>
    %79 = vector.broadcast %77 : vector<1x16xi32> to vector<100x16xi32>
    %80 = arith.cmpi eq, %78, %79 : vector<100x16xi32>
    %81 = arith.extui %80 : vector<100x16xi1> to vector<100x16xi32>
    %82 = arith.sitofp %81 : vector<100x16xi32> to vector<100x16xf32>
    %cst_56 = arith.constant dense<0.000000e+00> : vector<16x16xf32>
    %83 = tpu.matmul %76, %82, %cst_56 {dimension_numbers = #tpu.dot_dimension_numbers<[1], [0], [0], [1], [0, 0, 1, 1], [], []>} : vector<16x100xf32>, vector<100x16xf32>, vector<16x16xf32> -> vector<16x16xf32>
    %c0_57 = arith.constant 0 : index
    %c0_58 = arith.constant 0 : index
    %84 = vector.load %arg13[%c0_57, %c0_58] : memref<32x128xf32, #tpu.memory_space<vmem>>, vector<32x128xf32>
    %cst_59 = arith.constant dense<0.000000e+00> : vector<24x128xf32>
    %85 = tpu.matmul %0, %84, %cst_59 {dimension_numbers = #tpu.dot_dimension_numbers<[1], [0], [0], [1], [0, 0, 1, 1], [], []>} : vector<24x32xf32>, vector<32x128xf32>, vector<24x128xf32> -> vector<24x128xf32>
    %c0_60 = arith.constant 0 : index
    %c0_61 = arith.constant 0 : index
    %86 = vector.load %arg14[%c0_60, %c0_61] : memref<1x128xf32, #tpu.memory_space<vmem>>, vector<1x128xf32>
    %87 = vector.broadcast %86 : vector<1x128xf32> to vector<24x128xf32>
    %88 = arith.addf %85, %87 : vector<24x128xf32>
    %cst_62 = arith.constant 0.000000e+00 : f32
    %89 = vector.broadcast %cst_62 : f32 to vector<24x128xf32>
    %90 = arith.maximumf %88, %89 : vector<24x128xf32>
    %c0_63 = arith.constant 0 : index
    %c0_64 = arith.constant 0 : index
    %91 = vector.load %arg2[%c0_63, %c0_64] : memref<8x32xf32, #tpu.memory_space<vmem>>, vector<8x32xf32>
    %c0_65 = arith.constant 0 : index
    %c0_66 = arith.constant 0 : index
    %92 = vector.load %arg15[%c0_65, %c0_66] : memref<32x64xf32, #tpu.memory_space<vmem>>, vector<32x64xf32>
    %cst_67 = arith.constant dense<0.000000e+00> : vector<8x64xf32>
    %93 = tpu.matmul %91, %92, %cst_67 {dimension_numbers = #tpu.dot_dimension_numbers<[1], [0], [0], [1], [0, 0, 1, 1], [], []>} : vector<8x32xf32>, vector<32x64xf32>, vector<8x64xf32> -> vector<8x64xf32>
    %c0_68 = arith.constant 0 : index
    %c0_69 = arith.constant 0 : index
    %94 = vector.load %arg16[%c0_68, %c0_69] : memref<1x64xf32, #tpu.memory_space<vmem>>, vector<1x64xf32>
    %95 = vector.broadcast %94 : vector<1x64xf32> to vector<8x64xf32>
    %96 = arith.addf %93, %95 : vector<8x64xf32>
    %cst_70 = arith.constant 0.000000e+00 : f32
    %97 = vector.broadcast %cst_70 : f32 to vector<8x64xf32>
    %98 = arith.maximumf %96, %97 : vector<8x64xf32>
    %99 = vector.extract_strided_slice %90 {offsets = [0, 0], sizes = [8, 128], strides = [1, 1]} : vector<24x128xf32> to vector<8x128xf32>
    %c0_71 = arith.constant 0 : index
    %c0_72 = arith.constant 0 : index
    %100 = vector.load %arg17[%c0_71, %c0_72] : memref<128x16xf32, #tpu.memory_space<vmem>>, vector<128x16xf32>
    %cst_73 = arith.constant dense<0.000000e+00> : vector<8x16xf32>
    %101 = tpu.matmul %99, %100, %cst_73 {dimension_numbers = #tpu.dot_dimension_numbers<[1], [0], [0], [1], [0, 0, 1, 1], [], []>} : vector<8x128xf32>, vector<128x16xf32>, vector<8x16xf32> -> vector<8x16xf32>
    %cst_74 = arith.constant dense<0xFF800000> : vector<8xf32>
    %102 = vector.multi_reduction <maximumf>, %101, %cst_74 [1] : vector<8x16xf32> to vector<8xf32>
    %103 = vector.shape_cast %102 : vector<8xf32> to vector<8x1xf32>
    %104 = vector.broadcast %103 : vector<8x1xf32> to vector<8x16xf32>
    %105 = arith.subf %101, %104 : vector<8x16xf32>
    %106 = math.exp %105 : vector<8x16xf32>
    %cst_75 = arith.constant dense<0.000000e+00> : vector<8xf32>
    %107 = vector.multi_reduction <add>, %106, %cst_75 [1] : vector<8x16xf32> to vector<8xf32>
    %108 = vector.shape_cast %107 : vector<8xf32> to vector<8x1xf32>
    %109 = vector.broadcast %108 : vector<8x1xf32> to vector<8x16xf32>
    %110 = arith.divf %106, %109 : vector<8x16xf32>
    %c0_76 = arith.constant 0 : index
    %c0_77 = arith.constant 0 : index
    %111 = vector.load %arg18[%c0_76, %c0_77] : memref<64x16xf32, #tpu.memory_space<vmem>>, vector<64x16xf32>
    %cst_78 = arith.constant dense<0.000000e+00> : vector<8x16xf32>
    %112 = tpu.matmul %98, %111, %cst_78 {dimension_numbers = #tpu.dot_dimension_numbers<[1], [0], [0], [1], [0, 0, 1, 1], [], []>} : vector<8x64xf32>, vector<64x16xf32>, vector<8x16xf32> -> vector<8x16xf32>
    %cst_79 = arith.constant dense<0xFF800000> : vector<8xf32>
    %113 = vector.multi_reduction <maximumf>, %112, %cst_79 [1] : vector<8x16xf32> to vector<8xf32>
    %114 = vector.shape_cast %113 : vector<8xf32> to vector<8x1xf32>
    %115 = vector.broadcast %114 : vector<8x1xf32> to vector<8x16xf32>
    %116 = arith.subf %112, %115 : vector<8x16xf32>
    %117 = math.exp %116 : vector<8x16xf32>
    %cst_80 = arith.constant dense<0.000000e+00> : vector<8xf32>
    %118 = vector.multi_reduction <add>, %117, %cst_80 [1] : vector<8x16xf32> to vector<8xf32>
    %119 = vector.shape_cast %118 : vector<8xf32> to vector<8x1xf32>
    %120 = vector.broadcast %119 : vector<8x1xf32> to vector<8x16xf32>
    %121 = arith.divf %117, %120 : vector<8x16xf32>
    %c0_81 = arith.constant 0 : index
    %c0_82 = arith.constant 0 : index
    %122 = vector.load %arg19[%c0_81, %c0_82] : memref<128x72xf32, #tpu.memory_space<vmem>>, vector<128x72xf32>
    %cst_83 = arith.constant dense<0.000000e+00> : vector<24x72xf32>
    %123 = tpu.matmul %90, %122, %cst_83 {dimension_numbers = #tpu.dot_dimension_numbers<[1], [0], [0], [1], [0, 0, 1, 1], [], []>} : vector<24x128xf32>, vector<128x72xf32>, vector<24x72xf32> -> vector<24x72xf32>
    %cst_84 = arith.constant dense<0xFF800000> : vector<72xf32>
    %124 = vector.multi_reduction <maximumf>, %123, %cst_84 [0] : vector<24x72xf32> to vector<72xf32>
    %125 = vector.shape_cast %124 : vector<72xf32> to vector<1x72xf32>
    %126 = vector.broadcast %125 : vector<1x72xf32> to vector<24x72xf32>
    %127 = arith.subf %123, %126 : vector<24x72xf32>
    %128 = math.exp %127 : vector<24x72xf32>
    %cst_85 = arith.constant dense<0.000000e+00> : vector<72xf32>
    %129 = vector.multi_reduction <add>, %128, %cst_85 [0] : vector<24x72xf32> to vector<72xf32>
    %130 = vector.shape_cast %129 : vector<72xf32> to vector<1x72xf32>
    %131 = vector.broadcast %130 : vector<1x72xf32> to vector<24x72xf32>
    %132 = arith.divf %128, %131 : vector<24x72xf32>
    %c0_86 = arith.constant 0 : index
    %c0_87 = arith.constant 0 : index
    %133 = vector.load %arg20[%c0_86, %c0_87] : memref<64x16xf32, #tpu.memory_space<vmem>>, vector<64x16xf32>
    %cst_88 = arith.constant dense<0.000000e+00> : vector<8x16xf32>
    %134 = tpu.matmul %98, %133, %cst_88 {dimension_numbers = #tpu.dot_dimension_numbers<[1], [0], [0], [1], [0, 0, 1, 1], [], []>} : vector<8x64xf32>, vector<64x16xf32>, vector<8x16xf32> -> vector<8x16xf32>
    %cst_89 = arith.constant dense<0xFF800000> : vector<16xf32>
    %135 = vector.multi_reduction <maximumf>, %134, %cst_89 [0] : vector<8x16xf32> to vector<16xf32>
    %136 = vector.shape_cast %135 : vector<16xf32> to vector<1x16xf32>
    %137 = vector.broadcast %136 : vector<1x16xf32> to vector<8x16xf32>
    %138 = arith.subf %134, %137 : vector<8x16xf32>
    %139 = math.exp %138 : vector<8x16xf32>
    %cst_90 = arith.constant dense<0.000000e+00> : vector<16xf32>
    %140 = vector.multi_reduction <add>, %139, %cst_90 [0] : vector<8x16xf32> to vector<16xf32>
    %141 = vector.shape_cast %140 : vector<16xf32> to vector<1x16xf32>
    %142 = vector.broadcast %141 : vector<1x16xf32> to vector<8x16xf32>
    %143 = arith.divf %139, %142 : vector<8x16xf32>
    %c0_91 = arith.constant 0 : index
    %c0_92 = arith.constant 0 : index
    %144 = vector.load %arg21[%c0_91, %c0_92] : memref<8x32xf32, #tpu.memory_space<vmem>>, vector<8x32xf32>
    %c5_93 = arith.constant 5 : index
    %c0_94 = arith.constant 0 : index
    %c0_95 = arith.constant 0 : index
    %145 = vector.load %arg7[%c5_93, %c0_94, %c0_95] : memref<7x32x32xf32, #tpu.memory_space<vmem>>, vector<1x32x32xf32>
    %146 = vector.shape_cast %145 : vector<1x32x32xf32> to vector<32x32xf32>
    %c5_96 = arith.constant 5 : index
    %c0_97 = arith.constant 0 : index
    %c0_98 = arith.constant 0 : index
    %147 = vector.load %arg8[%c5_96, %c0_97, %c0_98] : memref<7x1x32xf32, #tpu.memory_space<vmem>>, vector<1x1x32xf32>
    %148 = vector.shape_cast %147 : vector<1x1x32xf32> to vector<1x32xf32>
    %c6_99 = arith.constant 6 : index
    %c0_100 = arith.constant 0 : index
    %c0_101 = arith.constant 0 : index
    %149 = vector.load %arg7[%c6_99, %c0_100, %c0_101] : memref<7x32x32xf32, #tpu.memory_space<vmem>>, vector<1x32x32xf32>
    %150 = vector.shape_cast %149 : vector<1x32x32xf32> to vector<32x32xf32>
    %c6_102 = arith.constant 6 : index
    %c0_103 = arith.constant 0 : index
    %c0_104 = arith.constant 0 : index
    %151 = vector.load %arg8[%c6_102, %c0_103, %c0_104] : memref<7x1x32xf32, #tpu.memory_space<vmem>>, vector<1x1x32xf32>
    %152 = vector.shape_cast %151 : vector<1x1x32xf32> to vector<1x32xf32>
    %cst_105 = arith.constant dense<0.000000e+00> : vector<8x32xf32>
    %153 = tpu.matmul %144, %146, %cst_105 {dimension_numbers = #tpu.dot_dimension_numbers<[1], [0], [0], [1], [0, 0, 1, 1], [], []>} : vector<8x32xf32>, vector<32x32xf32>, vector<8x32xf32> -> vector<8x32xf32>
    %154 = vector.broadcast %148 : vector<1x32xf32> to vector<8x32xf32>
    %155 = arith.addf %153, %154 : vector<8x32xf32>
    %cst_106 = arith.constant 0.000000e+00 : f32
    %156 = vector.broadcast %cst_106 : f32 to vector<8x32xf32>
    %157 = arith.maximumf %155, %156 : vector<8x32xf32>
    %cst_107 = arith.constant dense<0.000000e+00> : vector<8x32xf32>
    %158 = tpu.matmul %157, %150, %cst_107 {dimension_numbers = #tpu.dot_dimension_numbers<[1], [0], [0], [1], [0, 0, 1, 1], [], []>} : vector<8x32xf32>, vector<32x32xf32>, vector<8x32xf32> -> vector<8x32xf32>
    %159 = vector.broadcast %152 : vector<1x32xf32> to vector<8x32xf32>
    %160 = arith.addf %158, %159 : vector<8x32xf32>
    %cst_108 = arith.constant 0.000000e+00 : f32
    %161 = vector.broadcast %cst_108 : f32 to vector<8x32xf32>
    %162 = arith.maximumf %160, %161 : vector<8x32xf32>
    %163 = arith.addf %162, %144 : vector<8x32xf32>
    %c0_109 = arith.constant 0 : index
    %c0_110 = arith.constant 0 : index
    %164 = vector.load %arg11[%c0_109, %c0_110] : memref<32x4xf32, #tpu.memory_space<vmem>>, vector<32x4xf32>
    %cst_111 = arith.constant dense<0.000000e+00> : vector<8x4xf32>
    %165 = tpu.matmul %163, %164, %cst_111 {dimension_numbers = #tpu.dot_dimension_numbers<[1], [0], [0], [1], [0, 0, 1, 1], [], []>} : vector<8x32xf32>, vector<32x4xf32>, vector<8x4xf32> -> vector<8x4xf32>
    %c0_112 = arith.constant 0 : index
    %c0_113 = arith.constant 0 : index
    %166 = vector.load %arg12[%c0_112, %c0_113] : memref<1x4xf32, #tpu.memory_space<vmem>>, vector<1x4xf32>
    %167 = vector.broadcast %166 : vector<1x4xf32> to vector<8x4xf32>
    %168 = arith.addf %165, %167 : vector<8x4xf32>
    %cst_114 = arith.constant dense<0xFF800000> : vector<8xf32>
    %169 = vector.multi_reduction <maximumf>, %168, %cst_114 [1] : vector<8x4xf32> to vector<8xf32>
    %170 = vector.shape_cast %169 : vector<8xf32> to vector<8x1xf32>
    %171 = vector.broadcast %170 : vector<8x1xf32> to vector<8x4xf32>
    %172 = arith.subf %168, %171 : vector<8x4xf32>
    %173 = math.exp %172 : vector<8x4xf32>
    %cst_115 = arith.constant dense<0.000000e+00> : vector<8xf32>
    %174 = vector.multi_reduction <add>, %173, %cst_115 [1] : vector<8x4xf32> to vector<8xf32>
    %175 = vector.shape_cast %174 : vector<8xf32> to vector<8x1xf32>
    %176 = vector.broadcast %175 : vector<8x1xf32> to vector<8x4xf32>
    %177 = arith.divf %173, %176 : vector<8x4xf32>
    %c0_116 = arith.constant 0 : index
    %c0_117 = arith.constant 0 : index
    %178 = vector.load %arg22[%c0_116, %c0_117] : memref<4x72xf32, #tpu.memory_space<vmem>>, vector<4x72xf32>
    %cst_118 = arith.constant dense<0.000000e+00> : vector<8x72xf32>
    %179 = tpu.matmul %177, %178, %cst_118 {dimension_numbers = #tpu.dot_dimension_numbers<[1], [0], [0], [1], [0, 0, 1, 1], [], []>} : vector<8x4xf32>, vector<4x72xf32>, vector<8x72xf32> -> vector<8x72xf32>
    %c0_119 = arith.constant 0 : index
    %c0_120 = arith.constant 0 : index
    %180 = vector.load %arg24[%c0_119, %c0_120] : memref<1x72xf32, #tpu.memory_space<vmem>>, vector<1x72xf32>
    %c0_121 = arith.constant 0 : index
    %c0_122 = arith.constant 0 : index
    %181 = vector.load %arg23[%c0_121, %c0_122] : memref<8x72xf32, #tpu.memory_space<vmem>>, vector<8x72xf32>
    %182 = arith.mulf %181, %179 : vector<8x72xf32>
    %cst_123 = arith.constant dense<0.000000e+00> : vector<72xf32>
    %183 = vector.multi_reduction <add>, %182, %cst_123 [0] : vector<8x72xf32> to vector<72xf32>
    %184 = vector.shape_cast %183 : vector<72xf32> to vector<1x72xf32>
    %185 = arith.addf %180, %184 : vector<1x72xf32>
    %186 = vector.broadcast %185 : vector<1x72xf32> to vector<24x72xf32>
    %187 = arith.mulf %132, %186 : vector<24x72xf32>
    %c0_124 = arith.constant 0 : index
    %c0_125 = arith.constant 0 : index
    %188 = vector.load %arg3[%c0_124, %c0_125] : memref<1x32xf32, #tpu.memory_space<vmem>>, vector<1x32xf32>
    %c0_126 = arith.constant 0 : index
    %c0_127 = arith.constant 0 : index
    %c0_128 = arith.constant 0 : index
    %189 = vector.load %arg7[%c0_126, %c0_127, %c0_128] : memref<7x32x32xf32, #tpu.memory_space<vmem>>, vector<1x32x32xf32>
    %190 = vector.shape_cast %189 : vector<1x32x32xf32> to vector<32x32xf32>
    %cst_129 = arith.constant dense<0.000000e+00> : vector<1x32xf32>
    %191 = tpu.matmul %188, %190, %cst_129 {dimension_numbers = #tpu.dot_dimension_numbers<[1], [0], [0], [1], [0, 0, 1, 1], [], []>} : vector<1x32xf32>, vector<32x32xf32>, vector<1x32xf32> -> vector<1x32xf32>
    %c0_130 = arith.constant 0 : index
    %c0_131 = arith.constant 0 : index
    %c0_132 = arith.constant 0 : index
    %192 = vector.load %arg8[%c0_130, %c0_131, %c0_132] : memref<7x1x32xf32, #tpu.memory_space<vmem>>, vector<1x1x32xf32>
    %193 = vector.shape_cast %192 : vector<1x1x32xf32> to vector<1x32xf32>
    %194 = arith.addf %191, %193 : vector<1x32xf32>
    %c1_133 = arith.constant 1 : index
    %c0_134 = arith.constant 0 : index
    %c0_135 = arith.constant 0 : index
    %195 = vector.load %arg7[%c1_133, %c0_134, %c0_135] : memref<7x32x32xf32, #tpu.memory_space<vmem>>, vector<1x32x32xf32>
    %196 = vector.shape_cast %195 : vector<1x32x32xf32> to vector<32x32xf32>
    %c1_136 = arith.constant 1 : index
    %c0_137 = arith.constant 0 : index
    %c0_138 = arith.constant 0 : index
    %197 = vector.load %arg8[%c1_136, %c0_137, %c0_138] : memref<7x1x32xf32, #tpu.memory_space<vmem>>, vector<1x1x32xf32>
    %198 = vector.shape_cast %197 : vector<1x1x32xf32> to vector<1x32xf32>
    %c2_139 = arith.constant 2 : index
    %c0_140 = arith.constant 0 : index
    %c0_141 = arith.constant 0 : index
    %199 = vector.load %arg7[%c2_139, %c0_140, %c0_141] : memref<7x32x32xf32, #tpu.memory_space<vmem>>, vector<1x32x32xf32>
    %200 = vector.shape_cast %199 : vector<1x32x32xf32> to vector<32x32xf32>
    %c2_142 = arith.constant 2 : index
    %c0_143 = arith.constant 0 : index
    %c0_144 = arith.constant 0 : index
    %201 = vector.load %arg8[%c2_142, %c0_143, %c0_144] : memref<7x1x32xf32, #tpu.memory_space<vmem>>, vector<1x1x32xf32>
    %202 = vector.shape_cast %201 : vector<1x1x32xf32> to vector<1x32xf32>
    %cst_145 = arith.constant dense<0.000000e+00> : vector<1x32xf32>
    %203 = tpu.matmul %194, %196, %cst_145 {dimension_numbers = #tpu.dot_dimension_numbers<[1], [0], [0], [1], [0, 0, 1, 1], [], []>} : vector<1x32xf32>, vector<32x32xf32>, vector<1x32xf32> -> vector<1x32xf32>
    %204 = arith.addf %203, %198 : vector<1x32xf32>
    %cst_146 = arith.constant 0.000000e+00 : f32
    %205 = vector.broadcast %cst_146 : f32 to vector<1x32xf32>
    %206 = arith.maximumf %204, %205 : vector<1x32xf32>
    %cst_147 = arith.constant dense<0.000000e+00> : vector<1x32xf32>
    %207 = tpu.matmul %206, %200, %cst_147 {dimension_numbers = #tpu.dot_dimension_numbers<[1], [0], [0], [1], [0, 0, 1, 1], [], []>} : vector<1x32xf32>, vector<32x32xf32>, vector<1x32xf32> -> vector<1x32xf32>
    %208 = arith.addf %207, %202 : vector<1x32xf32>
    %cst_148 = arith.constant 0.000000e+00 : f32
    %209 = vector.broadcast %cst_148 : f32 to vector<1x32xf32>
    %210 = arith.maximumf %208, %209 : vector<1x32xf32>
    %211 = arith.addf %210, %194 : vector<1x32xf32>
    %c3_149 = arith.constant 3 : index
    %c0_150 = arith.constant 0 : index
    %c0_151 = arith.constant 0 : index
    %212 = vector.load %arg7[%c3_149, %c0_150, %c0_151] : memref<7x32x32xf32, #tpu.memory_space<vmem>>, vector<1x32x32xf32>
    %213 = vector.shape_cast %212 : vector<1x32x32xf32> to vector<32x32xf32>
    %c3_152 = arith.constant 3 : index
    %c0_153 = arith.constant 0 : index
    %c0_154 = arith.constant 0 : index
    %214 = vector.load %arg8[%c3_152, %c0_153, %c0_154] : memref<7x1x32xf32, #tpu.memory_space<vmem>>, vector<1x1x32xf32>
    %215 = vector.shape_cast %214 : vector<1x1x32xf32> to vector<1x32xf32>
    %c4_155 = arith.constant 4 : index
    %c0_156 = arith.constant 0 : index
    %c0_157 = arith.constant 0 : index
    %216 = vector.load %arg7[%c4_155, %c0_156, %c0_157] : memref<7x32x32xf32, #tpu.memory_space<vmem>>, vector<1x32x32xf32>
    %217 = vector.shape_cast %216 : vector<1x32x32xf32> to vector<32x32xf32>
    %c4_158 = arith.constant 4 : index
    %c0_159 = arith.constant 0 : index
    %c0_160 = arith.constant 0 : index
    %218 = vector.load %arg8[%c4_158, %c0_159, %c0_160] : memref<7x1x32xf32, #tpu.memory_space<vmem>>, vector<1x1x32xf32>
    %219 = vector.shape_cast %218 : vector<1x1x32xf32> to vector<1x32xf32>
    %cst_161 = arith.constant dense<0.000000e+00> : vector<1x32xf32>
    %220 = tpu.matmul %211, %213, %cst_161 {dimension_numbers = #tpu.dot_dimension_numbers<[1], [0], [0], [1], [0, 0, 1, 1], [], []>} : vector<1x32xf32>, vector<32x32xf32>, vector<1x32xf32> -> vector<1x32xf32>
    %221 = arith.addf %220, %215 : vector<1x32xf32>
    %cst_162 = arith.constant 0.000000e+00 : f32
    %222 = vector.broadcast %cst_162 : f32 to vector<1x32xf32>
    %223 = arith.maximumf %221, %222 : vector<1x32xf32>
    %cst_163 = arith.constant dense<0.000000e+00> : vector<1x32xf32>
    %224 = tpu.matmul %223, %217, %cst_163 {dimension_numbers = #tpu.dot_dimension_numbers<[1], [0], [0], [1], [0, 0, 1, 1], [], []>} : vector<1x32xf32>, vector<32x32xf32>, vector<1x32xf32> -> vector<1x32xf32>
    %225 = arith.addf %224, %219 : vector<1x32xf32>
    %cst_164 = arith.constant 0.000000e+00 : f32
    %226 = vector.broadcast %cst_164 : f32 to vector<1x32xf32>
    %227 = arith.maximumf %225, %226 : vector<1x32xf32>
    %228 = arith.addf %227, %211 : vector<1x32xf32>
    %c0_165 = arith.constant 0 : index
    %c0_166 = arith.constant 0 : index
    %229 = vector.load %arg9[%c0_165, %c0_166] : memref<32x8xf32, #tpu.memory_space<vmem>>, vector<32x8xf32>
    %cst_167 = arith.constant dense<0.000000e+00> : vector<1x8xf32>
    %230 = tpu.matmul %228, %229, %cst_167 {dimension_numbers = #tpu.dot_dimension_numbers<[1], [0], [0], [1], [0, 0, 1, 1], [], []>} : vector<1x32xf32>, vector<32x8xf32>, vector<1x8xf32> -> vector<1x8xf32>
    %c0_168 = arith.constant 0 : index
    %c0_169 = arith.constant 0 : index
    %231 = vector.load %arg10[%c0_168, %c0_169] : memref<1x8xf32, #tpu.memory_space<vmem>>, vector<1x8xf32>
    %232 = arith.addf %230, %231 : vector<1x8xf32>
    %cst_170 = arith.constant dense<0xFF800000> : vector<1xf32>
    %233 = vector.multi_reduction <maximumf>, %232, %cst_170 [1] : vector<1x8xf32> to vector<1xf32>
    %234 = vector.shape_cast %233 : vector<1xf32> to vector<1x1xf32>
    %235 = vector.broadcast %234 : vector<1x1xf32> to vector<1x8xf32>
    %236 = arith.subf %232, %235 : vector<1x8xf32>
    %237 = math.exp %236 : vector<1x8xf32>
    %cst_171 = arith.constant dense<0.000000e+00> : vector<1xf32>
    %238 = vector.multi_reduction <add>, %237, %cst_171 [1] : vector<1x8xf32> to vector<1xf32>
    %239 = vector.shape_cast %238 : vector<1xf32> to vector<1x1xf32>
    %240 = vector.broadcast %239 : vector<1x1xf32> to vector<1x8xf32>
    %241 = arith.divf %237, %240 : vector<1x8xf32>
    %242 = vector.extract_strided_slice %187 {offsets = [0, 0], sizes = [8, 72], strides = [1, 1]} : vector<24x72xf32> to vector<8x72xf32>
    %cst_172 = arith.constant dense<0.000000e+00> : vector<72x16xf32>
    %243 = tpu.matmul %242, %110, %cst_172 {dimension_numbers = #tpu.dot_dimension_numbers<[0], [0], [1], [1], [0, 1, 1, 1], [], []>} : vector<8x72xf32>, vector<8x16xf32>, vector<72x16xf32> -> vector<72x16xf32>
    %cst_173 = arith.constant dense<0.000000e+00> : vector<16x16xf32>
    %244 = tpu.matmul %143, %121, %cst_173 {dimension_numbers = #tpu.dot_dimension_numbers<[0], [0], [1], [1], [0, 1, 1, 1], [], []>} : vector<8x16xf32>, vector<8x16xf32>, vector<16x16xf32> -> vector<16x16xf32>
    %cst_174 = arith.constant dense<0.000000e+00> : vector<1x16xf32>
    %245 = tpu.matmul %241, %110, %cst_174 {dimension_numbers = #tpu.dot_dimension_numbers<[1], [0], [0], [1], [0, 0, 1, 1], [], []>} : vector<1x8xf32>, vector<8x16xf32>, vector<1x16xf32> -> vector<1x16xf32>
    %246 = vector.extract_strided_slice %187 {offsets = [8, 0], sizes = [16, 72], strides = [1, 1]} : vector<24x72xf32> to vector<16x72xf32>
    %cst_175 = arith.constant dense<0.000000e+00> : vector<16x72xf32>
    %247 = tpu.matmul %83, %246, %cst_175 {dimension_numbers = #tpu.dot_dimension_numbers<[0], [0], [1], [1], [0, 1, 1, 1], [], []>} : vector<16x16xf32>, vector<16x72xf32>, vector<16x72xf32> -> vector<16x72xf32>
    %cst_176 = arith.constant 9.99999971E-10 : f32
    %248 = vector.broadcast %cst_176 : f32 to vector<72x16xf32>
    %249 = arith.addf %243, %248 : vector<72x16xf32>
    %250 = math.log %249 : vector<72x16xf32>
    %c0_177 = arith.constant 0 : index
    %c0_178 = arith.constant 0 : index
    %251 = vector.load %arg25[%c0_177, %c0_178] : memref<112x128xf32, #tpu.memory_space<vmem>>, vector<72x16xf32>
    tpu.vector_store %arg25[%c0_177, %c0_178], %250 {strides = array<i32>} : memref<112x128xf32, #tpu.memory_space<vmem>>, vector<72x16xf32>,
    %cst_179 = arith.constant 9.99999971E-10 : f32
    %252 = vector.broadcast %cst_179 : f32 to vector<16x16xf32>
    %253 = arith.addf %244, %252 : vector<16x16xf32>
    %254 = math.log %253 : vector<16x16xf32>
    %c72 = arith.constant 72 : index
    %c0_180 = arith.constant 0 : index
    %255 = vector.load %arg25[%c72, %c0_180] : memref<112x128xf32, #tpu.memory_space<vmem>>, vector<16x16xf32>
    tpu.vector_store %arg25[%c72, %c0_180], %254 {strides = array<i32>} : memref<112x128xf32, #tpu.memory_space<vmem>>, vector<16x16xf32>,
    %cst_181 = arith.constant 9.99999971E-10 : f32
    %256 = vector.broadcast %cst_181 : f32 to vector<1x16xf32>
    %257 = arith.addf %245, %256 : vector<1x16xf32>
    %258 = math.log %257 : vector<1x16xf32>
    %c88 = arith.constant 88 : index
    %c0_182 = arith.constant 0 : index
    %259 = vector.load %arg25[%c88, %c0_182] : memref<112x128xf32, #tpu.memory_space<vmem>>, vector<1x16xf32>
    tpu.vector_store %arg25[%c88, %c0_182], %258 {strides = array<i32>} : memref<112x128xf32, #tpu.memory_space<vmem>>, vector<1x16xf32>,
    %cst_183 = arith.constant 9.99999971E-10 : f32
    %260 = vector.broadcast %cst_183 : f32 to vector<16x72xf32>
    %261 = arith.addf %247, %260 : vector<16x72xf32>
    %262 = math.log %261 : vector<16x72xf32>
    %c96 = arith.constant 96 : index
    %c0_184 = arith.constant 0 : index
    %263 = vector.load %arg25[%c96, %c0_184] : memref<112x128xf32, #tpu.memory_space<vmem>>, vector<16x72xf32>
    tpu.vector_store %arg25[%c96, %c0_184], %262 {strides = array<i32>} : memref<112x128xf32, #tpu.memory_space<vmem>>, vector<16x72xf32>,
    return
  }
}

</mosaic_0001>

<llo_original>
// kernel: forward.1
$region0: #{forward.1}
  #allocation0 [shape = 'u32[]', space=smem, size = 0x4, offset = 0x4, fixed_abs, tag = 'smem constant byte address 0x4 - core index']
  #allocation1 [shape = 'u32[144,128]{1,0:T(1,128)}', space=vmem, size = 0x12000, scoped, tag = 'internal scratch']
  %s0 = inlined_call_operand.vmem [shape: s32[1,16], index: 0, kind: input, shape index: {}]
  %s1 = inlined_call_operand.vmem [shape: f32[24,32], index: 1, kind: input, shape index: {}]
  %s2 = inlined_call_operand.vmem [shape: f32[8,32], index: 2, kind: input, shape index: {}]
  %s3 = inlined_call_operand.hbm [shape: f32[1,32], index: 3, kind: input, shape index: {}]
  %s4 = inlined_call_operand.vmem [shape: f32[32,100], index: 4, kind: input, shape index: {}]
  %s5 = inlined_call_operand.vmem [shape: f32[7,32,32], index: 5, kind: input, shape index: {}]
  %s6 = inlined_call_operand.vmem [shape: f32[7,1,32], index: 6, kind: input, shape index: {}]
  %s7 = inlined_call_operand.vmem [shape: f32[7,32,32], index: 7, kind: input, shape index: {}]
  %s8 = inlined_call_operand.hbm [shape: f32[7,1,32], index: 8, kind: input, shape index: {}]
  %s9 = inlined_call_operand.vmem [shape: f32[32,8], index: 9, kind: input, shape index: {}]
  %s10 = inlined_call_operand.hbm [shape: f32[1,8], index: 10, kind: input, shape index: {}]
  %s11 = inlined_call_operand.vmem [shape: f32[32,4], index: 11, kind: input, shape index: {}]
  %s12 = inlined_call_operand.hbm [shape: f32[1,4], index: 12, kind: input, shape index: {}]
  %s13 = inlined_call_operand.vmem [shape: f32[32,128], index: 13, kind: input, shape index: {}]
  %s14 = inlined_call_operand.hbm [shape: f32[1,128], index: 14, kind: input, shape index: {}]
  %s15 = inlined_call_operand.hbm [shape: f32[32,64], index: 15, kind: input, shape index: {}]
  %s16 = inlined_call_operand.hbm [shape: f32[1,64], index: 16, kind: input, shape index: {}]
  %s17 = inlined_call_operand.vmem [shape: f32[128,16], index: 17, kind: input, shape index: {}]
  %s18 = inlined_call_operand.vmem [shape: f32[64,16], index: 18, kind: input, shape index: {}]
  %s19 = inlined_call_operand.vmem [shape: f32[128,72], index: 19, kind: input, shape index: {}]
  %s20 = inlined_call_operand.vmem [shape: f32[64,16], index: 20, kind: input, shape index: {}]
  %s21 = inlined_call_operand.hbm [shape: f32[8,32], index: 21, kind: input, shape index: {}]
  %s22 = inlined_call_operand.hbm [shape: f32[4,72], index: 22, kind: input, shape index: {}]
  %s23 = inlined_call_operand.hbm [shape: f32[8,72], index: 23, kind: input, shape index: {}]
  %s24 = inlined_call_operand.hbm [shape: f32[1,72], index: 24, kind: input, shape index: {}]
  %s25 = inlined_call_operand.vmem [shape: f32[112,128], index: 25, kind: output, shape index: {}]
  %s26 = sld [smem:[#allocation0]]
  $region154: #{forward.1} parent=0
    _
  %s28 = ssub.s32 1, %s26
  %s29 = scalar_select 0, %s28, %s26
  $region1: #{forward.1} parent=0
    #allocation2 [shape = 'u8[512]{0}', space=vmem, size = 0x400, scoped, tag = 'input window, operand 3, single buffered']
    #allocation3 [shape = 's32[1]{0}', space=sflag, size = 0x4, scoped, tag = 'scoped memory for forward.1']
    #allocation4 [shape = 'u8[3584]{0}', space=vmem, size = 0x1000, scoped, tag = 'input window, operand 8, single buffered']
    #allocation5 [shape = 's32[1]{0}', space=sflag, size = 0x4, scoped, tag = 'scoped memory for forward.1']
    #allocation6 [shape = 'u8[512]{0}', space=vmem, size = 0x400, scoped, tag = 'input window, operand 10, single buffered']
    #allocation7 [shape = 'u8[512]{0}', space=vmem, size = 0x400, scoped, tag = 'input window, operand 12, single buffered']
    #allocation8 [shape = 's32[1]{0}', space=sflag, size = 0x4, scoped, tag = 'scoped memory for forward.1']
    #allocation9 [shape = 'u8[512]{0}', space=vmem, size = 0x400, scoped, tag = 'input window, operand 14, single buffered']
    #allocation10 [shape = 'u8[16384]{0}', space=vmem, size = 0x4000, scoped, tag = 'input window, operand 15, single buffered']
    #allocation11 [shape = 's32[1]{0}', space=sflag, size = 0x4, scoped, tag = 'scoped memory for forward.1']
    #allocation12 [shape = 'u8[512]{0}', space=vmem, size = 0x400, scoped, tag = 'input window, operand 16, single buffered']
    #allocation13 [shape = 'u8[4096]{0}', space=vmem, size = 0x1000, scoped, tag = 'input window, operand 21, single buffered']
    #allocation14 [shape = 's32[1]{0}', space=sflag, size = 0x4, scoped, tag = 'scoped memory for forward.1']
    #allocation15 [shape = 'u8[2048]{0}', space=vmem, size = 0x800, scoped, tag = 'input window, operand 22, single buffered']
    #allocation16 [shape = 'u8[4096]{0}', space=vmem, size = 0x1000, scoped, tag = 'input window, operand 23, single buffered']
    #allocation17 [shape = 's32[1]{0}', space=sflag, size = 0x4, scoped, tag = 'scoped memory for forward.1']
    #allocation18 [shape = 'u8[512]{0}', space=vmem, size = 0x400, scoped, tag = 'input window, operand 24, single buffered']
    %30 = vsyncpa [#allocation3], 0
    %31 = vsyncpa [#allocation5], 0
    %32 = vsyncpa [#allocation8], 0
    %33 = vsyncpa [#allocation11], 0
    %34 = vsyncpa [#allocation14], 0
    %35 = vsyncpa [#allocation17], 0
    // Predicated region
    $region2: #{forward.1} parent=1 // pred_check
      _
    $region3: #{forward.1} parent=1 // pred_check_branch
      %37 = sbr.rel (0) target = $region5
    $region4: #{forward.1} parent=1 // pred_region
      _
    $region5: #{forward.1} parent=1 // pred_fallthru
      _
    // Predicated region
    $region6: #{forward.1} parent=1 // pred_check
      _
    $region7: #{forward.1} parent=1 // pred_check_branch
      %39 = sbr.rel (0) target = $region9
    $region8: #{forward.1} parent=1 // pred_region
      _
    $region9: #{forward.1} parent=1 // pred_fallthru
      _
    // Predicated region
    $region10: #{forward.1} parent=1 // pred_check
      _
    $region11: #{forward.1} parent=1 // pred_check_branch
      %41 = sbr.rel (0) target = $region13
    $region12: #{forward.1} parent=1 // pred_region
      _
    $region13: #{forward.1} parent=1 // pred_fallthru
      _
    // Predicated region
    $region14: #{forward.1} parent=1 // pred_check
      _
    $region15: #{forward.1} parent=1 // pred_check_branch
      %43 = sbr.rel (0) target = $region17
    $region16: #{forward.1} parent=1 // pred_region
      %s45 = ssub.s32 16, 16
      %46 = vsyncadd [#allocation3], %s45
      %s48 = sshll.u32 [#allocation2], 4
      %s49 = int_to_ptr.vmem [resolvable:$true] %s48
      %51 = dma.hbm_to_vmem [thread:$0]  %s3, 16, %s49, [#allocation3]
    $region17: #{forward.1} parent=1 // pred_fallthru
      _
    // Predicated region
    $region18: #{forward.1} parent=1 // pred_check
      _
    $region19: #{forward.1} parent=1 // pred_check_branch
      %53 = sbr.rel (0) target = $region21
    $region20: #{forward.1} parent=1 // pred_region
      _
    $region21: #{forward.1} parent=1 // pred_fallthru
      _
    // Predicated region
    $region22: #{forward.1} parent=1 // pred_check
      _
    $region23: #{forward.1} parent=1 // pred_check_branch
      %55 = sbr.rel (0) target = $region25
    $region24: #{forward.1} parent=1 // pred_region
      _
    $region25: #{forward.1} parent=1 // pred_fallthru
      _
    // Predicated region
    $region26: #{forward.1} parent=1 // pred_check
      _
    $region27: #{forward.1} parent=1 // pred_check_branch
      %57 = sbr.rel (0) target = $region29
    $region28: #{forward.1} parent=1 // pred_region
      _
    $region29: #{forward.1} parent=1 // pred_fallthru
      _
    // Predicated region
    $region30: #{forward.1} parent=1 // pred_check
      _
    $region31: #{forward.1} parent=1 // pred_check_branch
      %59 = sbr.rel (0) target = $region33
    $region32: #{forward.1} parent=1 // pred_region
      _
    $region33: #{forward.1} parent=1 // pred_fallthru
      _
    // Predicated region
    $region34: #{forward.1} parent=1 // pred_check
      _
    $region35: #{forward.1} parent=1 // pred_check_branch
      %61 = sbr.rel (0) target = $region37
    $region36: #{forward.1} parent=1 // pred_region
      %s63 = ssub.s32 112, 112
      %64 = vsyncadd [#allocation5], %s63
      %s65 = sshll.u32 [#allocation4], 4
      %s66 = int_to_ptr.vmem [resolvable:$true] %s65
      %71 = dma.hbm_to_vmem [thread:$0]  %s8, 112, %s66, [#allocation5], 16, 16, 1
    $region37: #{forward.1} parent=1 // pred_fallthru
      _
    // Predicated region
    $region38: #{forward.1} parent=1 // pred_check
      _
    $region39: #{forward.1} parent=1 // pred_check_branch
      %73 = sbr.rel (0) target = $region41
    $region40: #{forward.1} parent=1 // pred_region
      _
    $region41: #{forward.1} parent=1 // pred_fallthru
      _
    // Predicated region
    $region42: #{forward.1} parent=1 // pred_check
      _
    $region43: #{forward.1} parent=1 // pred_check_branch
      %75 = sbr.rel (0) target = $region45
    $region44: #{forward.1} parent=1 // pred_region
      %s77 = ssub.s32 16, 16
      %78 = vsyncadd [#allocation5], %s77
      %s80 = sshll.u32 [#allocation6], 4
      %s81 = int_to_ptr.vmem [resolvable:$true] %s80
      %83 = dma.hbm_to_vmem [thread:$0]  %s10, 16, %s81, [#allocation5]
    $region45: #{forward.1} parent=1 // pred_fallthru
      _
    // Predicated region
    $region46: #{forward.1} parent=1 // pred_check
      _
    $region47: #{forward.1} parent=1 // pred_check_branch
      %85 = sbr.rel (0) target = $region49
    $region48: #{forward.1} parent=1 // pred_region
      _
    $region49: #{forward.1} parent=1 // pred_fallthru
      _
    // Predicated region
    $region50: #{forward.1} parent=1 // pred_check
      _
    $region51: #{forward.1} parent=1 // pred_check_branch
      %87 = sbr.rel (0) target = $region53
    $region52: #{forward.1} parent=1 // pred_region
      %s89 = ssub.s32 16, 16
      %90 = vsyncadd [#allocation8], %s89
      %s92 = sshll.u32 [#allocation7], 4
      %s93 = int_to_ptr.vmem [resolvable:$true] %s92
      %95 = dma.hbm_to_vmem [thread:$0]  %s12, 16, %s93, [#allocation8]
    $region53: #{forward.1} parent=1 // pred_fallthru
      _
    // Predicated region
    $region54: #{forward.1} parent=1 // pred_check
      _
    $region55: #{forward.1} parent=1 // pred_check_branch
      %97 = sbr.rel (0) target = $region57
    $region56: #{forward.1} parent=1 // pred_region
      _
    $region57: #{forward.1} parent=1 // pred_fallthru
      _
    // Predicated region
    $region58: #{forward.1} parent=1 // pred_check
      _
    $region59: #{forward.1} parent=1 // pred_check_branch
      %99 = sbr.rel (0) target = $region61
    $region60: #{forward.1} parent=1 // pred_region
      %s101 = ssub.s32 16, 16
      %102 = vsyncadd [#allocation8], %s101
      %s104 = sshll.u32 [#allocation9], 4
      %s105 = int_to_ptr.vmem [resolvable:$true] %s104
      %107 = dma.hbm_to_vmem [thread:$0]  %s14, 16, %s105, [#allocation8]
    $region61: #{forward.1} parent=1 // pred_fallthru
      _
    // Predicated region
    $region62: #{forward.1} parent=1 // pred_check
      _
    $region63: #{forward.1} parent=1 // pred_check_branch
      %109 = sbr.rel (0) target = $region65
    $region64: #{forward.1} parent=1 // pred_region
      %s111 = ssub.s32 512, 512
      %112 = vsyncadd [#allocation11], %s111
      %s113 = sshll.u32 [#allocation10], 4
      %s114 = int_to_ptr.vmem [resolvable:$true] %s113
      %119 = dma.hbm_to_vmem [thread:$0]  %s15, 512, %s114, [#allocation11], 128, 128, 8
    $region65: #{forward.1} parent=1 // pred_fallthru
      _
    // Predicated region
    $region66: #{forward.1} parent=1 // pred_check
      _
    $region67: #{forward.1} parent=1 // pred_check_branch
      %121 = sbr.rel (0) target = $region69
    $region68: #{forward.1} parent=1 // pred_region
      %s123 = ssub.s32 16, 16
      %124 = vsyncadd [#allocation11], %s123
      %s126 = sshll.u32 [#allocation12], 4
      %s127 = int_to_ptr.vmem [resolvable:$true] %s126
      %129 = dma.hbm_to_vmem [thread:$0]  %s16, 16, %s127, [#allocation11]
    $region69: #{forward.1} parent=1 // pred_fallthru
      _
    // Predicated region
    $region70: #{forward.1} parent=1 // pred_check
      _
    $region71: #{forward.1} parent=1 // pred_check_branch
      %131 = sbr.rel (0) target = $region73
    $region72: #{forward.1} parent=1 // pred_region
      _
    $region73: #{forward.1} parent=1 // pred_fallthru
      _
    // Predicated region
    $region74: #{forward.1} parent=1 // pred_check
      _
    $region75: #{forward.1} parent=1 // pred_check_branch
      %133 = sbr.rel (0) target = $region77
    $region76: #{forward.1} parent=1 // pred_region
      _
    $region77: #{forward.1} parent=1 // pred_fallthru
      _
    // Predicated region
    $region78: #{forward.1} parent=1 // pred_check
      _
    $region79: #{forward.1} parent=1 // pred_check_branch
      %135 = sbr.rel (0) target = $region81
    $region80: #{forward.1} parent=1 // pred_region
      _
    $region81: #{forward.1} parent=1 // pred_fallthru
      _
    // Predicated region
    $region82: #{forward.1} parent=1 // pred_check
      _
    $region83: #{forward.1} parent=1 // pred_check_branch
      %137 = sbr.rel (0) target = $region85
    $region84: #{forward.1} parent=1 // pred_region
      _
    $region85: #{forward.1} parent=1 // pred_fallthru
      _
    // Predicated region
    $region86: #{forward.1} parent=1 // pred_check
      _
    $region87: #{forward.1} parent=1 // pred_check_branch
      %139 = sbr.rel (0) target = $region89
    $region88: #{forward.1} parent=1 // pred_region
      %s141 = ssub.s32 128, 128
      %142 = vsyncadd [#allocation14], %s141
      %s144 = sshll.u32 [#allocation13], 4
      %s145 = int_to_ptr.vmem [resolvable:$true] %s144
      %147 = dma.hbm_to_vmem [thread:$0]  %s21, 128, %s145, [#allocation14]
    $region89: #{forward.1} parent=1 // pred_fallthru
      _
    // Predicated region
    $region90: #{forward.1} parent=1 // pred_check
      _
    $region91: #{forward.1} parent=1 // pred_check_branch
      %149 = sbr.rel (0) target = $region93
    $region92: #{forward.1} parent=1 // pred_region
      %s151 = ssub.s32 64, 64
      %152 = vsyncadd [#allocation14], %s151
      %s154 = sshll.u32 [#allocation15], 4
      %s155 = int_to_ptr.vmem [resolvable:$true] %s154
      %157 = dma.hbm_to_vmem [thread:$0]  %s22, 64, %s155, [#allocation14]
    $region93: #{forward.1} parent=1 // pred_fallthru
      _
    // Predicated region
    $region94: #{forward.1} parent=1 // pred_check
      _
    $region95: #{forward.1} parent=1 // pred_check_branch
      %159 = sbr.rel (0) target = $region97
    $region96: #{forward.1} parent=1 // pred_region
      %s161 = ssub.s32 128, 128
      %162 = vsyncadd [#allocation17], %s161
      %s164 = sshll.u32 [#allocation16], 4
      %s165 = int_to_ptr.vmem [resolvable:$true] %s164
      %167 = dma.hbm_to_vmem [thread:$0]  %s23, 128, %s165, [#allocation17]
    $region97: #{forward.1} parent=1 // pred_fallthru
      _
    // Predicated region
    $region98: #{forward.1} parent=1 // pred_check
      _
    $region99: #{forward.1} parent=1 // pred_check_branch
      %169 = sbr.rel (0) target = $region101
    $region100: #{forward.1} parent=1 // pred_region
      %s171 = ssub.s32 16, 16
      %172 = vsyncadd [#allocation17], %s171
      %s174 = sshll.u32 [#allocation18], 4
      %s175 = int_to_ptr.vmem [resolvable:$true] %s174
      %177 = dma.hbm_to_vmem [thread:$0]  %s24, 16, %s175, [#allocation17]
    $region101: #{forward.1} parent=1 // pred_fallthru
      _
    // Predicated region
    $region102: #{forward.1} parent=1 // pred_check
      _
    $region103: #{forward.1} parent=1 // pred_check_branch
      %179 = sbr.rel (0) target = $region105
    $region104: #{forward.1} parent=1 // pred_region
      %180 = dma.done [#allocation3], 16
    $region105: #{forward.1} parent=1 // pred_fallthru
      _
    // Predicated region
    $region106: #{forward.1} parent=1 // pred_check
      _
    $region107: #{forward.1} parent=1 // pred_check_branch
      %182 = sbr.rel (0) target = $region109
    $region108: #{forward.1} parent=1 // pred_region
      %183 = dma.done [#allocation5], 112
    $region109: #{forward.1} parent=1 // pred_fallthru
      _
    // Predicated region
    $region110: #{forward.1} parent=1 // pred_check
      _
    $region111: #{forward.1} parent=1 // pred_check_branch
      %185 = sbr.rel (0) target = $region113
    $region112: #{forward.1} parent=1 // pred_region
      %186 = dma.done [#allocation5], 16
    $region113: #{forward.1} parent=1 // pred_fallthru
      _
    // Predicated region
    $region114: #{forward.1} parent=1 // pred_check
      _
    $region115: #{forward.1} parent=1 // pred_check_branch
      %188 = sbr.rel (0) target = $region117
    $region116: #{forward.1} parent=1 // pred_region
      %189 = dma.done [#allocation8], 16
    $region117: #{forward.1} parent=1 // pred_fallthru
      _
    // Predicated region
    $region118: #{forward.1} parent=1 // pred_check
      _
    $region119: #{forward.1} parent=1 // pred_check_branch
      %191 = sbr.rel (0) target = $region121
    $region120: #{forward.1} parent=1 // pred_region
      %192 = dma.done [#allocation8], 16
    $region121: #{forward.1} parent=1 // pred_fallthru
      _
    // Predicated region
    $region122: #{forward.1} parent=1 // pred_check
      _
    $region123: #{forward.1} parent=1 // pred_check_branch
      %194 = sbr.rel (0) target = $region125
    $region124: #{forward.1} parent=1 // pred_region
      %195 = dma.done [#allocation11], 512
    $region125: #{forward.1} parent=1 // pred_fallthru
      _
    // Predicated region
    $region126: #{forward.1} parent=1 // pred_check
      _
    $region127: #{forward.1} parent=1 // pred_check_branch
      %197 = sbr.rel (0) target = $region129
    $region128: #{forward.1} parent=1 // pred_region
      %198 = dma.done [#allocation11], 16
    $region129: #{forward.1} parent=1 // pred_fallthru
      _
    // Predicated region
    $region130: #{forward.1} parent=1 // pred_check
      _
    $region131: #{forward.1} parent=1 // pred_check_branch
      %200 = sbr.rel (0) target = $region133
    $region132: #{forward.1} parent=1 // pred_region
      %201 = dma.done [#allocation14], 128
    $region133: #{forward.1} parent=1 // pred_fallthru
      _
    // Predicated region
    $region134: #{forward.1} parent=1 // pred_check
      _
    $region135: #{forward.1} parent=1 // pred_check_branch
      %203 = sbr.rel (0) target = $region137
    $region136: #{forward.1} parent=1 // pred_region
      %204 = dma.done [#allocation14], 64
    $region137: #{forward.1} parent=1 // pred_fallthru
      _
    // Predicated region
    $region138: #{forward.1} parent=1 // pred_check
      _
    $region139: #{forward.1} parent=1 // pred_check_branch
      %206 = sbr.rel (0) target = $region141
    $region140: #{forward.1} parent=1 // pred_region
      %207 = dma.done [#allocation17], 128
    $region141: #{forward.1} parent=1 // pred_fallthru
      _
    // Predicated region
    $region142: #{forward.1} parent=1 // pred_check
      _
    $region143: #{forward.1} parent=1 // pred_check_branch
      %209 = sbr.rel (0) target = $region145
    $region144: #{forward.1} parent=1 // pred_region
      %210 = dma.done [#allocation17], 16
    $region145: #{forward.1} parent=1 // pred_fallthru
      _
    %v211 = vld [vmem:[%s1] sm:$0xff]
    %v212 = vld [vmem:[%s1 + $0x8] sm:$0xff]
    %v213 = vld [vmem:[%s1 + $0x10] sm:$0xff]
    %v214 = vld [vmem:[%s5] sm:$0xff]
    %v215 = vld [vmem:[%s5 + $0x8] sm:$0xff]
    %v216 = vld [vmem:[%s5 + $0x10] sm:$0xff]
    %v217 = vld [vmem:[%s5 + $0x18] sm:$0xff]
    %v218 = vld [vmem:[%s6] sm:$0x1]
    %v220 = vlaneseq
    %v221 = vshrl.u32 %v220, 7
    %v222 = vsub.s32 0, %v221
    %v223 = vrot.slane %v218, %v222
    %vm225 = vcmask 261120
    %v227 = vsel %vm225, %v212, 0
    %v230 = vsel %vm225, %v213, 0
    %232 = vmatprep.subr.mxu0 0.0
    %233 = vmatpush1.msra.mxu0 0.0
    %234 = vmatprep.subr.mxu0 0.0
    %235 = vmatpush1.msra.mxu0 0.0
    %236 = vmatprep.subr.mxu0 0.0
    %237 = vmatpush1.msra.mxu0 0.0
    %238 = vmatprep.subr.mxu0 0.0
    %239 = vmatpush1.msra.mxu0 0.0
    %240 = vmatprep.subr.mxu0 0.0
    %241 = vmatpush1.msra.mxu0 0.0
    %242 = vmatprep.subr.mxu0 0.0
    %243 = vmatpush1.msra.mxu0 0.0
    %244 = vmatprep.subr.mxu0 0.0
    %245 = vmatpush1.msra.mxu0 0.0
    %246 = vmatprep.subr.mxu0 0.0
    %247 = vmatpush1.msra.mxu0 0.0
    %248 = vmatprep.subr.mxu0 0.0
    %249 = vmatpush1.msra.mxu0 0.0
    %250 = vmatprep.subr.mxu0 0.0
    %251 = vmatpush1.msra.mxu0 0.0
    %252 = vmatprep.subr.mxu0 0.0
    %253 = vmatpush1.msra.mxu0 0.0
    %254 = vmatprep.subr.mxu0 0.0
    %255 = vmatpush1.msra.mxu0 0.0
    %256 = vmatprep.subr.mxu0 0.0
    %257 = vmatpush1.msra.mxu0 %v217
    %258 = vmatprep.subr.mxu0 0.0
    %259 = vmatpush1.msra.mxu0 %v216
    %260 = vmatprep.subr.mxu0 0.0
    %261 = vmatpush1.msra.mxu0 %v215
    %262 = vmatprep.subr.mxu0 0.0
    %263 = vmatpush1.msra.mxu0 %v214
    %264 = vmatprep.subr.mxu0 0.0
    %265 = vmatpush2.msra.mxu0 0.0
    %266 = vmatprep.subr.mxu0 0.0
    %267 = vmatpush2.msra.mxu0 0.0
    %268 = vmatprep.subr.mxu0 0.0
    %269 = vmatpush2.msra.mxu0 0.0
    %270 = vmatprep.subr.mxu0 0.0
    %271 = vmatpush2.msra.mxu0 0.0
    %272 = vmatprep.subr.mxu0 0.0
    %273 = vmatpush2.msra.mxu0 0.0
    %274 = vmatprep.subr.mxu0 0.0
    %275 = vmatpush2.msra.mxu0 0.0
    %276 = vmatprep.subr.mxu0 0.0
    %277 = vmatpush2.msra.mxu0 0.0
    %278 = vmatprep.subr.mxu0 0.0
    %279 = vmatpush2.msra.mxu0 0.0
    %280 = vmatprep.subr.mxu0 0.0
    %281 = vmatpush2.msra.mxu0 0.0
    %282 = vmatprep.subr.mxu0 0.0
    %283 = vmatpush2.msra.mxu0 0.0
    %284 = vmatprep.subr.mxu0 0.0
    %285 = vmatpush2.msra.mxu0 0.0
    %286 = vmatprep.subr.mxu0 0.0
    %287 = vmatpush2.msra.mxu0 0.0
    %288 = vmatprep.subr.mxu0 0.0
    %289 = vmatpush2.msra.mxu0 0.0
    %290 = vmatprep.subr.mxu0 0.0
    %291 = vmatpush2.msra.mxu0 0.0
    %292 = vmatprep.subr.mxu0 0.0
    %293 = vmatpush2.msra.mxu0 0.0
    %294 = vmatprep.subr.mxu0 0.0
    %295 = vmatpush2.msra.mxu0 0.0
    %296 = vmatprep.mubr.f32.mxu0 0.0
    %297 = vmatmul.mubr.f32.gmra.mxu0 %v227
    %v298 = vpop.f32.mrf.mxu0
    %v299 = vadd.f32 %v223, %v298
    %v300 = vpop.f32.mrf.mxu0
    %301 = vmatprep.mubr.f32.mxu0 0.0
    %302 = vmatmul.mubr.f32.gmra.mxu0 %v230
    %v303 = vpop.f32.mrf.mxu0
    %v304 = vadd.f32 %v223, %v303
    %v305 = vpop.f32.mrf.mxu0
    %306 = vdwg.mxu0
    %s307 = scalar_lea.vmem %s5, 32
    %v308 = vld [vmem:[%s307] sm:$0xff]
    %v309 = vld [vmem:[%s307 + $0x8] sm:$0xff]
    %v310 = vld [vmem:[%s307 + $0x10] sm:$0xff]
    %v311 = vld [vmem:[%s307 + $0x18] sm:$0xff]
    %s312 = scalar_lea.vmem %s6, 1
    %v313 = vld [vmem:[%s312] sm:$0x1]
    %s314 = scalar_lea.vmem %s5, 64
    %v315 = vld [vmem:[%s314] sm:$0xff]
    %v316 = vld [vmem:[%s314 + $0x8] sm:$0xff]
    %v317 = vld [vmem:[%s314 + $0x10] sm:$0xff]
    %v318 = vld [vmem:[%s314 + $0x18] sm:$0xff]
    %s319 = scalar_lea.vmem %s6, 2
    %v320 = vld [vmem:[%s319] sm:$0x1]
    %v322 = vlaneseq
    %v323 = vshrl.u32 %v322, 7
    %v324 = vsub.s32 0, %v323
    %v325 = vrot.slane %v313, %v324
    %v328 = vsel %vm225, %v299, 0
    %v331 = vsel %vm225, %v304, 0
    %333 = vmatprep.subr.mxu0 0.0
    %334 = vmatpush1.msra.mxu0 0.0
    %335 = vmatprep.subr.mxu0 0.0
    %336 = vmatpush1.msra.mxu0 0.0
    %337 = vmatprep.subr.mxu0 0.0
    %338 = vmatpush1.msra.mxu0 0.0
    %339 = vmatprep.subr.mxu0 0.0
    %340 = vmatpush1.msra.mxu0 0.0
    %341 = vmatprep.subr.mxu0 0.0
    %342 = vmatpush1.msra.mxu0 0.0
    %343 = vmatprep.subr.mxu0 0.0
    %344 = vmatpush1.msra.mxu0 0.0
    %345 = vmatprep.subr.mxu0 0.0
    %346 = vmatpush1.msra.mxu0 0.0
    %347 = vmatprep.subr.mxu0 0.0
    %348 = vmatpush1.msra.mxu0 0.0
    %349 = vmatprep.subr.mxu0 0.0
    %350 = vmatpush1.msra.mxu0 0.0
    %351 = vmatprep.subr.mxu0 0.0
    %352 = vmatpush1.msra.mxu0 0.0
    %353 = vmatprep.subr.mxu0 0.0
    %354 = vmatpush1.msra.mxu0 0.0
    %355 = vmatprep.subr.mxu0 0.0
    %356 = vmatpush1.msra.mxu0 0.0
    %357 = vmatprep.subr.mxu0 0.0
    %358 = vmatpush1.msra.mxu0 %v311
    %359 = vmatprep.subr.mxu0 0.0
    %360 = vmatpush1.msra.mxu0 %v310
    %361 = vmatprep.subr.mxu0 0.0
    %362 = vmatpush1.msra.mxu0 %v309
    %363 = vmatprep.subr.mxu0 0.0
    %364 = vmatpush1.msra.mxu0 %v308
    %365 = vmatprep.subr.mxu0 0.0
    %366 = vmatpush2.msra.mxu0 0.0
    %367 = vmatprep.subr.mxu0 0.0
    %368 = vmatpush2.msra.mxu0 0.0
    %369 = vmatprep.subr.mxu0 0.0
    %370 = vmatpush2.msra.mxu0 0.0
    %371 = vmatprep.subr.mxu0 0.0
    %372 = vmatpush2.msra.mxu0 0.0
    %373 = vmatprep.subr.mxu0 0.0
    %374 = vmatpush2.msra.mxu0 0.0
    %375 = vmatprep.subr.mxu0 0.0
    %376 = vmatpush2.msra.mxu0 0.0
    %377 = vmatprep.subr.mxu0 0.0
    %378 = vmatpush2.msra.mxu0 0.0
    %379 = vmatprep.subr.mxu0 0.0
    %380 = vmatpush2.msra.mxu0 0.0
    %381 = vmatprep.subr.mxu0 0.0
    %382 = vmatpush2.msra.mxu0 0.0
    %383 = vmatprep.subr.mxu0 0.0
    %384 = vmatpush2.msra.mxu0 0.0
    %385 = vmatprep.subr.mxu0 0.0
    %386 = vmatpush2.msra.mxu0 0.0
    %387 = vmatprep.subr.mxu0 0.0
    %388 = vmatpush2.msra.mxu0 0.0
    %389 = vmatprep.subr.mxu0 0.0
    %390 = vmatpush2.msra.mxu0 0.0
    %391 = vmatprep.subr.mxu0 0.0
    %392 = vmatpush2.msra.mxu0 0.0
    %393 = vmatprep.subr.mxu0 0.0
    %394 = vmatpush2.msra.mxu0 0.0
    %395 = vmatprep.subr.mxu0 0.0
    %396 = vmatpush2.msra.mxu0 0.0
    %397 = vmatprep.mubr.f32.mxu0 0.0
    %398 = vmatmul.mubr.f32.gmra.mxu0 %v328
    %v399 = vpop.f32.mrf.mxu0
    %v400 = vadd.f32 %v325, %v399
    %v401 = vpop.f32.mrf.mxu0
    %402 = vmatprep.mubr.f32.mxu0 0.0
    %403 = vmatmul.mubr.f32.gmra.mxu0 %v331
    %v404 = vpop.f32.mrf.mxu0
    %v405 = vadd.f32 %v325, %v404
    %v406 = vpop.f32.mrf.mxu0
    %407 = vdwg.mxu0
    %v408 = vmax.f32 %v400, 0.0
    %v409 = vmax.f32 %v405, 0.0
    %v411 = vlaneseq
    %v412 = vshrl.u32 %v411, 7
    %v413 = vsub.s32 0, %v412
    %v414 = vrot.slane %v320, %v413
    %v417 = vsel %vm225, %v408, 0
    %v420 = vsel %vm225, %v409, 0
    %422 = vmatprep.subr.mxu0 0.0
    %423 = vmatpush1.msra.mxu0 0.0
    %424 = vmatprep.subr.mxu0 0.0
    %425 = vmatpush1.msra.mxu0 0.0
    %426 = vmatprep.subr.mxu0 0.0
    %427 = vmatpush1.msra.mxu0 0.0
    %428 = vmatprep.subr.mxu0 0.0
    %429 = vmatpush1.msra.mxu0 0.0
    %430 = vmatprep.subr.mxu0 0.0
    %431 = vmatpush1.msra.mxu0 0.0
    %432 = vmatprep.subr.mxu0 0.0
    %433 = vmatpush1.msra.mxu0 0.0
    %434 = vmatprep.subr.mxu0 0.0
    %435 = vmatpush1.msra.mxu0 0.0
    %436 = vmatprep.subr.mxu0 0.0
    %437 = vmatpush1.msra.mxu0 0.0
    %438 = vmatprep.subr.mxu0 0.0
    %439 = vmatpush1.msra.mxu0 0.0
    %440 = vmatprep.subr.mxu0 0.0
    %441 = vmatpush1.msra.mxu0 0.0
    %442 = vmatprep.subr.mxu0 0.0
    %443 = vmatpush1.msra.mxu0 0.0
    %444 = vmatprep.subr.mxu0 0.0
    %445 = vmatpush1.msra.mxu0 0.0
    %446 = vmatprep.subr.mxu0 0.0
    %447 = vmatpush1.msra.mxu0 %v318
    %448 = vmatprep.subr.mxu0 0.0
    %449 = vmatpush1.msra.mxu0 %v317
    %450 = vmatprep.subr.mxu0 0.0
    %451 = vmatpush1.msra.mxu0 %v316
    %452 = vmatprep.subr.mxu0 0.0
    %453 = vmatpush1.msra.mxu0 %v315
    %454 = vmatprep.subr.mxu0 0.0
    %455 = vmatpush2.msra.mxu0 0.0
    %456 = vmatprep.subr.mxu0 0.0
    %457 = vmatpush2.msra.mxu0 0.0
    %458 = vmatprep.subr.mxu0 0.0
    %459 = vmatpush2.msra.mxu0 0.0
    %460 = vmatprep.subr.mxu0 0.0
    %461 = vmatpush2.msra.mxu0 0.0
    %462 = vmatprep.subr.mxu0 0.0
    %463 = vmatpush2.msra.mxu0 0.0
    %464 = vmatprep.subr.mxu0 0.0
    %465 = vmatpush2.msra.mxu0 0.0
    %466 = vmatprep.subr.mxu0 0.0
    %467 = vmatpush2.msra.mxu0 0.0
    %468 = vmatprep.subr.mxu0 0.0
    %469 = vmatpush2.msra.mxu0 0.0
    %470 = vmatprep.subr.mxu0 0.0
    %471 = vmatpush2.msra.mxu0 0.0
    %472 = vmatprep.subr.mxu0 0.0
    %473 = vmatpush2.msra.mxu0 0.0
    %474 = vmatprep.subr.mxu0 0.0
    %475 = vmatpush2.msra.mxu0 0.0
    %476 = vmatprep.subr.mxu0 0.0
    %477 = vmatpush2.msra.mxu0 0.0
    %478 = vmatprep.subr.mxu0 0.0
    %479 = vmatpush2.msra.mxu0 0.0
    %480 = vmatprep.subr.mxu0 0.0
    %481 = vmatpush2.msra.mxu0 0.0
    %482 = vmatprep.subr.mxu0 0.0
    %483 = vmatpush2.msra.mxu0 0.0
    %484 = vmatprep.subr.mxu0 0.0
    %485 = vmatpush2.msra.mxu0 0.0
    %486 = vmatprep.mubr.f32.mxu0 0.0
    %487 = vmatmul.mubr.f32.gmra.mxu0 %v417
    %v488 = vpop.f32.mrf.mxu0
    %v489 = vadd.f32 %v414, %v488
    %v490 = vpop.f32.mrf.mxu0
    %491 = vmatprep.mubr.f32.mxu0 0.0
    %492 = vmatmul.mubr.f32.gmra.mxu0 %v420
    %v493 = vpop.f32.mrf.mxu0
    %v494 = vadd.f32 %v414, %v493
    %v495 = vpop.f32.mrf.mxu0
    %496 = vdwg.mxu0
    %v497 = vmax.f32 %v489, 0.0
    %v498 = vmax.f32 %v494, 0.0
    %v499 = vadd.f32 %v497, %v299
    %v500 = vadd.f32 %v498, %v304
    %s501 = scalar_lea.vmem %s5, 96
    %v502 = vld [vmem:[%s501] sm:$0xff]
    %v503 = vld [vmem:[%s501 + $0x8] sm:$0xff]
    %v504 = vld [vmem:[%s501 + $0x10] sm:$0xff]
    %v505 = vld [vmem:[%s501 + $0x18] sm:$0xff]
    %s506 = scalar_lea.vmem %s6, 3
    %v507 = vld [vmem:[%s506] sm:$0x1]
    %s508 = scalar_lea.vmem %s5, 128
    %v509 = vld [vmem:[%s508] sm:$0xff]
    %v510 = vld [vmem:[%s508 + $0x8] sm:$0xff]
    %v511 = vld [vmem:[%s508 + $0x10] sm:$0xff]
    %v512 = vld [vmem:[%s508 + $0x18] sm:$0xff]
    %s513 = scalar_lea.vmem %s6, 4
    %v514 = vld [vmem:[%s513] sm:$0x1]
    %v516 = vlaneseq
    %v517 = vshrl.u32 %v516, 7
    %v518 = vsub.s32 0, %v517
    %v519 = vrot.slane %v507, %v518
    %v522 = vsel %vm225, %v499, 0
    %v525 = vsel %vm225, %v500, 0
    %527 = vmatprep.subr.mxu0 0.0
    %528 = vmatpush1.msra.mxu0 0.0
    %529 = vmatprep.subr.mxu0 0.0
    %530 = vmatpush1.msra.mxu0 0.0
    %531 = vmatprep.subr.mxu0 0.0
    %532 = vmatpush1.msra.mxu0 0.0
    %533 = vmatprep.subr.mxu0 0.0
    %534 = vmatpush1.msra.mxu0 0.0
    %535 = vmatprep.subr.mxu0 0.0
    %536 = vmatpush1.msra.mxu0 0.0
    %537 = vmatprep.subr.mxu0 0.0
    %538 = vmatpush1.msra.mxu0 0.0
    %539 = vmatprep.subr.mxu0 0.0
    %540 = vmatpush1.msra.mxu0 0.0
    %541 = vmatprep.subr.mxu0 0.0
    %542 = vmatpush1.msra.mxu0 0.0
    %543 = vmatprep.subr.mxu0 0.0
    %544 = vmatpush1.msra.mxu0 0.0
    %545 = vmatprep.subr.mxu0 0.0
    %546 = vmatpush1.msra.mxu0 0.0
    %547 = vmatprep.subr.mxu0 0.0
    %548 = vmatpush1.msra.mxu0 0.0
    %549 = vmatprep.subr.mxu0 0.0
    %550 = vmatpush1.msra.mxu0 0.0
    %551 = vmatprep.subr.mxu0 0.0
    %552 = vmatpush1.msra.mxu0 %v505
    %553 = vmatprep.subr.mxu0 0.0
    %554 = vmatpush1.msra.mxu0 %v504
    %555 = vmatprep.subr.mxu0 0.0
    %556 = vmatpush1.msra.mxu0 %v503
    %557 = vmatprep.subr.mxu0 0.0
    %558 = vmatpush1.msra.mxu0 %v502
    %559 = vmatprep.subr.mxu0 0.0
    %560 = vmatpush2.msra.mxu0 0.0
    %561 = vmatprep.subr.mxu0 0.0
    %562 = vmatpush2.msra.mxu0 0.0
    %563 = vmatprep.subr.mxu0 0.0
    %564 = vmatpush2.msra.mxu0 0.0
    %565 = vmatprep.subr.mxu0 0.0
    %566 = vmatpush2.msra.mxu0 0.0
    %567 = vmatprep.subr.mxu0 0.0
    %568 = vmatpush2.msra.mxu0 0.0
    %569 = vmatprep.subr.mxu0 0.0
    %570 = vmatpush2.msra.mxu0 0.0
    %571 = vmatprep.subr.mxu0 0.0
    %572 = vmatpush2.msra.mxu0 0.0
    %573 = vmatprep.subr.mxu0 0.0
    %574 = vmatpush2.msra.mxu0 0.0
    %575 = vmatprep.subr.mxu0 0.0
    %576 = vmatpush2.msra.mxu0 0.0
    %577 = vmatprep.subr.mxu0 0.0
    %578 = vmatpush2.msra.mxu0 0.0
    %579 = vmatprep.subr.mxu0 0.0
    %580 = vmatpush2.msra.mxu0 0.0
    %581 = vmatprep.subr.mxu0 0.0
    %582 = vmatpush2.msra.mxu0 0.0
    %583 = vmatprep.subr.mxu0 0.0
    %584 = vmatpush2.msra.mxu0 0.0
    %585 = vmatprep.subr.mxu0 0.0
    %586 = vmatpush2.msra.mxu0 0.0
    %587 = vmatprep.subr.mxu0 0.0
    %588 = vmatpush2.msra.mxu0 0.0
    %589 = vmatprep.subr.mxu0 0.0
    %590 = vmatpush2.msra.mxu0 0.0
    %591 = vmatprep.mubr.f32.mxu0 0.0
    %592 = vmatmul.mubr.f32.gmra.mxu0 %v522
    %v593 = vpop.f32.mrf.mxu0
    %v594 = vadd.f32 %v519, %v593
    %v595 = vpop.f32.mrf.mxu0
    %596 = vmatprep.mubr.f32.mxu0 0.0
    %597 = vmatmul.mubr.f32.gmra.mxu0 %v525
    %v598 = vpop.f32.mrf.mxu0
    %v599 = vadd.f32 %v519, %v598
    %v600 = vpop.f32.mrf.mxu0
    %601 = vdwg.mxu0
    %v602 = vmax.f32 %v594, 0.0
    %v603 = vmax.f32 %v599, 0.0
    %v605 = vlaneseq
    %v606 = vshrl.u32 %v605, 7
    %v607 = vsub.s32 0, %v606
    %v608 = vrot.slane %v514, %v607
    %v611 = vsel %vm225, %v602, 0
    %v614 = vsel %vm225, %v603, 0
    %616 = vmatprep.subr.mxu0 0.0
    %617 = vmatpush1.msra.mxu0 0.0
    %618 = vmatprep.subr.mxu0 0.0
    %619 = vmatpush1.msra.mxu0 0.0
    %620 = vmatprep.subr.mxu0 0.0
    %621 = vmatpush1.msra.mxu0 0.0
    %622 = vmatprep.subr.mxu0 0.0
    %623 = vmatpush1.msra.mxu0 0.0
    %624 = vmatprep.subr.mxu0 0.0
    %625 = vmatpush1.msra.mxu0 0.0
    %626 = vmatprep.subr.mxu0 0.0
    %627 = vmatpush1.msra.mxu0 0.0
    %628 = vmatprep.subr.mxu0 0.0
    %629 = vmatpush1.msra.mxu0 0.0
    %630 = vmatprep.subr.mxu0 0.0
    %631 = vmatpush1.msra.mxu0 0.0
    %632 = vmatprep.subr.mxu0 0.0
    %633 = vmatpush1.msra.mxu0 0.0
    %634 = vmatprep.subr.mxu0 0.0
    %635 = vmatpush1.msra.mxu0 0.0
    %636 = vmatprep.subr.mxu0 0.0
    %637 = vmatpush1.msra.mxu0 0.0
    %638 = vmatprep.subr.mxu0 0.0
    %639 = vmatpush1.msra.mxu0 0.0
    %640 = vmatprep.subr.mxu0 0.0
    %641 = vmatpush1.msra.mxu0 %v512
    %642 = vmatprep.subr.mxu0 0.0
    %643 = vmatpush1.msra.mxu0 %v511
    %644 = vmatprep.subr.mxu0 0.0
    %645 = vmatpush1.msra.mxu0 %v510
    %646 = vmatprep.subr.mxu0 0.0
    %647 = vmatpush1.msra.mxu0 %v509
    %648 = vmatprep.subr.mxu0 0.0
    %649 = vmatpush2.msra.mxu0 0.0
    %650 = vmatprep.subr.mxu0 0.0
    %651 = vmatpush2.msra.mxu0 0.0
    %652 = vmatprep.subr.mxu0 0.0
    %653 = vmatpush2.msra.mxu0 0.0
    %654 = vmatprep.subr.mxu0 0.0
    %655 = vmatpush2.msra.mxu0 0.0
    %656 = vmatprep.subr.mxu0 0.0
    %657 = vmatpush2.msra.mxu0 0.0
    %658 = vmatprep.subr.mxu0 0.0
    %659 = vmatpush2.msra.mxu0 0.0
    %660 = vmatprep.subr.mxu0 0.0
    %661 = vmatpush2.msra.mxu0 0.0
    %662 = vmatprep.subr.mxu0 0.0
    %663 = vmatpush2.msra.mxu0 0.0
    %664 = vmatprep.subr.mxu0 0.0
    %665 = vmatpush2.msra.mxu0 0.0
    %666 = vmatprep.subr.mxu0 0.0
    %667 = vmatpush2.msra.mxu0 0.0
    %668 = vmatprep.subr.mxu0 0.0
    %669 = vmatpush2.msra.mxu0 0.0
    %670 = vmatprep.subr.mxu0 0.0
    %671 = vmatpush2.msra.mxu0 0.0
    %672 = vmatprep.subr.mxu0 0.0
    %673 = vmatpush2.msra.mxu0 0.0
    %674 = vmatprep.subr.mxu0 0.0
    %675 = vmatpush2.msra.mxu0 0.0
    %676 = vmatprep.subr.mxu0 0.0
    %677 = vmatpush2.msra.mxu0 0.0
    %678 = vmatprep.subr.mxu0 0.0
    %679 = vmatpush2.msra.mxu0 0.0
    %680 = vmatprep.mubr.f32.mxu0 0.0
    %681 = vmatmul.mubr.f32.gmra.mxu0 %v611
    %v682 = vpop.f32.mrf.mxu0
    %v683 = vadd.f32 %v608, %v682
    %v684 = vpop.f32.mrf.mxu0
    %685 = vmatprep.mubr.f32.mxu0 0.0
    %686 = vmatmul.mubr.f32.gmra.mxu0 %v614
    %v687 = vpop.f32.mrf.mxu0
    %v688 = vadd.f32 %v608, %v687
    %v689 = vpop.f32.mrf.mxu0
    %690 = vdwg.mxu0
    %v691 = vmax.f32 %v683, 0.0
    %v692 = vmax.f32 %v688, 0.0
    %v693 = vadd.f32 %v691, %v499
    %v694 = vadd.f32 %v692, %v500
    %s695 = scalar_lea.vmem %s5, 160
    %v696 = vld [vmem:[%s695] sm:$0xff]
    %v697 = vld [vmem:[%s695 + $0x8] sm:$0xff]
    %v698 = vld [vmem:[%s695 + $0x10] sm:$0xff]
    %v699 = vld [vmem:[%s695 + $0x18] sm:$0xff]
    %s700 = scalar_lea.vmem %s6, 5
    %v701 = vld [vmem:[%s700] sm:$0x1]
    %s702 = scalar_lea.vmem %s5, 192
    %v703 = vld [vmem:[%s702] sm:$0xff]
    %v704 = vld [vmem:[%s702 + $0x8] sm:$0xff]
    %v705 = vld [vmem:[%s702 + $0x10] sm:$0xff]
    %v706 = vld [vmem:[%s702 + $0x18] sm:$0xff]
    %s707 = scalar_lea.vmem %s6, 6
    %v708 = vld [vmem:[%s707] sm:$0x1]
    %v710 = vlaneseq
    %v711 = vshrl.u32 %v710, 7
    %v712 = vsub.s32 0, %v711
    %v713 = vrot.slane %v701, %v712
    %v716 = vsel %vm225, %v693, 0
    %v719 = vsel %vm225, %v694, 0
    %721 = vmatprep.subr.mxu0 0.0
    %722 = vmatpush1.msra.mxu0 0.0
    %723 = vmatprep.subr.mxu0 0.0
    %724 = vmatpush1.msra.mxu0 0.0
    %725 = vmatprep.subr.mxu0 0.0
    %726 = vmatpush1.msra.mxu0 0.0
    %727 = vmatprep.subr.mxu0 0.0
    %728 = vmatpush1.msra.mxu0 0.0
    %729 = vmatprep.subr.mxu0 0.0
    %730 = vmatpush1.msra.mxu0 0.0
    %731 = vmatprep.subr.mxu0 0.0
    %732 = vmatpush1.msra.mxu0 0.0
    %733 = vmatprep.subr.mxu0 0.0
    %734 = vmatpush1.msra.mxu0 0.0
    %735 = vmatprep.subr.mxu0 0.0
    %736 = vmatpush1.msra.mxu0 0.0
    %737 = vmatprep.subr.mxu0 0.0
    %738 = vmatpush1.msra.mxu0 0.0
    %739 = vmatprep.subr.mxu0 0.0
    %740 = vmatpush1.msra.mxu0 0.0
    %741 = vmatprep.subr.mxu0 0.0
    %742 = vmatpush1.msra.mxu0 0.0
    %743 = vmatprep.subr.mxu0 0.0
    %744 = vmatpush1.msra.mxu0 0.0
    %745 = vmatprep.subr.mxu0 0.0
    %746 = vmatpush1.msra.mxu0 %v699
    %747 = vmatprep.subr.mxu0 0.0
    %748 = vmatpush1.msra.mxu0 %v698
    %749 = vmatprep.subr.mxu0 0.0
    %750 = vmatpush1.msra.mxu0 %v697
    %751 = vmatprep.subr.mxu0 0.0
    %752 = vmatpush1.msra.mxu0 %v696
    %753 = vmatprep.subr.mxu0 0.0
    %754 = vmatpush2.msra.mxu0 0.0
    %755 = vmatprep.subr.mxu0 0.0
    %756 = vmatpush2.msra.mxu0 0.0
    %757 = vmatprep.subr.mxu0 0.0
    %758 = vmatpush2.msra.mxu0 0.0
    %759 = vmatprep.subr.mxu0 0.0
    %760 = vmatpush2.msra.mxu0 0.0
    %761 = vmatprep.subr.mxu0 0.0
    %762 = vmatpush2.msra.mxu0 0.0
    %763 = vmatprep.subr.mxu0 0.0
    %764 = vmatpush2.msra.mxu0 0.0
    %765 = vmatprep.subr.mxu0 0.0
    %766 = vmatpush2.msra.mxu0 0.0
    %767 = vmatprep.subr.mxu0 0.0
    %768 = vmatpush2.msra.mxu0 0.0
    %769 = vmatprep.subr.mxu0 0.0
    %770 = vmatpush2.msra.mxu0 0.0
    %771 = vmatprep.subr.mxu0 0.0
    %772 = vmatpush2.msra.mxu0 0.0
    %773 = vmatprep.subr.mxu0 0.0
    %774 = vmatpush2.msra.mxu0 0.0
    %775 = vmatprep.subr.mxu0 0.0
    %776 = vmatpush2.msra.mxu0 0.0
    %777 = vmatprep.subr.mxu0 0.0
    %778 = vmatpush2.msra.mxu0 0.0
    %779 = vmatprep.subr.mxu0 0.0
    %780 = vmatpush2.msra.mxu0 0.0
    %781 = vmatprep.subr.mxu0 0.0
    %782 = vmatpush2.msra.mxu0 0.0
    %783 = vmatprep.subr.mxu0 0.0
    %784 = vmatpush2.msra.mxu0 0.0
    %785 = vmatprep.mubr.f32.mxu0 0.0
    %786 = vmatmul.mubr.f32.gmra.mxu0 %v716
    %v787 = vpop.f32.mrf.mxu0
    %v788 = vadd.f32 %v713, %v787
    %v789 = vpop.f32.mrf.mxu0
    %790 = vmatprep.mubr.f32.mxu0 0.0
    %791 = vmatmul.mubr.f32.gmra.mxu0 %v719
    %v792 = vpop.f32.mrf.mxu0
    %v793 = vadd.f32 %v713, %v792
    %v794 = vpop.f32.mrf.mxu0
    %795 = vdwg.mxu0
    %v796 = vmax.f32 %v788, 0.0
    %v797 = vmax.f32 %v793, 0.0
    %v799 = vlaneseq
    %v800 = vshrl.u32 %v799, 7
    %v801 = vsub.s32 0, %v800
    %v802 = vrot.slane %v708, %v801
    %v805 = vsel %vm225, %v796, 0
    %v808 = vsel %vm225, %v797, 0
    %810 = vmatprep.subr.mxu0 0.0
    %811 = vmatpush1.msra.mxu0 0.0
    %812 = vmatprep.subr.mxu0 0.0
    %813 = vmatpush1.msra.mxu0 0.0
    %814 = vmatprep.subr.mxu0 0.0
    %815 = vmatpush1.msra.mxu0 0.0
    %816 = vmatprep.subr.mxu0 0.0
    %817 = vmatpush1.msra.mxu0 0.0
    %818 = vmatprep.subr.mxu0 0.0
    %819 = vmatpush1.msra.mxu0 0.0
    %820 = vmatprep.subr.mxu0 0.0
    %821 = vmatpush1.msra.mxu0 0.0
    %822 = vmatprep.subr.mxu0 0.0
    %823 = vmatpush1.msra.mxu0 0.0
    %824 = vmatprep.subr.mxu0 0.0
    %825 = vmatpush1.msra.mxu0 0.0
    %826 = vmatprep.subr.mxu0 0.0
    %827 = vmatpush1.msra.mxu0 0.0
    %828 = vmatprep.subr.mxu0 0.0
    %829 = vmatpush1.msra.mxu0 0.0
    %830 = vmatprep.subr.mxu0 0.0
    %831 = vmatpush1.msra.mxu0 0.0
    %832 = vmatprep.subr.mxu0 0.0
    %833 = vmatpush1.msra.mxu0 0.0
    %834 = vmatprep.subr.mxu0 0.0
    %835 = vmatpush1.msra.mxu0 %v706
    %836 = vmatprep.subr.mxu0 0.0
    %837 = vmatpush1.msra.mxu0 %v705
    %838 = vmatprep.subr.mxu0 0.0
    %839 = vmatpush1.msra.mxu0 %v704
    %840 = vmatprep.subr.mxu0 0.0
    %841 = vmatpush1.msra.mxu0 %v703
    %842 = vmatprep.subr.mxu0 0.0
    %843 = vmatpush2.msra.mxu0 0.0
    %844 = vmatprep.subr.mxu0 0.0
    %845 = vmatpush2.msra.mxu0 0.0
    %846 = vmatprep.subr.mxu0 0.0
    %847 = vmatpush2.msra.mxu0 0.0
    %848 = vmatprep.subr.mxu0 0.0
    %849 = vmatpush2.msra.mxu0 0.0
    %850 = vmatprep.subr.mxu0 0.0
    %851 = vmatpush2.msra.mxu0 0.0
    %852 = vmatprep.subr.mxu0 0.0
    %853 = vmatpush2.msra.mxu0 0.0
    %854 = vmatprep.subr.mxu0 0.0
    %855 = vmatpush2.msra.mxu0 0.0
    %856 = vmatprep.subr.mxu0 0.0
    %857 = vmatpush2.msra.mxu0 0.0
    %858 = vmatprep.subr.mxu0 0.0
    %859 = vmatpush2.msra.mxu0 0.0
    %860 = vmatprep.subr.mxu0 0.0
    %861 = vmatpush2.msra.mxu0 0.0
    %862 = vmatprep.subr.mxu0 0.0
    %863 = vmatpush2.msra.mxu0 0.0
    %864 = vmatprep.subr.mxu0 0.0
    %865 = vmatpush2.msra.mxu0 0.0
    %866 = vmatprep.subr.mxu0 0.0
    %867 = vmatpush2.msra.mxu0 0.0
    %868 = vmatprep.subr.mxu0 0.0
    %869 = vmatpush2.msra.mxu0 0.0
    %870 = vmatprep.subr.mxu0 0.0
    %871 = vmatpush2.msra.mxu0 0.0
    %872 = vmatprep.subr.mxu0 0.0
    %873 = vmatpush2.msra.mxu0 0.0
    %874 = vmatprep.mubr.f32.mxu0 0.0
    %875 = vmatmul.mubr.f32.gmra.mxu0 %v805
    %v876 = vpop.f32.mrf.mxu0
    %v877 = vadd.f32 %v802, %v876
    %v878 = vpop.f32.mrf.mxu0
    %879 = vmatprep.mubr.f32.mxu0 0.0
    %880 = vmatmul.mubr.f32.gmra.mxu0 %v808
    %v881 = vpop.f32.mrf.mxu0
    %v882 = vadd.f32 %v802, %v881
    %v883 = vpop.f32.mrf.mxu0
    %884 = vdwg.mxu0
    %v885 = vmax.f32 %v877, 0.0
    %v886 = vmax.f32 %v882, 0.0
    %v887 = vadd.f32 %v885, %v693
    %v888 = vadd.f32 %v886, %v694
    %v889 = vld [vmem:[%s4] sm:$0xff]
    %v890 = vld [vmem:[%s4 + $0x8] sm:$0xff]
    %v891 = vld [vmem:[%s4 + $0x10] sm:$0xff]
    %v892 = vld [vmem:[%s4 + $0x18] sm:$0xff]
    %v894 = vsel %vm225, %v887, 0
    %v897 = vsel %vm225, %v888, 0
    %899 = vmatprep.subr.mxu0 0.0
    %900 = vmatpush1.msra.mxu0 0.0
    %901 = vmatprep.subr.mxu0 0.0
    %902 = vmatpush1.msra.mxu0 0.0
    %903 = vmatprep.subr.mxu0 0.0
    %904 = vmatpush1.msra.mxu0 0.0
    %905 = vmatprep.subr.mxu0 0.0
    %906 = vmatpush1.msra.mxu0 0.0
    %907 = vmatprep.subr.mxu0 0.0
    %908 = vmatpush1.msra.mxu0 0.0
    %909 = vmatprep.subr.mxu0 0.0
    %910 = vmatpush1.msra.mxu0 0.0
    %911 = vmatprep.subr.mxu0 0.0
    %912 = vmatpush1.msra.mxu0 0.0
    %913 = vmatprep.subr.mxu0 0.0
    %914 = vmatpush1.msra.mxu0 0.0
    %915 = vmatprep.subr.mxu0 0.0
    %916 = vmatpush1.msra.mxu0 0.0
    %917 = vmatprep.subr.mxu0 0.0
    %918 = vmatpush1.msra.mxu0 0.0
    %919 = vmatprep.subr.mxu0 0.0
    %920 = vmatpush1.msra.mxu0 0.0
    %921 = vmatprep.subr.mxu0 0.0
    %922 = vmatpush1.msra.mxu0 0.0
    %923 = vmatprep.subr.mxu0 0.0
    %924 = vmatpush1.msra.mxu0 %v892
    %925 = vmatprep.subr.mxu0 0.0
    %926 = vmatpush1.msra.mxu0 %v891
    %927 = vmatprep.subr.mxu0 0.0
    %928 = vmatpush1.msra.mxu0 %v890
    %929 = vmatprep.subr.mxu0 0.0
    %930 = vmatpush1.msra.mxu0 %v889
    %931 = vmatprep.subr.mxu0 0.0
    %932 = vmatpush2.msra.mxu0 0.0
    %933 = vmatprep.subr.mxu0 0.0
    %934 = vmatpush2.msra.mxu0 0.0
    %935 = vmatprep.subr.mxu0 0.0
    %936 = vmatpush2.msra.mxu0 0.0
    %937 = vmatprep.subr.mxu0 0.0
    %938 = vmatpush2.msra.mxu0 0.0
    %939 = vmatprep.subr.mxu0 0.0
    %940 = vmatpush2.msra.mxu0 0.0
    %941 = vmatprep.subr.mxu0 0.0
    %942 = vmatpush2.msra.mxu0 0.0
    %943 = vmatprep.subr.mxu0 0.0
    %944 = vmatpush2.msra.mxu0 0.0
    %945 = vmatprep.subr.mxu0 0.0
    %946 = vmatpush2.msra.mxu0 0.0
    %947 = vmatprep.subr.mxu0 0.0
    %948 = vmatpush2.msra.mxu0 0.0
    %949 = vmatprep.subr.mxu0 0.0
    %950 = vmatpush2.msra.mxu0 0.0
    %951 = vmatprep.subr.mxu0 0.0
    %952 = vmatpush2.msra.mxu0 0.0
    %953 = vmatprep.subr.mxu0 0.0
    %954 = vmatpush2.msra.mxu0 0.0
    %955 = vmatprep.subr.mxu0 0.0
    %956 = vmatpush2.msra.mxu0 0.0
    %957 = vmatprep.subr.mxu0 0.0
    %958 = vmatpush2.msra.mxu0 0.0
    %959 = vmatprep.subr.mxu0 0.0
    %960 = vmatpush2.msra.mxu0 0.0
    %961 = vmatprep.subr.mxu0 0.0
    %962 = vmatpush2.msra.mxu0 0.0
    %963 = vmatprep.mubr.f32.mxu0 0.0
    %964 = vmatmul.mubr.f32.gmra.mxu0 %v894
    %v965 = vpop.f32.mrf.mxu0
    %v966 = vadd.f32 0.0, %v965
    %v967 = vpop.f32.mrf.mxu0
    %968 = vmatprep.mubr.f32.mxu0 0.0
    %969 = vmatmul.mubr.f32.gmra.mxu0 %v897
    %v970 = vpop.f32.mrf.mxu0
    %v971 = vadd.f32 0.0, %v970
    %v972 = vpop.f32.mrf.mxu0
    %973 = vdwg.mxu0
    %vm974 = vcmask 818176
    %v975 = vsel %vm974, %v966, -inf
    %976 = vmax.xlane.f32.xlu0 %v975
    %v977 = vpop.xlane.xlu0 %976
    %v978 = vsel %vm974, %v971, -inf
    %979 = vmax.xlane.f32.xlu0 %v978
    %v980 = vpop.xlane.xlu0 %979
    %v981 = vsub.f32 %v966, %v977
    %v982 = vsub.f32 %v971, %v980
    %v983 = vmul.f32 %v981, 1.442695
    %v984 = vpow.pop %v983
    %v985 = vmul.f32 %v982, 1.442695
    %v986 = vpow.pop %v985
    %v987 = vsel %vm974, %v984, 0.0
    %988 = vadd.xlane.f32.xlu0 %v987
    %v989 = vpop.xlane.xlu0 %988
    %v990 = vsel %vm974, %v986, 0.0
    %991 = vadd.xlane.f32.xlu0 %v990
    %v992 = vpop.xlane.xlu0 %991
    %v993 = vrcp.pop %v989
    %v994 = vmul.f32 %v984, %v993
    %v995 = vrcp.pop %v992
    %v996 = vmul.f32 %v986, %v995
    %v997 = vld [vmem:[%s0] sm:$0x1]
    %v998 = vlaneseq
    %v999 = vshrl.u32 %v998, 7
    %v1000 = vadd.s32 %v999, 8
    %v1001 = vadd.s32 %v999, 16
    %v1002 = vadd.s32 %v999, 24
    %v1003 = vadd.s32 %v999, 32
    %v1004 = vadd.s32 %v999, 40
    %v1005 = vadd.s32 %v999, 48
    %v1006 = vadd.s32 %v999, 56
    %v1007 = vadd.s32 %v999, 64
    %v1008 = vadd.s32 %v999, 72
    %v1009 = vadd.s32 %v999, 80
    %v1010 = vadd.s32 %v999, 88
    %v1011 = vadd.s32 %v999, 96
    %v1012 = vlaneseq
    %v1013 = vshrl.u32 %v1012, 7
    %v1014 = vsub.s32 0, %v1013
    %v1015 = vrot.slane %v997, %v1014
    %vm1016 = vcmp.eq.s32.totalorder %v999, %v1015
    %vm1017 = vcmp.eq.s32.totalorder %v1000, %v1015
    %vm1018 = vcmp.eq.s32.totalorder %v1001, %v1015
    %vm1019 = vcmp.eq.s32.totalorder %v1002, %v1015
    %vm1020 = vcmp.eq.s32.totalorder %v1003, %v1015
    %vm1021 = vcmp.eq.s32.totalorder %v1004, %v1015
    %vm1022 = vcmp.eq.s32.totalorder %v1005, %v1015
    %vm1023 = vcmp.eq.s32.totalorder %v1006, %v1015
    %vm1024 = vcmp.eq.s32.totalorder %v1007, %v1015
    %vm1025 = vcmp.eq.s32.totalorder %v1008, %v1015
    %vm1026 = vcmp.eq.s32.totalorder %v1009, %v1015
    %vm1027 = vcmp.eq.s32.totalorder %v1010, %v1015
    %vm1028 = vcmp.eq.s32.totalorder %v1011, %v1015
    %v1029 = vsel %vm1016, 1, 0
    %v1030 = vsel %vm1017, 1, 0
    %v1031 = vsel %vm1018, 1, 0
    %v1032 = vsel %vm1019, 1, 0
    %v1033 = vsel %vm1020, 1, 0
    %v1034 = vsel %vm1021, 1, 0
    %v1035 = vsel %vm1022, 1, 0
    %v1036 = vsel %vm1023, 1, 0
    %v1037 = vsel %vm1024, 1, 0
    %v1038 = vsel %vm1025, 1, 0
    %v1039 = vsel %vm1026, 1, 0
    %v1040 = vsel %vm1027, 1, 0
    %v1041 = vsel %vm1028, 1, 0
    %v1042 = vcvt.s32.f32 %v1029
    %v1043 = vcvt.s32.f32 %v1030
    %v1044 = vcvt.s32.f32 %v1031
    %v1045 = vcvt.s32.f32 %v1032
    %v1046 = vcvt.s32.f32 %v1033
    %v1047 = vcvt.s32.f32 %v1034
    %v1048 = vcvt.s32.f32 %v1035
    %v1049 = vcvt.s32.f32 %v1036
    %v1050 = vcvt.s32.f32 %v1037
    %v1051 = vcvt.s32.f32 %v1038
    %v1052 = vcvt.s32.f32 %v1039
    %v1053 = vcvt.s32.f32 %v1040
    %v1054 = vcvt.s32.f32 %v1041
    %v1056 = vsel %vm974, %v994, 0
    %v1059 = vsel %vm974, %v996, 0
    %vm1061 = vcmask 1043456
    %v1063 = vsel %vm1061, %v1054, 0
    %1065 = vmatprep.subr.mxu0 0.0
    %1066 = vmatpush1.msra.mxu0 0.0
    %1067 = vmatprep.subr.mxu0 0.0
    %1068 = vmatpush1.msra.mxu0 0.0
    %1069 = vmatprep.subr.mxu0 0.0
    %1070 = vmatpush1.msra.mxu0 0.0
    %1071 = vmatprep.subr.mxu0 0.0
    %1072 = vmatpush1.msra.mxu0 %v1063
    %1073 = vmatprep.subr.mxu0 0.0
    %1074 = vmatpush1.msra.mxu0 %v1053
    %1075 = vmatprep.subr.mxu0 0.0
    %1076 = vmatpush1.msra.mxu0 %v1052
    %1077 = vmatprep.subr.mxu0 0.0
    %1078 = vmatpush1.msra.mxu0 %v1051
    %1079 = vmatprep.subr.mxu0 0.0
    %1080 = vmatpush1.msra.mxu0 %v1050
    %1081 = vmatprep.subr.mxu0 0.0
    %1082 = vmatpush1.msra.mxu0 %v1049
    %1083 = vmatprep.subr.mxu0 0.0
    %1084 = vmatpush1.msra.mxu0 %v1048
    %1085 = vmatprep.subr.mxu0 0.0
    %1086 = vmatpush1.msra.mxu0 %v1047
    %1087 = vmatprep.subr.mxu0 0.0
    %1088 = vmatpush1.msra.mxu0 %v1046
    %1089 = vmatprep.subr.mxu0 0.0
    %1090 = vmatpush1.msra.mxu0 %v1045
    %1091 = vmatprep.subr.mxu0 0.0
    %1092 = vmatpush1.msra.mxu0 %v1044
    %1093 = vmatprep.subr.mxu0 0.0
    %1094 = vmatpush1.msra.mxu0 %v1043
    %1095 = vmatprep.subr.mxu0 0.0
    %1096 = vmatpush1.msra.mxu0 %v1042
    %1097 = vmatprep.subr.mxu0 0.0
    %1098 = vmatpush2.msra.mxu0 0.0
    %1099 = vmatprep.subr.mxu0 0.0
    %1100 = vmatpush2.msra.mxu0 0.0
    %1101 = vmatprep.subr.mxu0 0.0
    %1102 = vmatpush2.msra.mxu0 0.0
    %1103 = vmatprep.subr.mxu0 0.0
    %1104 = vmatpush2.msra.mxu0 0.0
    %1105 = vmatprep.subr.mxu0 0.0
    %1106 = vmatpush2.msra.mxu0 0.0
    %1107 = vmatprep.subr.mxu0 0.0
    %1108 = vmatpush2.msra.mxu0 0.0
    %1109 = vmatprep.subr.mxu0 0.0
    %1110 = vmatpush2.msra.mxu0 0.0
    %1111 = vmatprep.subr.mxu0 0.0
    %1112 = vmatpush2.msra.mxu0 0.0
    %1113 = vmatprep.subr.mxu0 0.0
    %1114 = vmatpush2.msra.mxu0 0.0
    %1115 = vmatprep.subr.mxu0 0.0
    %1116 = vmatpush2.msra.mxu0 0.0
    %1117 = vmatprep.subr.mxu0 0.0
    %1118 = vmatpush2.msra.mxu0 0.0
    %1119 = vmatprep.subr.mxu0 0.0
    %1120 = vmatpush2.msra.mxu0 0.0
    %1121 = vmatprep.subr.mxu0 0.0
    %1122 = vmatpush2.msra.mxu0 0.0
    %1123 = vmatprep.subr.mxu0 0.0
    %1124 = vmatpush2.msra.mxu0 0.0
    %1125 = vmatprep.subr.mxu0 0.0
    %1126 = vmatpush2.msra.mxu0 0.0
    %1127 = vmatprep.subr.mxu0 0.0
    %1128 = vmatpush2.msra.mxu0 0.0
    %1129 = vmatprep.mubr.f32.mxu0 0.0
    %1130 = vmatmul.mubr.f32.gmra.mxu0 %v1056
    %v1131 = vpop.f32.mrf.mxu0
    %v1132 = vadd.f32 0.0, %v1131
    %v1133 = vpop.f32.mrf.mxu0
    %1134 = vmatprep.mubr.f32.mxu0 0.0
    %1135 = vmatmul.mubr.f32.gmra.mxu0 %v1059
    %v1136 = vpop.f32.mrf.mxu0
    %v1137 = vadd.f32 0.0, %v1136
    %v1138 = vpop.f32.mrf.mxu0
    %1139 = vdwg.mxu0
    %v1140 = vld [vmem:[%s13] sm:$0xff]
    %v1141 = vld [vmem:[%s13 + $0x8] sm:$0xff]
    %v1142 = vld [vmem:[%s13 + $0x10] sm:$0xff]
    %v1143 = vld [vmem:[%s13 + $0x18] sm:$0xff]
    %v1144 = vld [vmem:[#allocation9] sm:$0x1]
    %v1146 = vlaneseq
    %v1147 = vshrl.u32 %v1146, 7
    %v1148 = vsub.s32 0, %v1147
    %v1149 = vrot.slane %v1144, %v1148
    %v1152 = vsel %vm225, %v211, 0
    %1154 = vmatprep.subr.mxu0 0.0
    %1155 = vmatpush1.msra.mxu0 0.0
    %1156 = vmatprep.subr.mxu0 0.0
    %1157 = vmatpush1.msra.mxu0 0.0
    %1158 = vmatprep.subr.mxu0 0.0
    %1159 = vmatpush1.msra.mxu0 0.0
    %1160 = vmatprep.subr.mxu0 0.0
    %1161 = vmatpush1.msra.mxu0 0.0
    %1162 = vmatprep.subr.mxu0 0.0
    %1163 = vmatpush1.msra.mxu0 0.0
    %1164 = vmatprep.subr.mxu0 0.0
    %1165 = vmatpush1.msra.mxu0 0.0
    %1166 = vmatprep.subr.mxu0 0.0
    %1167 = vmatpush1.msra.mxu0 0.0
    %1168 = vmatprep.subr.mxu0 0.0
    %1169 = vmatpush1.msra.mxu0 0.0
    %1170 = vmatprep.subr.mxu0 0.0
    %1171 = vmatpush1.msra.mxu0 0.0
    %1172 = vmatprep.subr.mxu0 0.0
    %1173 = vmatpush1.msra.mxu0 0.0
    %1174 = vmatprep.subr.mxu0 0.0
    %1175 = vmatpush1.msra.mxu0 0.0
    %1176 = vmatprep.subr.mxu0 0.0
    %1177 = vmatpush1.msra.mxu0 0.0
    %1178 = vmatprep.subr.mxu0 0.0
    %1179 = vmatpush1.msra.mxu0 %v1143
    %1180 = vmatprep.subr.mxu0 0.0
    %1181 = vmatpush1.msra.mxu0 %v1142
    %1182 = vmatprep.subr.mxu0 0.0
    %1183 = vmatpush1.msra.mxu0 %v1141
    %1184 = vmatprep.subr.mxu0 0.0
    %1185 = vmatpush1.msra.mxu0 %v1140
    %1186 = vmatprep.subr.mxu0 0.0
    %1187 = vmatpush2.msra.mxu0 0.0
    %1188 = vmatprep.subr.mxu0 0.0
    %1189 = vmatpush2.msra.mxu0 0.0
    %1190 = vmatprep.subr.mxu0 0.0
    %1191 = vmatpush2.msra.mxu0 0.0
    %1192 = vmatprep.subr.mxu0 0.0
    %1193 = vmatpush2.msra.mxu0 0.0
    %1194 = vmatprep.subr.mxu0 0.0
    %1195 = vmatpush2.msra.mxu0 0.0
    %1196 = vmatprep.subr.mxu0 0.0
    %1197 = vmatpush2.msra.mxu0 0.0
    %1198 = vmatprep.subr.mxu0 0.0
    %1199 = vmatpush2.msra.mxu0 0.0
    %1200 = vmatprep.subr.mxu0 0.0
    %1201 = vmatpush2.msra.mxu0 0.0
    %1202 = vmatprep.subr.mxu0 0.0
    %1203 = vmatpush2.msra.mxu0 0.0
    %1204 = vmatprep.subr.mxu0 0.0
    %1205 = vmatpush2.msra.mxu0 0.0
    %1206 = vmatprep.subr.mxu0 0.0
    %1207 = vmatpush2.msra.mxu0 0.0
    %1208 = vmatprep.subr.mxu0 0.0
    %1209 = vmatpush2.msra.mxu0 0.0
    %1210 = vmatprep.subr.mxu0 0.0
    %1211 = vmatpush2.msra.mxu0 0.0
    %1212 = vmatprep.subr.mxu0 0.0
    %1213 = vmatpush2.msra.mxu0 0.0
    %1214 = vmatprep.subr.mxu0 0.0
    %1215 = vmatpush2.msra.mxu0 0.0
    %1216 = vmatprep.subr.mxu0 0.0
    %1217 = vmatpush2.msra.mxu0 0.0
    %1218 = vmatprep.mubr.f32.mxu0 0.0
    %1219 = vmatmul.mubr.f32.gmra.mxu0 %v1152
    %v1220 = vpop.f32.mrf.mxu0
    %v1221 = vadd.f32 %v1149, %v1220
    %v1222 = vpop.f32.mrf.mxu0
    %1223 = vmatprep.mubr.f32.mxu0 0.0
    %1224 = vmatmul.mubr.f32.gmra.mxu0 %v227
    %v1225 = vpop.f32.mrf.mxu0
    %v1226 = vadd.f32 %v1149, %v1225
    %v1227 = vpop.f32.mrf.mxu0
    %1228 = vmatprep.mubr.f32.mxu0 0.0
    %1229 = vmatmul.mubr.f32.gmra.mxu0 %v230
    %v1230 = vpop.f32.mrf.mxu0
    %v1231 = vadd.f32 %v1149, %v1230
    %v1232 = vpop.f32.mrf.mxu0
    %1233 = vdwg.mxu0
    %v1234 = vmax.f32 %v1221, 0.0
    %v1235 = vmax.f32 %v1226, 0.0
    %v1236 = vmax.f32 %v1231, 0.0
    %v1237 = vld [vmem:[%s2] sm:$0xff]
    %v1238 = vld [vmem:[#allocation10] sm:$0xff]
    %v1239 = vld [vmem:[#allocation10 + $0x8] sm:$0xff]
    %v1240 = vld [vmem:[#allocation10 + $0x10] sm:$0xff]
    %v1241 = vld [vmem:[#allocation10 + $0x18] sm:$0xff]
    %v1242 = vld [vmem:[#allocation12] sm:$0x1]
    %v1244 = vlaneseq
    %v1245 = vshrl.u32 %v1244, 7
    %v1246 = vsub.s32 0, %v1245
    %v1247 = vrot.slane %v1242, %v1246
    %v1250 = vsel %vm225, %v1237, 0
    %1252 = vmatprep.subr.mxu0 0.0
    %1253 = vmatpush1.msra.mxu0 0.0
    %1254 = vmatprep.subr.mxu0 0.0
    %1255 = vmatpush1.msra.mxu0 0.0
    %1256 = vmatprep.subr.mxu0 0.0
    %1257 = vmatpush1.msra.mxu0 0.0
    %1258 = vmatprep.subr.mxu0 0.0
    %1259 = vmatpush1.msra.mxu0 0.0
    %1260 = vmatprep.subr.mxu0 0.0
    %1261 = vmatpush1.msra.mxu0 0.0
    %1262 = vmatprep.subr.mxu0 0.0
    %1263 = vmatpush1.msra.mxu0 0.0
    %1264 = vmatprep.subr.mxu0 0.0
    %1265 = vmatpush1.msra.mxu0 0.0
    %1266 = vmatprep.subr.mxu0 0.0
    %1267 = vmatpush1.msra.mxu0 0.0
    %1268 = vmatprep.subr.mxu0 0.0
    %1269 = vmatpush1.msra.mxu0 0.0
    %1270 = vmatprep.subr.mxu0 0.0
    %1271 = vmatpush1.msra.mxu0 0.0
    %1272 = vmatprep.subr.mxu0 0.0
    %1273 = vmatpush1.msra.mxu0 0.0
    %1274 = vmatprep.subr.mxu0 0.0
    %1275 = vmatpush1.msra.mxu0 0.0
    %1276 = vmatprep.subr.mxu0 0.0
    %1277 = vmatpush1.msra.mxu0 %v1241
    %1278 = vmatprep.subr.mxu0 0.0
    %1279 = vmatpush1.msra.mxu0 %v1240
    %1280 = vmatprep.subr.mxu0 0.0
    %1281 = vmatpush1.msra.mxu0 %v1239
    %1282 = vmatprep.subr.mxu0 0.0
    %1283 = vmatpush1.msra.mxu0 %v1238
    %1284 = vmatprep.subr.mxu0 0.0
    %1285 = vmatpush2.msra.mxu0 0.0
    %1286 = vmatprep.subr.mxu0 0.0
    %1287 = vmatpush2.msra.mxu0 0.0
    %1288 = vmatprep.subr.mxu0 0.0
    %1289 = vmatpush2.msra.mxu0 0.0
    %1290 = vmatprep.subr.mxu0 0.0
    %1291 = vmatpush2.msra.mxu0 0.0
    %1292 = vmatprep.subr.mxu0 0.0
    %1293 = vmatpush2.msra.mxu0 0.0
    %1294 = vmatprep.subr.mxu0 0.0
    %1295 = vmatpush2.msra.mxu0 0.0
    %1296 = vmatprep.subr.mxu0 0.0
    %1297 = vmatpush2.msra.mxu0 0.0
    %1298 = vmatprep.subr.mxu0 0.0
    %1299 = vmatpush2.msra.mxu0 0.0
    %1300 = vmatprep.subr.mxu0 0.0
    %1301 = vmatpush2.msra.mxu0 0.0
    %1302 = vmatprep.subr.mxu0 0.0
    %1303 = vmatpush2.msra.mxu0 0.0
    %1304 = vmatprep.subr.mxu0 0.0
    %1305 = vmatpush2.msra.mxu0 0.0
    %1306 = vmatprep.subr.mxu0 0.0
    %1307 = vmatpush2.msra.mxu0 0.0
    %1308 = vmatprep.subr.mxu0 0.0
    %1309 = vmatpush2.msra.mxu0 0.0
    %1310 = vmatprep.subr.mxu0 0.0
    %1311 = vmatpush2.msra.mxu0 0.0
    %1312 = vmatprep.subr.mxu0 0.0
    %1313 = vmatpush2.msra.mxu0 0.0
    %1314 = vmatprep.subr.mxu0 0.0
    %1315 = vmatpush2.msra.mxu0 0.0
    %1316 = vmatprep.mubr.f32.mxu0 0.0
    %1317 = vmatmul.mubr.f32.gmra.mxu0 %v1250
    %v1318 = vpop.f32.mrf.mxu0
    %v1319 = vadd.f32 %v1247, %v1318
    %v1320 = vpop.f32.mrf.mxu0
    %1321 = vdwg.mxu0
    %v1322 = vmax.f32 %v1319, 0.0
    %v1323 = vld [vmem:[%s17] sm:$0xff]
    %v1324 = vld [vmem:[%s17 + $0x8] sm:$0xff]
    %v1325 = vld [vmem:[%s17 + $0x10] sm:$0xff]
    %v1326 = vld [vmem:[%s17 + $0x18] sm:$0xff]
    %v1327 = vld [vmem:[%s17 + $0x20] sm:$0xff]
    %v1328 = vld [vmem:[%s17 + $0x28] sm:$0xff]
    %v1329 = vld [vmem:[%s17 + $0x30] sm:$0xff]
    %v1330 = vld [vmem:[%s17 + $0x38] sm:$0xff]
    %v1331 = vld [vmem:[%s17 + $0x40] sm:$0xff]
    %v1332 = vld [vmem:[%s17 + $0x48] sm:$0xff]
    %v1333 = vld [vmem:[%s17 + $0x50] sm:$0xff]
    %v1334 = vld [vmem:[%s17 + $0x58] sm:$0xff]
    %v1335 = vld [vmem:[%s17 + $0x60] sm:$0xff]
    %v1336 = vld [vmem:[%s17 + $0x68] sm:$0xff]
    %v1337 = vld [vmem:[%s17 + $0x70] sm:$0xff]
    %v1338 = vld [vmem:[%s17 + $0x78] sm:$0xff]
    %1339 = vmatprep.subr.mxu0 0.0
    %1340 = vmatpush1.msra.mxu0 %v1338
    %1341 = vmatprep.subr.mxu0 0.0
    %1342 = vmatpush1.msra.mxu0 %v1337
    %1343 = vmatprep.subr.mxu0 0.0
    %1344 = vmatpush1.msra.mxu0 %v1336
    %1345 = vmatprep.subr.mxu0 0.0
    %1346 = vmatpush1.msra.mxu0 %v1335
    %1347 = vmatprep.subr.mxu0 0.0
    %1348 = vmatpush1.msra.mxu0 %v1334
    %1349 = vmatprep.subr.mxu0 0.0
    %1350 = vmatpush1.msra.mxu0 %v1333
    %1351 = vmatprep.subr.mxu0 0.0
    %1352 = vmatpush1.msra.mxu0 %v1332
    %1353 = vmatprep.subr.mxu0 0.0
    %1354 = vmatpush1.msra.mxu0 %v1331
    %1355 = vmatprep.subr.mxu0 0.0
    %1356 = vmatpush1.msra.mxu0 %v1330
    %1357 = vmatprep.subr.mxu0 0.0
    %1358 = vmatpush1.msra.mxu0 %v1329
    %1359 = vmatprep.subr.mxu0 0.0
    %1360 = vmatpush1.msra.mxu0 %v1328
    %1361 = vmatprep.subr.mxu0 0.0
    %1362 = vmatpush1.msra.mxu0 %v1327
    %1363 = vmatprep.subr.mxu0 0.0
    %1364 = vmatpush1.msra.mxu0 %v1326
    %1365 = vmatprep.subr.mxu0 0.0
    %1366 = vmatpush1.msra.mxu0 %v1325
    %1367 = vmatprep.subr.mxu0 0.0
    %1368 = vmatpush1.msra.mxu0 %v1324
    %1369 = vmatprep.subr.mxu0 0.0
    %1370 = vmatpush1.msra.mxu0 %v1323
    %1371 = vmatprep.subr.mxu0 0.0
    %1372 = vmatpush2.msra.mxu0 0.0
    %1373 = vmatprep.subr.mxu0 0.0
    %1374 = vmatpush2.msra.mxu0 0.0
    %1375 = vmatprep.subr.mxu0 0.0
    %1376 = vmatpush2.msra.mxu0 0.0
    %1377 = vmatprep.subr.mxu0 0.0
    %1378 = vmatpush2.msra.mxu0 0.0
    %1379 = vmatprep.subr.mxu0 0.0
    %1380 = vmatpush2.msra.mxu0 0.0
    %1381 = vmatprep.subr.mxu0 0.0
    %1382 = vmatpush2.msra.mxu0 0.0
    %1383 = vmatprep.subr.mxu0 0.0
    %1384 = vmatpush2.msra.mxu0 0.0
    %1385 = vmatprep.subr.mxu0 0.0
    %1386 = vmatpush2.msra.mxu0 0.0
    %1387 = vmatprep.subr.mxu0 0.0
    %1388 = vmatpush2.msra.mxu0 0.0
    %1389 = vmatprep.subr.mxu0 0.0
    %1390 = vmatpush2.msra.mxu0 0.0
    %1391 = vmatprep.subr.mxu0 0.0
    %1392 = vmatpush2.msra.mxu0 0.0
    %1393 = vmatprep.subr.mxu0 0.0
    %1394 = vmatpush2.msra.mxu0 0.0
    %1395 = vmatprep.subr.mxu0 0.0
    %1396 = vmatpush2.msra.mxu0 0.0
    %1397 = vmatprep.subr.mxu0 0.0
    %1398 = vmatpush2.msra.mxu0 0.0
    %1399 = vmatprep.subr.mxu0 0.0
    %1400 = vmatpush2.msra.mxu0 0.0
    %1401 = vmatprep.subr.mxu0 0.0
    %1402 = vmatpush2.msra.mxu0 0.0
    %1403 = vmatprep.mubr.f32.mxu0 0.0
    %1404 = vmatmul.mubr.f32.gmra.mxu0 %v1234
    %v1405 = vpop.f32.mrf.mxu0
    %v1406 = vadd.f32 0.0, %v1405
    %v1407 = vpop.f32.mrf.mxu0
    %1408 = vdwg.mxu0
    %vm1409 = vcmask 130048
    %v1410 = vsel %vm1409, %v1406, -inf
    %1411 = vmax.xlane.f32.xlu0 %v1410
    %v1412 = vpop.xlane.xlu0 %1411
    %v1413 = vsub.f32 %v1406, %v1412
    %v1414 = vmul.f32 %v1413, 1.442695
    %v1415 = vpow.pop %v1414
    %v1416 = vsel %vm1409, %v1415, 0.0
    %1417 = vadd.xlane.f32.xlu0 %v1416
    %v1418 = vpop.xlane.xlu0 %1417
    %v1419 = vrcp.pop %v1418
    %v1420 = vmul.f32 %v1415, %v1419
    %v1421 = vld [vmem:[%s18] sm:$0xff]
    %v1422 = vld [vmem:[%s18 + $0x8] sm:$0xff]
    %v1423 = vld [vmem:[%s18 + $0x10] sm:$0xff]
    %v1424 = vld [vmem:[%s18 + $0x18] sm:$0xff]
    %v1425 = vld [vmem:[%s18 + $0x20] sm:$0xff]
    %v1426 = vld [vmem:[%s18 + $0x28] sm:$0xff]
    %v1427 = vld [vmem:[%s18 + $0x30] sm:$0xff]
    %v1428 = vld [vmem:[%s18 + $0x38] sm:$0xff]
    %vm1429 = vcmask 523264
    %v1431 = vsel %vm1429, %v1322, 0
    %1433 = vmatprep.subr.mxu0 0.0
    %1434 = vmatpush1.msra.mxu0 0.0
    %1435 = vmatprep.subr.mxu0 0.0
    %1436 = vmatpush1.msra.mxu0 0.0
    %1437 = vmatprep.subr.mxu0 0.0
    %1438 = vmatpush1.msra.mxu0 0.0
    %1439 = vmatprep.subr.mxu0 0.0
    %1440 = vmatpush1.msra.mxu0 0.0
    %1441 = vmatprep.subr.mxu0 0.0
    %1442 = vmatpush1.msra.mxu0 0.0
    %1443 = vmatprep.subr.mxu0 0.0
    %1444 = vmatpush1.msra.mxu0 0.0
    %1445 = vmatprep.subr.mxu0 0.0
    %1446 = vmatpush1.msra.mxu0 0.0
    %1447 = vmatprep.subr.mxu0 0.0
    %1448 = vmatpush1.msra.mxu0 0.0
    %1449 = vmatprep.subr.mxu0 0.0
    %1450 = vmatpush1.msra.mxu0 %v1428
    %1451 = vmatprep.subr.mxu0 0.0
    %1452 = vmatpush1.msra.mxu0 %v1427
    %1453 = vmatprep.subr.mxu0 0.0
    %1454 = vmatpush1.msra.mxu0 %v1426
    %1455 = vmatprep.subr.mxu0 0.0
    %1456 = vmatpush1.msra.mxu0 %v1425
    %1457 = vmatprep.subr.mxu0 0.0
    %1458 = vmatpush1.msra.mxu0 %v1424
    %1459 = vmatprep.subr.mxu0 0.0
    %1460 = vmatpush1.msra.mxu0 %v1423
    %1461 = vmatprep.subr.mxu0 0.0
    %1462 = vmatpush1.msra.mxu0 %v1422
    %1463 = vmatprep.subr.mxu0 0.0
    %1464 = vmatpush1.msra.mxu0 %v1421
    %1465 = vmatprep.subr.mxu0 0.0
    %1466 = vmatpush2.msra.mxu0 0.0
    %1467 = vmatprep.subr.mxu0 0.0
    %1468 = vmatpush2.msra.mxu0 0.0
    %1469 = vmatprep.subr.mxu0 0.0
    %1470 = vmatpush2.msra.mxu0 0.0
    %1471 = vmatprep.subr.mxu0 0.0
    %1472 = vmatpush2.msra.mxu0 0.0
    %1473 = vmatprep.subr.mxu0 0.0
    %1474 = vmatpush2.msra.mxu0 0.0
    %1475 = vmatprep.subr.mxu0 0.0
    %1476 = vmatpush2.msra.mxu0 0.0
    %1477 = vmatprep.subr.mxu0 0.0
    %1478 = vmatpush2.msra.mxu0 0.0
    %1479 = vmatprep.subr.mxu0 0.0
    %1480 = vmatpush2.msra.mxu0 0.0
    %1481 = vmatprep.subr.mxu0 0.0
    %1482 = vmatpush2.msra.mxu0 0.0
    %1483 = vmatprep.subr.mxu0 0.0
    %1484 = vmatpush2.msra.mxu0 0.0
    %1485 = vmatprep.subr.mxu0 0.0
    %1486 = vmatpush2.msra.mxu0 0.0
    %1487 = vmatprep.subr.mxu0 0.0
    %1488 = vmatpush2.msra.mxu0 0.0
    %1489 = vmatprep.subr.mxu0 0.0
    %1490 = vmatpush2.msra.mxu0 0.0
    %1491 = vmatprep.subr.mxu0 0.0
    %1492 = vmatpush2.msra.mxu0 0.0
    %1493 = vmatprep.subr.mxu0 0.0
    %1494 = vmatpush2.msra.mxu0 0.0
    %1495 = vmatprep.subr.mxu0 0.0
    %1496 = vmatpush2.msra.mxu0 0.0
    %1497 = vmatprep.mubr.f32.mxu0 0.0
    %1498 = vmatmul.mubr.f32.gmra.mxu0 %v1431
    %v1499 = vpop.f32.mrf.mxu0
    %v1500 = vadd.f32 0.0, %v1499
    %v1501 = vpop.f32.mrf.mxu0
    %1502 = vdwg.mxu0
    %v1503 = vsel %vm1409, %v1500, -inf
    %1504 = vmax.xlane.f32.xlu0 %v1503
    %v1505 = vpop.xlane.xlu0 %1504
    %v1506 = vsub.f32 %v1500, %v1505
    %v1507 = vmul.f32 %v1506, 1.442695
    %v1508 = vpow.pop %v1507
    %v1509 = vsel %vm1409, %v1508, 0.0
    %1510 = vadd.xlane.f32.xlu0 %v1509
    %v1511 = vpop.xlane.xlu0 %1510
    %v1512 = vrcp.pop %v1511
    %v1513 = vmul.f32 %v1508, %v1512
    %v1514 = vld [vmem:[%s19] sm:$0xff]
    %v1515 = vld [vmem:[%s19 + $0x8] sm:$0xff]
    %v1516 = vld [vmem:[%s19 + $0x10] sm:$0xff]
    %v1517 = vld [vmem:[%s19 + $0x18] sm:$0xff]
    %v1518 = vld [vmem:[%s19 + $0x20] sm:$0xff]
    %v1519 = vld [vmem:[%s19 + $0x28] sm:$0xff]
    %v1520 = vld [vmem:[%s19 + $0x30] sm:$0xff]
    %v1521 = vld [vmem:[%s19 + $0x38] sm:$0xff]
    %v1522 = vld [vmem:[%s19 + $0x40] sm:$0xff]
    %v1523 = vld [vmem:[%s19 + $0x48] sm:$0xff]
    %v1524 = vld [vmem:[%s19 + $0x50] sm:$0xff]
    %v1525 = vld [vmem:[%s19 + $0x58] sm:$0xff]
    %v1526 = vld [vmem:[%s19 + $0x60] sm:$0xff]
    %v1527 = vld [vmem:[%s19 + $0x68] sm:$0xff]
    %v1528 = vld [vmem:[%s19 + $0x70] sm:$0xff]
    %v1529 = vld [vmem:[%s19 + $0x78] sm:$0xff]
    %1530 = vmatprep.subr.mxu0 0.0
    %1531 = vmatpush1.msra.mxu0 %v1529
    %1532 = vmatprep.subr.mxu0 0.0
    %1533 = vmatpush1.msra.mxu0 %v1528
    %1534 = vmatprep.subr.mxu0 0.0
    %1535 = vmatpush1.msra.mxu0 %v1527
    %1536 = vmatprep.subr.mxu0 0.0
    %1537 = vmatpush1.msra.mxu0 %v1526
    %1538 = vmatprep.subr.mxu0 0.0
    %1539 = vmatpush1.msra.mxu0 %v1525
    %1540 = vmatprep.subr.mxu0 0.0
    %1541 = vmatpush1.msra.mxu0 %v1524
    %1542 = vmatprep.subr.mxu0 0.0
    %1543 = vmatpush1.msra.mxu0 %v1523
    %1544 = vmatprep.subr.mxu0 0.0
    %1545 = vmatpush1.msra.mxu0 %v1522
    %1546 = vmatprep.subr.mxu0 0.0
    %1547 = vmatpush1.msra.mxu0 %v1521
    %1548 = vmatprep.subr.mxu0 0.0
    %1549 = vmatpush1.msra.mxu0 %v1520
    %1550 = vmatprep.subr.mxu0 0.0
    %1551 = vmatpush1.msra.mxu0 %v1519
    %1552 = vmatprep.subr.mxu0 0.0
    %1553 = vmatpush1.msra.mxu0 %v1518
    %1554 = vmatprep.subr.mxu0 0.0
    %1555 = vmatpush1.msra.mxu0 %v1517
    %1556 = vmatprep.subr.mxu0 0.0
    %1557 = vmatpush1.msra.mxu0 %v1516
    %1558 = vmatprep.subr.mxu0 0.0
    %1559 = vmatpush1.msra.mxu0 %v1515
    %1560 = vmatprep.subr.mxu0 0.0
    %1561 = vmatpush1.msra.mxu0 %v1514
    %1562 = vmatprep.subr.mxu0 0.0
    %1563 = vmatpush2.msra.mxu0 0.0
    %1564 = vmatprep.subr.mxu0 0.0
    %1565 = vmatpush2.msra.mxu0 0.0
    %1566 = vmatprep.subr.mxu0 0.0
    %1567 = vmatpush2.msra.mxu0 0.0
    %1568 = vmatprep.subr.mxu0 0.0
    %1569 = vmatpush2.msra.mxu0 0.0
    %1570 = vmatprep.subr.mxu0 0.0
    %1571 = vmatpush2.msra.mxu0 0.0
    %1572 = vmatprep.subr.mxu0 0.0
    %1573 = vmatpush2.msra.mxu0 0.0
    %1574 = vmatprep.subr.mxu0 0.0
    %1575 = vmatpush2.msra.mxu0 0.0
    %1576 = vmatprep.subr.mxu0 0.0
    %1577 = vmatpush2.msra.mxu0 0.0
    %1578 = vmatprep.subr.mxu0 0.0
    %1579 = vmatpush2.msra.mxu0 0.0
    %1580 = vmatprep.subr.mxu0 0.0
    %1581 = vmatpush2.msra.mxu0 0.0
    %1582 = vmatprep.subr.mxu0 0.0
    %1583 = vmatpush2.msra.mxu0 0.0
    %1584 = vmatprep.subr.mxu0 0.0
    %1585 = vmatpush2.msra.mxu0 0.0
    %1586 = vmatprep.subr.mxu0 0.0
    %1587 = vmatpush2.msra.mxu0 0.0
    %1588 = vmatprep.subr.mxu0 0.0
    %1589 = vmatpush2.msra.mxu0 0.0
    %1590 = vmatprep.subr.mxu0 0.0
    %1591 = vmatpush2.msra.mxu0 0.0
    %1592 = vmatprep.subr.mxu0 0.0
    %1593 = vmatpush2.msra.mxu0 0.0
    %1594 = vmatprep.mubr.f32.mxu0 0.0
    %1595 = vmatmul.mubr.f32.gmra.mxu0 %v1234
    %v1596 = vpop.f32.mrf.mxu0
    %v1597 = vadd.f32 0.0, %v1596
    %v1598 = vpop.f32.mrf.mxu0
    %1599 = vmatprep.mubr.f32.mxu0 0.0
    %1600 = vmatmul.mubr.f32.gmra.mxu0 %v1235
    %v1601 = vpop.f32.mrf.mxu0
    %v1602 = vadd.f32 0.0, %v1601
    %v1603 = vpop.f32.mrf.mxu0
    %1604 = vmatprep.mubr.f32.mxu0 0.0
    %1605 = vmatmul.mubr.f32.gmra.mxu0 %v1236
    %v1606 = vpop.f32.mrf.mxu0
    %v1607 = vadd.f32 0.0, %v1606
    %v1608 = vpop.f32.mrf.mxu0
    %1609 = vdwg.mxu0
    %vm1610 = vcmask 588800
    %v1611 = vsel %vm1610, %v1597, -inf
    %v1612 = vsel %vm1610, %v1602, -inf
    %v1613 = vsel %vm1610, %v1607, -inf
    %v1614 = vmax.f32 %v1611, %v1612
    %v1615 = vmax.f32 %v1614, %v1613
    %v1616 = vrot.slane %v1615, 4
    %v1617 = vmax.f32 %v1615, %v1616
    %v1618 = vrot.slane %v1617, 2
    %v1619 = vmax.f32 %v1617, %v1618
    %v1620 = vrot.slane %v1619, 1
    %v1621 = vmax.f32 %v1619, %v1620
    %v1622 = vsub.f32 %v1597, %v1621
    %v1623 = vsub.f32 %v1602, %v1621
    %v1624 = vsub.f32 %v1607, %v1621
    %v1625 = vmul.f32 %v1622, 1.442695
    %v1626 = vpow.pop %v1625
    %v1627 = vmul.f32 %v1623, 1.442695
    %v1628 = vpow.pop %v1627
    %v1629 = vmul.f32 %v1624, 1.442695
    %v1630 = vpow.pop %v1629
    %v1631 = vsel %vm1610, %v1626, 0.0
    %v1632 = vsel %vm1610, %v1628, 0.0
    %v1633 = vadd.f32 %v1631, %v1632
    %v1634 = vsel %vm1610, %v1630, 0.0
    %v1635 = vadd.f32 %v1633, %v1634
    %v1636 = vrot.slane %v1635, 4
    %v1637 = vadd.f32 %v1635, %v1636
    %v1638 = vrot.slane %v1637, 2
    %v1639 = vadd.f32 %v1637, %v1638
    %v1640 = vrot.slane %v1639, 1
    %v1641 = vadd.f32 %v1639, %v1640
    %v1642 = vrcp.pop %v1641
    %v1643 = vmul.f32 %v1626, %v1642
    %v1644 = vmul.f32 %v1628, %v1642
    %v1645 = vmul.f32 %v1630, %v1642
    %v1646 = vld [vmem:[%s20] sm:$0xff]
    %v1647 = vld [vmem:[%s20 + $0x8] sm:$0xff]
    %v1648 = vld [vmem:[%s20 + $0x10] sm:$0xff]
    %v1649 = vld [vmem:[%s20 + $0x18] sm:$0xff]
    %v1650 = vld [vmem:[%s20 + $0x20] sm:$0xff]
    %v1651 = vld [vmem:[%s20 + $0x28] sm:$0xff]
    %v1652 = vld [vmem:[%s20 + $0x30] sm:$0xff]
    %v1653 = vld [vmem:[%s20 + $0x38] sm:$0xff]
    %1654 = vmatprep.subr.mxu0 0.0
    %1655 = vmatpush1.msra.mxu0 0.0
    %1656 = vmatprep.subr.mxu0 0.0
    %1657 = vmatpush1.msra.mxu0 0.0
    %1658 = vmatprep.subr.mxu0 0.0
    %1659 = vmatpush1.msra.mxu0 0.0
    %1660 = vmatprep.subr.mxu0 0.0
    %1661 = vmatpush1.msra.mxu0 0.0
    %1662 = vmatprep.subr.mxu0 0.0
    %1663 = vmatpush1.msra.mxu0 0.0
    %1664 = vmatprep.subr.mxu0 0.0
    %1665 = vmatpush1.msra.mxu0 0.0
    %1666 = vmatprep.subr.mxu0 0.0
    %1667 = vmatpush1.msra.mxu0 0.0
    %1668 = vmatprep.subr.mxu0 0.0
    %1669 = vmatpush1.msra.mxu0 0.0
    %1670 = vmatprep.subr.mxu0 0.0
    %1671 = vmatpush1.msra.mxu0 %v1653
    %1672 = vmatprep.subr.mxu0 0.0
    %1673 = vmatpush1.msra.mxu0 %v1652
    %1674 = vmatprep.subr.mxu0 0.0
    %1675 = vmatpush1.msra.mxu0 %v1651
    %1676 = vmatprep.subr.mxu0 0.0
    %1677 = vmatpush1.msra.mxu0 %v1650
    %1678 = vmatprep.subr.mxu0 0.0
    %1679 = vmatpush1.msra.mxu0 %v1649
    %1680 = vmatprep.subr.mxu0 0.0
    %1681 = vmatpush1.msra.mxu0 %v1648
    %1682 = vmatprep.subr.mxu0 0.0
    %1683 = vmatpush1.msra.mxu0 %v1647
    %1684 = vmatprep.subr.mxu0 0.0
    %1685 = vmatpush1.msra.mxu0 %v1646
    %1686 = vmatprep.subr.mxu0 0.0
    %1687 = vmatpush2.msra.mxu0 0.0
    %1688 = vmatprep.subr.mxu0 0.0
    %1689 = vmatpush2.msra.mxu0 0.0
    %1690 = vmatprep.subr.mxu0 0.0
    %1691 = vmatpush2.msra.mxu0 0.0
    %1692 = vmatprep.subr.mxu0 0.0
    %1693 = vmatpush2.msra.mxu0 0.0
    %1694 = vmatprep.subr.mxu0 0.0
    %1695 = vmatpush2.msra.mxu0 0.0
    %1696 = vmatprep.subr.mxu0 0.0
    %1697 = vmatpush2.msra.mxu0 0.0
    %1698 = vmatprep.subr.mxu0 0.0
    %1699 = vmatpush2.msra.mxu0 0.0
    %1700 = vmatprep.subr.mxu0 0.0
    %1701 = vmatpush2.msra.mxu0 0.0
    %1702 = vmatprep.subr.mxu0 0.0
    %1703 = vmatpush2.msra.mxu0 0.0
    %1704 = vmatprep.subr.mxu0 0.0
    %1705 = vmatpush2.msra.mxu0 0.0
    %1706 = vmatprep.subr.mxu0 0.0
    %1707 = vmatpush2.msra.mxu0 0.0
    %1708 = vmatprep.subr.mxu0 0.0
    %1709 = vmatpush2.msra.mxu0 0.0
    %1710 = vmatprep.subr.mxu0 0.0
    %1711 = vmatpush2.msra.mxu0 0.0
    %1712 = vmatprep.subr.mxu0 0.0
    %1713 = vmatpush2.msra.mxu0 0.0
    %1714 = vmatprep.subr.mxu0 0.0
    %1715 = vmatpush2.msra.mxu0 0.0
    %1716 = vmatprep.subr.mxu0 0.0
    %1717 = vmatpush2.msra.mxu0 0.0
    %1718 = vmatprep.mubr.f32.mxu0 0.0
    %1719 = vmatmul.mubr.f32.gmra.mxu0 %v1431
    %v1720 = vpop.f32.mrf.mxu0
    %v1721 = vadd.f32 0.0, %v1720
    %v1722 = vpop.f32.mrf.mxu0
    %1723 = vdwg.mxu0
    %v1724 = vsel %vm1409, %v1721, -inf
    %v1725 = vrot.slane %v1724, 4
    %v1726 = vmax.f32 %v1724, %v1725
    %v1727 = vrot.slane %v1726, 2
    %v1728 = vmax.f32 %v1726, %v1727
    %v1729 = vrot.slane %v1728, 1
    %v1730 = vmax.f32 %v1728, %v1729
    %v1731 = vsub.f32 %v1721, %v1730
    %v1732 = vmul.f32 %v1731, 1.442695
    %v1733 = vpow.pop %v1732
    %v1734 = vsel %vm1409, %v1733, 0.0
    %v1735 = vrot.slane %v1734, 4
    %v1736 = vadd.f32 %v1734, %v1735
    %v1737 = vrot.slane %v1736, 2
    %v1738 = vadd.f32 %v1736, %v1737
    %v1739 = vrot.slane %v1738, 1
    %v1740 = vadd.f32 %v1738, %v1739
    %v1741 = vrcp.pop %v1740
    %v1742 = vmul.f32 %v1733, %v1741
    %v1743 = vld [vmem:[#allocation13] sm:$0xff]
    %s1744 = scalar_lea.vmem %s7, 160
    %v1745 = vld [vmem:[%s1744] sm:$0xff]
    %v1746 = vld [vmem:[%s1744 + $0x8] sm:$0xff]
    %v1747 = vld [vmem:[%s1744 + $0x10] sm:$0xff]
    %v1748 = vld [vmem:[%s1744 + $0x18] sm:$0xff]
    %s1749 = scalar_lea.vmem [#allocation4], 5
    %v1750 = vld [vmem:[%s1749] sm:$0x1]
    %s1751 = scalar_lea.vmem %s7, 192
    %v1752 = vld [vmem:[%s1751] sm:$0xff]
    %v1753 = vld [vmem:[%s1751 + $0x8] sm:$0xff]
    %v1754 = vld [vmem:[%s1751 + $0x10] sm:$0xff]
    %v1755 = vld [vmem:[%s1751 + $0x18] sm:$0xff]
    %s1756 = scalar_lea.vmem [#allocation4], 6
    %v1757 = vld [vmem:[%s1756] sm:$0x1]
    %v1759 = vlaneseq
    %v1760 = vshrl.u32 %v1759, 7
    %v1761 = vsub.s32 0, %v1760
    %v1762 = vrot.slane %v1750, %v1761
    %v1765 = vsel %vm225, %v1743, 0
    %1767 = vmatprep.subr.mxu0 0.0
    %1768 = vmatpush1.msra.mxu0 0.0
    %1769 = vmatprep.subr.mxu0 0.0
    %1770 = vmatpush1.msra.mxu0 0.0
    %1771 = vmatprep.subr.mxu0 0.0
    %1772 = vmatpush1.msra.mxu0 0.0
    %1773 = vmatprep.subr.mxu0 0.0
    %1774 = vmatpush1.msra.mxu0 0.0
    %1775 = vmatprep.subr.mxu0 0.0
    %1776 = vmatpush1.msra.mxu0 0.0
    %1777 = vmatprep.subr.mxu0 0.0
    %1778 = vmatpush1.msra.mxu0 0.0
    %1779 = vmatprep.subr.mxu0 0.0
    %1780 = vmatpush1.msra.mxu0 0.0
    %1781 = vmatprep.subr.mxu0 0.0
    %1782 = vmatpush1.msra.mxu0 0.0
    %1783 = vmatprep.subr.mxu0 0.0
    %1784 = vmatpush1.msra.mxu0 0.0
    %1785 = vmatprep.subr.mxu0 0.0
    %1786 = vmatpush1.msra.mxu0 0.0
    %1787 = vmatprep.subr.mxu0 0.0
    %1788 = vmatpush1.msra.mxu0 0.0
    %1789 = vmatprep.subr.mxu0 0.0
    %1790 = vmatpush1.msra.mxu0 0.0
    %1791 = vmatprep.subr.mxu0 0.0
    %1792 = vmatpush1.msra.mxu0 %v1748
    %1793 = vmatprep.subr.mxu0 0.0
    %1794 = vmatpush1.msra.mxu0 %v1747
    %1795 = vmatprep.subr.mxu0 0.0
    %1796 = vmatpush1.msra.mxu0 %v1746
    %1797 = vmatprep.subr.mxu0 0.0
    %1798 = vmatpush1.msra.mxu0 %v1745
    %1799 = vmatprep.subr.mxu0 0.0
    %1800 = vmatpush2.msra.mxu0 0.0
    %1801 = vmatprep.subr.mxu0 0.0
    %1802 = vmatpush2.msra.mxu0 0.0
    %1803 = vmatprep.subr.mxu0 0.0
    %1804 = vmatpush2.msra.mxu0 0.0
    %1805 = vmatprep.subr.mxu0 0.0
    %1806 = vmatpush2.msra.mxu0 0.0
    %1807 = vmatprep.subr.mxu0 0.0
    %1808 = vmatpush2.msra.mxu0 0.0
    %1809 = vmatprep.subr.mxu0 0.0
    %1810 = vmatpush2.msra.mxu0 0.0
    %1811 = vmatprep.subr.mxu0 0.0
    %1812 = vmatpush2.msra.mxu0 0.0
    %1813 = vmatprep.subr.mxu0 0.0
    %1814 = vmatpush2.msra.mxu0 0.0
    %1815 = vmatprep.subr.mxu0 0.0
    %1816 = vmatpush2.msra.mxu0 0.0
    %1817 = vmatprep.subr.mxu0 0.0
    %1818 = vmatpush2.msra.mxu0 0.0
    %1819 = vmatprep.subr.mxu0 0.0
    %1820 = vmatpush2.msra.mxu0 0.0
    %1821 = vmatprep.subr.mxu0 0.0
    %1822 = vmatpush2.msra.mxu0 0.0
    %1823 = vmatprep.subr.mxu0 0.0
    %1824 = vmatpush2.msra.mxu0 0.0
    %1825 = vmatprep.subr.mxu0 0.0
    %1826 = vmatpush2.msra.mxu0 0.0
    %1827 = vmatprep.subr.mxu0 0.0
    %1828 = vmatpush2.msra.mxu0 0.0
    %1829 = vmatprep.subr.mxu0 0.0
    %1830 = vmatpush2.msra.mxu0 0.0
    %1831 = vmatprep.mubr.f32.mxu0 0.0
    %1832 = vmatmul.mubr.f32.gmra.mxu0 %v1765
    %v1833 = vpop.f32.mrf.mxu0
    %v1834 = vadd.f32 %v1762, %v1833
    %v1835 = vpop.f32.mrf.mxu0
    %1836 = vdwg.mxu0
    %v1837 = vmax.f32 %v1834, 0.0
    %v1839 = vlaneseq
    %v1840 = vshrl.u32 %v1839, 7
    %v1841 = vsub.s32 0, %v1840
    %v1842 = vrot.slane %v1757, %v1841
    %v1845 = vsel %vm225, %v1837, 0
    %1847 = vmatprep.subr.mxu0 0.0
    %1848 = vmatpush1.msra.mxu0 0.0
    %1849 = vmatprep.subr.mxu0 0.0
    %1850 = vmatpush1.msra.mxu0 0.0
    %1851 = vmatprep.subr.mxu0 0.0
    %1852 = vmatpush1.msra.mxu0 0.0
    %1853 = vmatprep.subr.mxu0 0.0
    %1854 = vmatpush1.msra.mxu0 0.0
    %1855 = vmatprep.subr.mxu0 0.0
    %1856 = vmatpush1.msra.mxu0 0.0
    %1857 = vmatprep.subr.mxu0 0.0
    %1858 = vmatpush1.msra.mxu0 0.0
    %1859 = vmatprep.subr.mxu0 0.0
    %1860 = vmatpush1.msra.mxu0 0.0
    %1861 = vmatprep.subr.mxu0 0.0
    %1862 = vmatpush1.msra.mxu0 0.0
    %1863 = vmatprep.subr.mxu0 0.0
    %1864 = vmatpush1.msra.mxu0 0.0
    %1865 = vmatprep.subr.mxu0 0.0
    %1866 = vmatpush1.msra.mxu0 0.0
    %1867 = vmatprep.subr.mxu0 0.0
    %1868 = vmatpush1.msra.mxu0 0.0
    %1869 = vmatprep.subr.mxu0 0.0
    %1870 = vmatpush1.msra.mxu0 0.0
    %1871 = vmatprep.subr.mxu0 0.0
    %1872 = vmatpush1.msra.mxu0 %v1755
    %1873 = vmatprep.subr.mxu0 0.0
    %1874 = vmatpush1.msra.mxu0 %v1754
    %1875 = vmatprep.subr.mxu0 0.0
    %1876 = vmatpush1.msra.mxu0 %v1753
    %1877 = vmatprep.subr.mxu0 0.0
    %1878 = vmatpush1.msra.mxu0 %v1752
    %1879 = vmatprep.subr.mxu0 0.0
    %1880 = vmatpush2.msra.mxu0 0.0
    %1881 = vmatprep.subr.mxu0 0.0
    %1882 = vmatpush2.msra.mxu0 0.0
    %1883 = vmatprep.subr.mxu0 0.0
    %1884 = vmatpush2.msra.mxu0 0.0
    %1885 = vmatprep.subr.mxu0 0.0
    %1886 = vmatpush2.msra.mxu0 0.0
    %1887 = vmatprep.subr.mxu0 0.0
    %1888 = vmatpush2.msra.mxu0 0.0
    %1889 = vmatprep.subr.mxu0 0.0
    %1890 = vmatpush2.msra.mxu0 0.0
    %1891 = vmatprep.subr.mxu0 0.0
    %1892 = vmatpush2.msra.mxu0 0.0
    %1893 = vmatprep.subr.mxu0 0.0
    %1894 = vmatpush2.msra.mxu0 0.0
    %1895 = vmatprep.subr.mxu0 0.0
    %1896 = vmatpush2.msra.mxu0 0.0
    %1897 = vmatprep.subr.mxu0 0.0
    %1898 = vmatpush2.msra.mxu0 0.0
    %1899 = vmatprep.subr.mxu0 0.0
    %1900 = vmatpush2.msra.mxu0 0.0
    %1901 = vmatprep.subr.mxu0 0.0
    %1902 = vmatpush2.msra.mxu0 0.0
    %1903 = vmatprep.subr.mxu0 0.0
    %1904 = vmatpush2.msra.mxu0 0.0
    %1905 = vmatprep.subr.mxu0 0.0
    %1906 = vmatpush2.msra.mxu0 0.0
    %1907 = vmatprep.subr.mxu0 0.0
    %1908 = vmatpush2.msra.mxu0 0.0
    %1909 = vmatprep.subr.mxu0 0.0
    %1910 = vmatpush2.msra.mxu0 0.0
    %1911 = vmatprep.mubr.f32.mxu0 0.0
    %1912 = vmatmul.mubr.f32.gmra.mxu0 %v1845
    %v1913 = vpop.f32.mrf.mxu0
    %v1914 = vadd.f32 %v1842, %v1913
    %v1915 = vpop.f32.mrf.mxu0
    %1916 = vdwg.mxu0
    %v1917 = vmax.f32 %v1914, 0.0
    %v1918 = vadd.f32 %v1917, %v1743
    %v1919 = vld [vmem:[%s11] sm:$0xff]
    %v1920 = vld [vmem:[%s11 + $0x8] sm:$0xff]
    %v1921 = vld [vmem:[%s11 + $0x10] sm:$0xff]
    %v1922 = vld [vmem:[%s11 + $0x18] sm:$0xff]
    %v1923 = vld [vmem:[#allocation7] sm:$0x1]
    %v1925 = vlaneseq
    %v1926 = vshrl.u32 %v1925, 7
    %v1927 = vsub.s32 0, %v1926
    %v1928 = vrot.slane %v1923, %v1927
    %v1931 = vsel %vm225, %v1918, 0
    %1933 = vmatprep.subr.mxu0 0.0
    %1934 = vmatpush1.msra.mxu0 0.0
    %1935 = vmatprep.subr.mxu0 0.0
    %1936 = vmatpush1.msra.mxu0 0.0
    %1937 = vmatprep.subr.mxu0 0.0
    %1938 = vmatpush1.msra.mxu0 0.0
    %1939 = vmatprep.subr.mxu0 0.0
    %1940 = vmatpush1.msra.mxu0 0.0
    %1941 = vmatprep.subr.mxu0 0.0
    %1942 = vmatpush1.msra.mxu0 0.0
    %1943 = vmatprep.subr.mxu0 0.0
    %1944 = vmatpush1.msra.mxu0 0.0
    %1945 = vmatprep.subr.mxu0 0.0
    %1946 = vmatpush1.msra.mxu0 0.0
    %1947 = vmatprep.subr.mxu0 0.0
    %1948 = vmatpush1.msra.mxu0 0.0
    %1949 = vmatprep.subr.mxu0 0.0
    %1950 = vmatpush1.msra.mxu0 0.0
    %1951 = vmatprep.subr.mxu0 0.0
    %1952 = vmatpush1.msra.mxu0 0.0
    %1953 = vmatprep.subr.mxu0 0.0
    %1954 = vmatpush1.msra.mxu0 0.0
    %1955 = vmatprep.subr.mxu0 0.0
    %1956 = vmatpush1.msra.mxu0 0.0
    %1957 = vmatprep.subr.mxu0 0.0
    %1958 = vmatpush1.msra.mxu0 %v1922
    %1959 = vmatprep.subr.mxu0 0.0
    %1960 = vmatpush1.msra.mxu0 %v1921
    %1961 = vmatprep.subr.mxu0 0.0
    %1962 = vmatpush1.msra.mxu0 %v1920
    %1963 = vmatprep.subr.mxu0 0.0
    %1964 = vmatpush1.msra.mxu0 %v1919
    %1965 = vmatprep.subr.mxu0 0.0
    %1966 = vmatpush2.msra.mxu0 0.0
    %1967 = vmatprep.subr.mxu0 0.0
    %1968 = vmatpush2.msra.mxu0 0.0
    %1969 = vmatprep.subr.mxu0 0.0
    %1970 = vmatpush2.msra.mxu0 0.0
    %1971 = vmatprep.subr.mxu0 0.0
    %1972 = vmatpush2.msra.mxu0 0.0
    %1973 = vmatprep.subr.mxu0 0.0
    %1974 = vmatpush2.msra.mxu0 0.0
    %1975 = vmatprep.subr.mxu0 0.0
    %1976 = vmatpush2.msra.mxu0 0.0
    %1977 = vmatprep.subr.mxu0 0.0
    %1978 = vmatpush2.msra.mxu0 0.0
    %1979 = vmatprep.subr.mxu0 0.0
    %1980 = vmatpush2.msra.mxu0 0.0
    %1981 = vmatprep.subr.mxu0 0.0
    %1982 = vmatpush2.msra.mxu0 0.0
    %1983 = vmatprep.subr.mxu0 0.0
    %1984 = vmatpush2.msra.mxu0 0.0
    %1985 = vmatprep.subr.mxu0 0.0
    %1986 = vmatpush2.msra.mxu0 0.0
    %1987 = vmatprep.subr.mxu0 0.0
    %1988 = vmatpush2.msra.mxu0 0.0
    %1989 = vmatprep.subr.mxu0 0.0
    %1990 = vmatpush2.msra.mxu0 0.0
    %1991 = vmatprep.subr.mxu0 0.0
    %1992 = vmatpush2.msra.mxu0 0.0
    %1993 = vmatprep.subr.mxu0 0.0
    %1994 = vmatpush2.msra.mxu0 0.0
    %1995 = vmatprep.subr.mxu0 0.0
    %1996 = vmatpush2.msra.mxu0 0.0
    %1997 = vmatprep.mubr.f32.mxu0 0.0
    %1998 = vmatmul.mubr.f32.gmra.mxu0 %v1931
    %v1999 = vpop.f32.mrf.mxu0
    %v2000 = vadd.f32 %v1928, %v1999
    %v2001 = vpop.f32.mrf.mxu0
    %2002 = vdwg.mxu0
    %vm2003 = vcmask 31744
    %v2004 = vsel %vm2003, %v2000, -inf
    %2005 = vmax.xlane.f32.xlu0 %v2004
    %v2006 = vpop.xlane.xlu0 %2005
    %v2007 = vsub.f32 %v2000, %v2006
    %v2008 = vmul.f32 %v2007, 1.442695
    %v2009 = vpow.pop %v2008
    %v2010 = vsel %vm2003, %v2009, 0.0
    %2011 = vadd.xlane.f32.xlu0 %v2010
    %v2012 = vpop.xlane.xlu0 %2011
    %v2013 = vrcp.pop %v2012
    %v2014 = vmul.f32 %v2009, %v2013
    %v2015 = vld [vmem:[#allocation15] sm:$0xf]
    %v2017 = vsel %vm2003, %v2014, 0
    %v2020 = vsel %vm1061, %v2015, 0
    %2022 = vmatprep.subr.mxu0 0.0
    %2023 = vmatpush1.msra.mxu0 0.0
    %2024 = vmatprep.subr.mxu0 0.0
    %2025 = vmatpush1.msra.mxu0 0.0
    %2026 = vmatprep.subr.mxu0 0.0
    %2027 = vmatpush1.msra.mxu0 0.0
    %2028 = vmatprep.subr.mxu0 0.0
    %2029 = vmatpush1.msra.mxu0 0.0
    %2030 = vmatprep.subr.mxu0 0.0
    %2031 = vmatpush1.msra.mxu0 0.0
    %2032 = vmatprep.subr.mxu0 0.0
    %2033 = vmatpush1.msra.mxu0 0.0
    %2034 = vmatprep.subr.mxu0 0.0
    %2035 = vmatpush1.msra.mxu0 0.0
    %2036 = vmatprep.subr.mxu0 0.0
    %2037 = vmatpush1.msra.mxu0 0.0
    %2038 = vmatprep.subr.mxu0 0.0
    %2039 = vmatpush1.msra.mxu0 0.0
    %2040 = vmatprep.subr.mxu0 0.0
    %2041 = vmatpush1.msra.mxu0 0.0
    %2042 = vmatprep.subr.mxu0 0.0
    %2043 = vmatpush1.msra.mxu0 0.0
    %2044 = vmatprep.subr.mxu0 0.0
    %2045 = vmatpush1.msra.mxu0 0.0
    %2046 = vmatprep.subr.mxu0 0.0
    %2047 = vmatpush1.msra.mxu0 0.0
    %2048 = vmatprep.subr.mxu0 0.0
    %2049 = vmatpush1.msra.mxu0 0.0
    %2050 = vmatprep.subr.mxu0 0.0
    %2051 = vmatpush1.msra.mxu0 0.0
    %2052 = vmatprep.subr.mxu0 0.0
    %2053 = vmatpush1.msra.mxu0 %v2020
    %2054 = vmatprep.subr.mxu0 0.0
    %2055 = vmatpush2.msra.mxu0 0.0
    %2056 = vmatprep.subr.mxu0 0.0
    %2057 = vmatpush2.msra.mxu0 0.0
    %2058 = vmatprep.subr.mxu0 0.0
    %2059 = vmatpush2.msra.mxu0 0.0
    %2060 = vmatprep.subr.mxu0 0.0
    %2061 = vmatpush2.msra.mxu0 0.0
    %2062 = vmatprep.subr.mxu0 0.0
    %2063 = vmatpush2.msra.mxu0 0.0
    %2064 = vmatprep.subr.mxu0 0.0
    %2065 = vmatpush2.msra.mxu0 0.0
    %2066 = vmatprep.subr.mxu0 0.0
    %2067 = vmatpush2.msra.mxu0 0.0
    %2068 = vmatprep.subr.mxu0 0.0
    %2069 = vmatpush2.msra.mxu0 0.0
    %2070 = vmatprep.subr.mxu0 0.0
    %2071 = vmatpush2.msra.mxu0 0.0
    %2072 = vmatprep.subr.mxu0 0.0
    %2073 = vmatpush2.msra.mxu0 0.0
    %2074 = vmatprep.subr.mxu0 0.0
    %2075 = vmatpush2.msra.mxu0 0.0
    %2076 = vmatprep.subr.mxu0 0.0
    %2077 = vmatpush2.msra.mxu0 0.0
    %2078 = vmatprep.subr.mxu0 0.0
    %2079 = vmatpush2.msra.mxu0 0.0
    %2080 = vmatprep.subr.mxu0 0.0
    %2081 = vmatpush2.msra.mxu0 0.0
    %2082 = vmatprep.subr.mxu0 0.0
    %2083 = vmatpush2.msra.mxu0 0.0
    %2084 = vmatprep.subr.mxu0 0.0
    %2085 = vmatpush2.msra.mxu0 0.0
    %2086 = vmatprep.mubr.f32.mxu0 0.0
    %2087 = vmatmul.mubr.f32.gmra.mxu0 %v2017
    %v2088 = vpop.f32.mrf.mxu0
    %v2089 = vadd.f32 0.0, %v2088
    %v2090 = vpop.f32.mrf.mxu0
    %2091 = vdwg.mxu0
    %v2092 = vld [vmem:[#allocation18] sm:$0x1]
    %v2093 = vld [vmem:[#allocation16] sm:$0xff]
    %v2094 = vmul.f32 %v2093, %v2089
    %v2095 = vsel %vm1610, %v2094, 0.0
    %v2096 = vrot.slane %v2095, 4
    %v2097 = vadd.f32 %v2095, %v2096
    %v2098 = vrot.slane %v2097, 2
    %v2099 = vadd.f32 %v2097, %v2098
    %v2100 = vrot.slane %v2099, 1
    %v2101 = vadd.f32 %v2099, %v2100
    %v2102 = vadd.f32 %v2092, %v2101
    %v2104 = vlaneseq
    %v2105 = vshrl.u32 %v2104, 7
    %v2106 = vsub.s32 0, %v2105
    %v2107 = vrot.slane %v2102, %v2106
    %v2109 = vmul.f32 %v1643, %v2107
    %v2110 = vmul.f32 %v1644, %v2107
    %v2111 = vmul.f32 %v1645, %v2107
    %v2112 = vld [vmem:[#allocation2] sm:$0x1]
    %v2113 = vld [vmem:[%s7] sm:$0xff]
    %v2114 = vld [vmem:[%s7 + $0x8] sm:$0xff]
    %v2115 = vld [vmem:[%s7 + $0x10] sm:$0xff]
    %v2116 = vld [vmem:[%s7 + $0x18] sm:$0xff]
    %v2117 = vld [vmem:[#allocation4] sm:$0x1]
    %v2119 = vsel %vm225, %v2112, 0
    %2121 = vmatprep.subr.mxu0 0.0
    %2122 = vmatpush1.msra.mxu0 0.0
    %2123 = vmatprep.subr.mxu0 0.0
    %2124 = vmatpush1.msra.mxu0 0.0
    %2125 = vmatprep.subr.mxu0 0.0
    %2126 = vmatpush1.msra.mxu0 0.0
    %2127 = vmatprep.subr.mxu0 0.0
    %2128 = vmatpush1.msra.mxu0 0.0
    %2129 = vmatprep.subr.mxu0 0.0
    %2130 = vmatpush1.msra.mxu0 0.0
    %2131 = vmatprep.subr.mxu0 0.0
    %2132 = vmatpush1.msra.mxu0 0.0
    %2133 = vmatprep.subr.mxu0 0.0
    %2134 = vmatpush1.msra.mxu0 0.0
    %2135 = vmatprep.subr.mxu0 0.0
    %2136 = vmatpush1.msra.mxu0 0.0
    %2137 = vmatprep.subr.mxu0 0.0
    %2138 = vmatpush1.msra.mxu0 0.0
    %2139 = vmatprep.subr.mxu0 0.0
    %2140 = vmatpush1.msra.mxu0 0.0
    %2141 = vmatprep.subr.mxu0 0.0
    %2142 = vmatpush1.msra.mxu0 0.0
    %2143 = vmatprep.subr.mxu0 0.0
    %2144 = vmatpush1.msra.mxu0 0.0
    %2145 = vmatprep.subr.mxu0 0.0
    %2146 = vmatpush1.msra.mxu0 %v2116
    %2147 = vmatprep.subr.mxu0 0.0
    %2148 = vmatpush1.msra.mxu0 %v2115
    %2149 = vmatprep.subr.mxu0 0.0
    %2150 = vmatpush1.msra.mxu0 %v2114
    %2151 = vmatprep.subr.mxu0 0.0
    %2152 = vmatpush1.msra.mxu0 %v2113
    %2153 = vmatprep.subr.mxu0 0.0
    %2154 = vmatpush2.msra.mxu0 0.0
    %2155 = vmatprep.subr.mxu0 0.0
    %2156 = vmatpush2.msra.mxu0 0.0
    %2157 = vmatprep.subr.mxu0 0.0
    %2158 = vmatpush2.msra.mxu0 0.0
    %2159 = vmatprep.subr.mxu0 0.0
    %2160 = vmatpush2.msra.mxu0 0.0
    %2161 = vmatprep.subr.mxu0 0.0
    %2162 = vmatpush2.msra.mxu0 0.0
    %2163 = vmatprep.subr.mxu0 0.0
    %2164 = vmatpush2.msra.mxu0 0.0
    %2165 = vmatprep.subr.mxu0 0.0
    %2166 = vmatpush2.msra.mxu0 0.0
    %2167 = vmatprep.subr.mxu0 0.0
    %2168 = vmatpush2.msra.mxu0 0.0
    %2169 = vmatprep.subr.mxu0 0.0
    %2170 = vmatpush2.msra.mxu0 0.0
    %2171 = vmatprep.subr.mxu0 0.0
    %2172 = vmatpush2.msra.mxu0 0.0
    %2173 = vmatprep.subr.mxu0 0.0
    %2174 = vmatpush2.msra.mxu0 0.0
    %2175 = vmatprep.subr.mxu0 0.0
    %2176 = vmatpush2.msra.mxu0 0.0
    %2177 = vmatprep.subr.mxu0 0.0
    %2178 = vmatpush2.msra.mxu0 0.0
    %2179 = vmatprep.subr.mxu0 0.0
    %2180 = vmatpush2.msra.mxu0 0.0
    %2181 = vmatprep.subr.mxu0 0.0
    %2182 = vmatpush2.msra.mxu0 0.0
    %2183 = vmatprep.subr.mxu0 0.0
    %2184 = vmatpush2.msra.mxu0 0.0
    %2185 = vmatprep.mubr.f32.mxu0 0.0
    %2186 = vmatmul.mubr.f32.gmra.mxu0 %v2119
    %v2187 = vpop.f32.mrf.mxu0
    %v2188 = vadd.f32 %v2117, %v2187
    %v2189 = vpop.f32.mrf.mxu0
    %2190 = vdwg.mxu0
    %s2191 = scalar_lea.vmem %s7, 32
    %v2192 = vld [vmem:[%s2191] sm:$0xff]
    %v2193 = vld [vmem:[%s2191 + $0x8] sm:$0xff]
    %v2194 = vld [vmem:[%s2191 + $0x10] sm:$0xff]
    %v2195 = vld [vmem:[%s2191 + $0x18] sm:$0xff]
    %s2196 = scalar_lea.vmem [#allocation4], 1
    %v2197 = vld [vmem:[%s2196] sm:$0x1]
    %s2198 = scalar_lea.vmem %s7, 64
    %v2199 = vld [vmem:[%s2198] sm:$0xff]
    %v2200 = vld [vmem:[%s2198 + $0x8] sm:$0xff]
    %v2201 = vld [vmem:[%s2198 + $0x10] sm:$0xff]
    %v2202 = vld [vmem:[%s2198 + $0x18] sm:$0xff]
    %s2203 = scalar_lea.vmem [#allocation4], 2
    %v2204 = vld [vmem:[%s2203] sm:$0x1]
    %v2206 = vsel %vm225, %v2188, 0
    %2208 = vmatprep.subr.mxu0 0.0
    %2209 = vmatpush1.msra.mxu0 0.0
    %2210 = vmatprep.subr.mxu0 0.0
    %2211 = vmatpush1.msra.mxu0 0.0
    %2212 = vmatprep.subr.mxu0 0.0
    %2213 = vmatpush1.msra.mxu0 0.0
    %2214 = vmatprep.subr.mxu0 0.0
    %2215 = vmatpush1.msra.mxu0 0.0
    %2216 = vmatprep.subr.mxu0 0.0
    %2217 = vmatpush1.msra.mxu0 0.0
    %2218 = vmatprep.subr.mxu0 0.0
    %2219 = vmatpush1.msra.mxu0 0.0
    %2220 = vmatprep.subr.mxu0 0.0
    %2221 = vmatpush1.msra.mxu0 0.0
    %2222 = vmatprep.subr.mxu0 0.0
    %2223 = vmatpush1.msra.mxu0 0.0
    %2224 = vmatprep.subr.mxu0 0.0
    %2225 = vmatpush1.msra.mxu0 0.0
    %2226 = vmatprep.subr.mxu0 0.0
    %2227 = vmatpush1.msra.mxu0 0.0
    %2228 = vmatprep.subr.mxu0 0.0
    %2229 = vmatpush1.msra.mxu0 0.0
    %2230 = vmatprep.subr.mxu0 0.0
    %2231 = vmatpush1.msra.mxu0 0.0
    %2232 = vmatprep.subr.mxu0 0.0
    %2233 = vmatpush1.msra.mxu0 %v2195
    %2234 = vmatprep.subr.mxu0 0.0
    %2235 = vmatpush1.msra.mxu0 %v2194
    %2236 = vmatprep.subr.mxu0 0.0
    %2237 = vmatpush1.msra.mxu0 %v2193
    %2238 = vmatprep.subr.mxu0 0.0
    %2239 = vmatpush1.msra.mxu0 %v2192
    %2240 = vmatprep.subr.mxu0 0.0
    %2241 = vmatpush2.msra.mxu0 0.0
    %2242 = vmatprep.subr.mxu0 0.0
    %2243 = vmatpush2.msra.mxu0 0.0
    %2244 = vmatprep.subr.mxu0 0.0
    %2245 = vmatpush2.msra.mxu0 0.0
    %2246 = vmatprep.subr.mxu0 0.0
    %2247 = vmatpush2.msra.mxu0 0.0
    %2248 = vmatprep.subr.mxu0 0.0
    %2249 = vmatpush2.msra.mxu0 0.0
    %2250 = vmatprep.subr.mxu0 0.0
    %2251 = vmatpush2.msra.mxu0 0.0
    %2252 = vmatprep.subr.mxu0 0.0
    %2253 = vmatpush2.msra.mxu0 0.0
    %2254 = vmatprep.subr.mxu0 0.0
    %2255 = vmatpush2.msra.mxu0 0.0
    %2256 = vmatprep.subr.mxu0 0.0
    %2257 = vmatpush2.msra.mxu0 0.0
    %2258 = vmatprep.subr.mxu0 0.0
    %2259 = vmatpush2.msra.mxu0 0.0
    %2260 = vmatprep.subr.mxu0 0.0
    %2261 = vmatpush2.msra.mxu0 0.0
    %2262 = vmatprep.subr.mxu0 0.0
    %2263 = vmatpush2.msra.mxu0 0.0
    %2264 = vmatprep.subr.mxu0 0.0
    %2265 = vmatpush2.msra.mxu0 0.0
    %2266 = vmatprep.subr.mxu0 0.0
    %2267 = vmatpush2.msra.mxu0 0.0
    %2268 = vmatprep.subr.mxu0 0.0
    %2269 = vmatpush2.msra.mxu0 0.0
    %2270 = vmatprep.subr.mxu0 0.0
    %2271 = vmatpush2.msra.mxu0 0.0
    %2272 = vmatprep.mubr.f32.mxu0 0.0
    %2273 = vmatmul.mubr.f32.gmra.mxu0 %v2206
    %v2274 = vpop.f32.mrf.mxu0
    %v2275 = vadd.f32 %v2197, %v2274
    %v2276 = vpop.f32.mrf.mxu0
    %2277 = vdwg.mxu0
    %v2278 = vmax.f32 %v2275, 0.0
    %v2280 = vsel %vm225, %v2278, 0
    %2282 = vmatprep.subr.mxu0 0.0
    %2283 = vmatpush1.msra.mxu0 0.0
    %2284 = vmatprep.subr.mxu0 0.0
    %2285 = vmatpush1.msra.mxu0 0.0
    %2286 = vmatprep.subr.mxu0 0.0
    %2287 = vmatpush1.msra.mxu0 0.0
    %2288 = vmatprep.subr.mxu0 0.0
    %2289 = vmatpush1.msra.mxu0 0.0
    %2290 = vmatprep.subr.mxu0 0.0
    %2291 = vmatpush1.msra.mxu0 0.0
    %2292 = vmatprep.subr.mxu0 0.0
    %2293 = vmatpush1.msra.mxu0 0.0
    %2294 = vmatprep.subr.mxu0 0.0
    %2295 = vmatpush1.msra.mxu0 0.0
    %2296 = vmatprep.subr.mxu0 0.0
    %2297 = vmatpush1.msra.mxu0 0.0
    %2298 = vmatprep.subr.mxu0 0.0
    %2299 = vmatpush1.msra.mxu0 0.0
    %2300 = vmatprep.subr.mxu0 0.0
    %2301 = vmatpush1.msra.mxu0 0.0
    %2302 = vmatprep.subr.mxu0 0.0
    %2303 = vmatpush1.msra.mxu0 0.0
    %2304 = vmatprep.subr.mxu0 0.0
    %2305 = vmatpush1.msra.mxu0 0.0
    %2306 = vmatprep.subr.mxu0 0.0
    %2307 = vmatpush1.msra.mxu0 %v2202
    %2308 = vmatprep.subr.mxu0 0.0
    %2309 = vmatpush1.msra.mxu0 %v2201
    %2310 = vmatprep.subr.mxu0 0.0
    %2311 = vmatpush1.msra.mxu0 %v2200
    %2312 = vmatprep.subr.mxu0 0.0
    %2313 = vmatpush1.msra.mxu0 %v2199
    %2314 = vmatprep.subr.mxu0 0.0
    %2315 = vmatpush2.msra.mxu0 0.0
    %2316 = vmatprep.subr.mxu0 0.0
    %2317 = vmatpush2.msra.mxu0 0.0
    %2318 = vmatprep.subr.mxu0 0.0
    %2319 = vmatpush2.msra.mxu0 0.0
    %2320 = vmatprep.subr.mxu0 0.0
    %2321 = vmatpush2.msra.mxu0 0.0
    %2322 = vmatprep.subr.mxu0 0.0
    %2323 = vmatpush2.msra.mxu0 0.0
    %2324 = vmatprep.subr.mxu0 0.0
    %2325 = vmatpush2.msra.mxu0 0.0
    %2326 = vmatprep.subr.mxu0 0.0
    %2327 = vmatpush2.msra.mxu0 0.0
    %2328 = vmatprep.subr.mxu0 0.0
    %2329 = vmatpush2.msra.mxu0 0.0
    %2330 = vmatprep.subr.mxu0 0.0
    %2331 = vmatpush2.msra.mxu0 0.0
    %2332 = vmatprep.subr.mxu0 0.0
    %2333 = vmatpush2.msra.mxu0 0.0
    %2334 = vmatprep.subr.mxu0 0.0
    %2335 = vmatpush2.msra.mxu0 0.0
    %2336 = vmatprep.subr.mxu0 0.0
    %2337 = vmatpush2.msra.mxu0 0.0
    %2338 = vmatprep.subr.mxu0 0.0
    %2339 = vmatpush2.msra.mxu0 0.0
    %2340 = vmatprep.subr.mxu0 0.0
    %2341 = vmatpush2.msra.mxu0 0.0
    %2342 = vmatprep.subr.mxu0 0.0
    %2343 = vmatpush2.msra.mxu0 0.0
    %2344 = vmatprep.subr.mxu0 0.0
    %2345 = vmatpush2.msra.mxu0 0.0
    %2346 = vmatprep.mubr.f32.mxu0 0.0
    %2347 = vmatmul.mubr.f32.gmra.mxu0 %v2280
    %v2348 = vpop.f32.mrf.mxu0
    %v2349 = vadd.f32 %v2204, %v2348
    %v2350 = vpop.f32.mrf.mxu0
    %2351 = vdwg.mxu0
    %v2352 = vmax.f32 %v2349, 0.0
    %v2353 = vadd.f32 %v2352, %v2188
    %s2354 = scalar_lea.vmem %s7, 96
    %v2355 = vld [vmem:[%s2354] sm:$0xff]
    %v2356 = vld [vmem:[%s2354 + $0x8] sm:$0xff]
    %v2357 = vld [vmem:[%s2354 + $0x10] sm:$0xff]
    %v2358 = vld [vmem:[%s2354 + $0x18] sm:$0xff]
    %s2359 = scalar_lea.vmem [#allocation4], 3
    %v2360 = vld [vmem:[%s2359] sm:$0x1]
    %s2361 = scalar_lea.vmem %s7, 128
    %v2362 = vld [vmem:[%s2361] sm:$0xff]
    %v2363 = vld [vmem:[%s2361 + $0x8] sm:$0xff]
    %v2364 = vld [vmem:[%s2361 + $0x10] sm:$0xff]
    %v2365 = vld [vmem:[%s2361 + $0x18] sm:$0xff]
    %s2366 = scalar_lea.vmem [#allocation4], 4
    %v2367 = vld [vmem:[%s2366] sm:$0x1]
    %v2369 = vsel %vm225, %v2353, 0
    %2371 = vmatprep.subr.mxu0 0.0
    %2372 = vmatpush1.msra.mxu0 0.0
    %2373 = vmatprep.subr.mxu0 0.0
    %2374 = vmatpush1.msra.mxu0 0.0
    %2375 = vmatprep.subr.mxu0 0.0
    %2376 = vmatpush1.msra.mxu0 0.0
    %2377 = vmatprep.subr.mxu0 0.0
    %2378 = vmatpush1.msra.mxu0 0.0
    %2379 = vmatprep.subr.mxu0 0.0
    %2380 = vmatpush1.msra.mxu0 0.0
    %2381 = vmatprep.subr.mxu0 0.0
    %2382 = vmatpush1.msra.mxu0 0.0
    %2383 = vmatprep.subr.mxu0 0.0
    %2384 = vmatpush1.msra.mxu0 0.0
    %2385 = vmatprep.subr.mxu0 0.0
    %2386 = vmatpush1.msra.mxu0 0.0
    %2387 = vmatprep.subr.mxu0 0.0
    %2388 = vmatpush1.msra.mxu0 0.0
    %2389 = vmatprep.subr.mxu0 0.0
    %2390 = vmatpush1.msra.mxu0 0.0
    %2391 = vmatprep.subr.mxu0 0.0
    %2392 = vmatpush1.msra.mxu0 0.0
    %2393 = vmatprep.subr.mxu0 0.0
    %2394 = vmatpush1.msra.mxu0 0.0
    %2395 = vmatprep.subr.mxu0 0.0
    %2396 = vmatpush1.msra.mxu0 %v2358
    %2397 = vmatprep.subr.mxu0 0.0
    %2398 = vmatpush1.msra.mxu0 %v2357
    %2399 = vmatprep.subr.mxu0 0.0
    %2400 = vmatpush1.msra.mxu0 %v2356
    %2401 = vmatprep.subr.mxu0 0.0
    %2402 = vmatpush1.msra.mxu0 %v2355
    %2403 = vmatprep.subr.mxu0 0.0
    %2404 = vmatpush2.msra.mxu0 0.0
    %2405 = vmatprep.subr.mxu0 0.0
    %2406 = vmatpush2.msra.mxu0 0.0
    %2407 = vmatprep.subr.mxu0 0.0
    %2408 = vmatpush2.msra.mxu0 0.0
    %2409 = vmatprep.subr.mxu0 0.0
    %2410 = vmatpush2.msra.mxu0 0.0
    %2411 = vmatprep.subr.mxu0 0.0
    %2412 = vmatpush2.msra.mxu0 0.0
    %2413 = vmatprep.subr.mxu0 0.0
    %2414 = vmatpush2.msra.mxu0 0.0
    %2415 = vmatprep.subr.mxu0 0.0
    %2416 = vmatpush2.msra.mxu0 0.0
    %2417 = vmatprep.subr.mxu0 0.0
    %2418 = vmatpush2.msra.mxu0 0.0
    %2419 = vmatprep.subr.mxu0 0.0
    %2420 = vmatpush2.msra.mxu0 0.0
    %2421 = vmatprep.subr.mxu0 0.0
    %2422 = vmatpush2.msra.mxu0 0.0
    %2423 = vmatprep.subr.mxu0 0.0
    %2424 = vmatpush2.msra.mxu0 0.0
    %2425 = vmatprep.subr.mxu0 0.0
    %2426 = vmatpush2.msra.mxu0 0.0
    %2427 = vmatprep.subr.mxu0 0.0
    %2428 = vmatpush2.msra.mxu0 0.0
    %2429 = vmatprep.subr.mxu0 0.0
    %2430 = vmatpush2.msra.mxu0 0.0
    %2431 = vmatprep.subr.mxu0 0.0
    %2432 = vmatpush2.msra.mxu0 0.0
    %2433 = vmatprep.subr.mxu0 0.0
    %2434 = vmatpush2.msra.mxu0 0.0
    %2435 = vmatprep.mubr.f32.mxu0 0.0
    %2436 = vmatmul.mubr.f32.gmra.mxu0 %v2369
    %v2437 = vpop.f32.mrf.mxu0
    %v2438 = vadd.f32 %v2360, %v2437
    %v2439 = vpop.f32.mrf.mxu0
    %2440 = vdwg.mxu0
    %v2441 = vmax.f32 %v2438, 0.0
    %v2443 = vsel %vm225, %v2441, 0
    %2445 = vmatprep.subr.mxu0 0.0
    %2446 = vmatpush1.msra.mxu0 0.0
    %2447 = vmatprep.subr.mxu0 0.0
    %2448 = vmatpush1.msra.mxu0 0.0
    %2449 = vmatprep.subr.mxu0 0.0
    %2450 = vmatpush1.msra.mxu0 0.0
    %2451 = vmatprep.subr.mxu0 0.0
    %2452 = vmatpush1.msra.mxu0 0.0
    %2453 = vmatprep.subr.mxu0 0.0
    %2454 = vmatpush1.msra.mxu0 0.0
    %2455 = vmatprep.subr.mxu0 0.0
    %2456 = vmatpush1.msra.mxu0 0.0
    %2457 = vmatprep.subr.mxu0 0.0
    %2458 = vmatpush1.msra.mxu0 0.0
    %2459 = vmatprep.subr.mxu0 0.0
    %2460 = vmatpush1.msra.mxu0 0.0
    %2461 = vmatprep.subr.mxu0 0.0
    %2462 = vmatpush1.msra.mxu0 0.0
    %2463 = vmatprep.subr.mxu0 0.0
    %2464 = vmatpush1.msra.mxu0 0.0
    %2465 = vmatprep.subr.mxu0 0.0
    %2466 = vmatpush1.msra.mxu0 0.0
    %2467 = vmatprep.subr.mxu0 0.0
    %2468 = vmatpush1.msra.mxu0 0.0
    %2469 = vmatprep.subr.mxu0 0.0
    %2470 = vmatpush1.msra.mxu0 %v2365
    %2471 = vmatprep.subr.mxu0 0.0
    %2472 = vmatpush1.msra.mxu0 %v2364
    %2473 = vmatprep.subr.mxu0 0.0
    %2474 = vmatpush1.msra.mxu0 %v2363
    %2475 = vmatprep.subr.mxu0 0.0
    %2476 = vmatpush1.msra.mxu0 %v2362
    %2477 = vmatprep.subr.mxu0 0.0
    %2478 = vmatpush2.msra.mxu0 0.0
    %2479 = vmatprep.subr.mxu0 0.0
    %2480 = vmatpush2.msra.mxu0 0.0
    %2481 = vmatprep.subr.mxu0 0.0
    %2482 = vmatpush2.msra.mxu0 0.0
    %2483 = vmatprep.subr.mxu0 0.0
    %2484 = vmatpush2.msra.mxu0 0.0
    %2485 = vmatprep.subr.mxu0 0.0
    %2486 = vmatpush2.msra.mxu0 0.0
    %2487 = vmatprep.subr.mxu0 0.0
    %2488 = vmatpush2.msra.mxu0 0.0
    %2489 = vmatprep.subr.mxu0 0.0
    %2490 = vmatpush2.msra.mxu0 0.0
    %2491 = vmatprep.subr.mxu0 0.0
    %2492 = vmatpush2.msra.mxu0 0.0
    %2493 = vmatprep.subr.mxu0 0.0
    %2494 = vmatpush2.msra.mxu0 0.0
    %2495 = vmatprep.subr.mxu0 0.0
    %2496 = vmatpush2.msra.mxu0 0.0
    %2497 = vmatprep.subr.mxu0 0.0
    %2498 = vmatpush2.msra.mxu0 0.0
    %2499 = vmatprep.subr.mxu0 0.0
    %2500 = vmatpush2.msra.mxu0 0.0
    %2501 = vmatprep.subr.mxu0 0.0
    %2502 = vmatpush2.msra.mxu0 0.0
    %2503 = vmatprep.subr.mxu0 0.0
    %2504 = vmatpush2.msra.mxu0 0.0
    %2505 = vmatprep.subr.mxu0 0.0
    %2506 = vmatpush2.msra.mxu0 0.0
    %2507 = vmatprep.subr.mxu0 0.0
    %2508 = vmatpush2.msra.mxu0 0.0
    %2509 = vmatprep.mubr.f32.mxu0 0.0
    %2510 = vmatmul.mubr.f32.gmra.mxu0 %v2443
    %v2511 = vpop.f32.mrf.mxu0
    %v2512 = vadd.f32 %v2367, %v2511
    %v2513 = vpop.f32.mrf.mxu0
    %2514 = vdwg.mxu0
    %v2515 = vmax.f32 %v2512, 0.0
    %v2516 = vadd.f32 %v2515, %v2353
    %v2517 = vld [vmem:[%s9] sm:$0xff]
    %v2518 = vld [vmem:[%s9 + $0x8] sm:$0xff]
    %v2519 = vld [vmem:[%s9 + $0x10] sm:$0xff]
    %v2520 = vld [vmem:[%s9 + $0x18] sm:$0xff]
    %v2521 = vld [vmem:[#allocation6] sm:$0x1]
    %v2523 = vsel %vm225, %v2516, 0
    %2525 = vmatprep.subr.mxu0 0.0
    %2526 = vmatpush1.msra.mxu0 0.0
    %2527 = vmatprep.subr.mxu0 0.0
    %2528 = vmatpush1.msra.mxu0 0.0
    %2529 = vmatprep.subr.mxu0 0.0
    %2530 = vmatpush1.msra.mxu0 0.0
    %2531 = vmatprep.subr.mxu0 0.0
    %2532 = vmatpush1.msra.mxu0 0.0
    %2533 = vmatprep.subr.mxu0 0.0
    %2534 = vmatpush1.msra.mxu0 0.0
    %2535 = vmatprep.subr.mxu0 0.0
    %2536 = vmatpush1.msra.mxu0 0.0
    %2537 = vmatprep.subr.mxu0 0.0
    %2538 = vmatpush1.msra.mxu0 0.0
    %2539 = vmatprep.subr.mxu0 0.0
    %2540 = vmatpush1.msra.mxu0 0.0
    %2541 = vmatprep.subr.mxu0 0.0
    %2542 = vmatpush1.msra.mxu0 0.0
    %2543 = vmatprep.subr.mxu0 0.0
    %2544 = vmatpush1.msra.mxu0 0.0
    %2545 = vmatprep.subr.mxu0 0.0
    %2546 = vmatpush1.msra.mxu0 0.0
    %2547 = vmatprep.subr.mxu0 0.0
    %2548 = vmatpush1.msra.mxu0 0.0
    %2549 = vmatprep.subr.mxu0 0.0
    %2550 = vmatpush1.msra.mxu0 %v2520
    %2551 = vmatprep.subr.mxu0 0.0
    %2552 = vmatpush1.msra.mxu0 %v2519
    %2553 = vmatprep.subr.mxu0 0.0
    %2554 = vmatpush1.msra.mxu0 %v2518
    %2555 = vmatprep.subr.mxu0 0.0
    %2556 = vmatpush1.msra.mxu0 %v2517
    %2557 = vmatprep.subr.mxu0 0.0
    %2558 = vmatpush2.msra.mxu0 0.0
    %2559 = vmatprep.subr.mxu0 0.0
    %2560 = vmatpush2.msra.mxu0 0.0
    %2561 = vmatprep.subr.mxu0 0.0
    %2562 = vmatpush2.msra.mxu0 0.0
    %2563 = vmatprep.subr.mxu0 0.0
    %2564 = vmatpush2.msra.mxu0 0.0
    %2565 = vmatprep.subr.mxu0 0.0
    %2566 = vmatpush2.msra.mxu0 0.0
    %2567 = vmatprep.subr.mxu0 0.0
    %2568 = vmatpush2.msra.mxu0 0.0
    %2569 = vmatprep.subr.mxu0 0.0
    %2570 = vmatpush2.msra.mxu0 0.0
    %2571 = vmatprep.subr.mxu0 0.0
    %2572 = vmatpush2.msra.mxu0 0.0
    %2573 = vmatprep.subr.mxu0 0.0
    %2574 = vmatpush2.msra.mxu0 0.0
    %2575 = vmatprep.subr.mxu0 0.0
    %2576 = vmatpush2.msra.mxu0 0.0
    %2577 = vmatprep.subr.mxu0 0.0
    %2578 = vmatpush2.msra.mxu0 0.0
    %2579 = vmatprep.subr.mxu0 0.0
    %2580 = vmatpush2.msra.mxu0 0.0
    %2581 = vmatprep.subr.mxu0 0.0
    %2582 = vmatpush2.msra.mxu0 0.0
    %2583 = vmatprep.subr.mxu0 0.0
    %2584 = vmatpush2.msra.mxu0 0.0
    %2585 = vmatprep.subr.mxu0 0.0
    %2586 = vmatpush2.msra.mxu0 0.0
    %2587 = vmatprep.subr.mxu0 0.0
    %2588 = vmatpush2.msra.mxu0 0.0
    %2589 = vmatprep.mubr.f32.mxu0 0.0
    %2590 = vmatmul.mubr.f32.gmra.mxu0 %v2523
    %v2591 = vpop.f32.mrf.mxu0
    %v2592 = vadd.f32 %v2521, %v2591
    %v2593 = vpop.f32.mrf.mxu0
    %2594 = vdwg.mxu0
    %vm2595 = vcmask 57344
    %v2596 = vsel %vm2595, %v2592, -inf
    %2597 = vmax.xlane.f32.xlu0 %v2596
    %v2598 = vpop.xlane.xlu0 %2597
    %v2599 = vsub.f32 %v2592, %v2598
    %v2600 = vmul.f32 %v2599, 1.442695
    %v2601 = vpow.pop %v2600
    %v2602 = vsel %vm2595, %v2601, 0.0
    %2603 = vadd.xlane.f32.xlu0 %v2602
    %v2604 = vpop.xlane.xlu0 %2603
    %v2605 = vrcp.pop %v2604
    %v2606 = vmul.f32 %v2601, %v2605
    %2607 = vxpose.xlu0.b32.start [1/16] %v2109, 128
    %2608 = vxpose.xlu0.b32.cont [2/16] 0.0, 128
    %2609 = vxpose.xlu0.b32.cont [3/16] 0.0, 128
    %2610 = vxpose.xlu0.b32.cont [4/16] 0.0, 128
    %2611 = vxpose.xlu0.b32.cont [5/16] 0.0, 128
    %2612 = vxpose.xlu0.b32.cont [6/16] 0.0, 128
    %2613 = vxpose.xlu0.b32.cont [7/16] 0.0, 128
    %2614 = vxpose.xlu0.b32.cont [8/16] 0.0, 128
    %2615 = vxpose.xlu0.b32.cont [9/16] 0.0, 128
    %2616 = vxpose.xlu0.b32.cont [10/16] 0.0, 128
    %2617 = vxpose.xlu0.b32.cont [11/16] 0.0, 128
    %2618 = vxpose.xlu0.b32.cont [12/16] 0.0, 128
    %2619 = vxpose.xlu0.b32.cont [13/16] 0.0, 128
    %2620 = vxpose.xlu0.b32.cont [14/16] 0.0, 128
    %2621 = vxpose.xlu0.b32.cont [15/16] 0.0, 128
    %2622 = vxpose.xlu0.b32.end [16/16] 0.0, 128
    %v2623 = vpop.trf.xlu0
    %v2624 = vpop.trf.xlu0
    %v2625 = vpop.trf.xlu0
    %v2626 = vpop.trf.xlu0
    %v2627 = vpop.trf.xlu0
    %v2628 = vpop.trf.xlu0
    %v2629 = vpop.trf.xlu0
    %v2630 = vpop.trf.xlu0
    %v2631 = vpop.trf.xlu0
    %v2632 = vpop.trf.xlu0
    %v2633 = vpop.trf.xlu0
    %v2634 = vpop.trf.xlu0
    %v2635 = vpop.trf.xlu0
    %v2636 = vpop.trf.xlu0
    %v2637 = vpop.trf.xlu0
    %v2638 = vpop.trf.xlu0
    %vm2639 = vcmask 64512
    %v2641 = vsel %vm2639, %v2623, 0
    %v2644 = vsel %vm2639, %v2624, 0
    %v2647 = vsel %vm2639, %v2625, 0
    %v2650 = vsel %vm2639, %v2626, 0
    %v2653 = vsel %vm2639, %v2627, 0
    %v2656 = vsel %vm2639, %v2628, 0
    %v2659 = vsel %vm2639, %v2629, 0
    %v2662 = vsel %vm2639, %v2630, 0
    %v2665 = vsel %vm2639, %v2631, 0
    %2667 = vmatprep.subr.mxu0 0.0
    %2668 = vmatpush1.msra.mxu0 0.0
    %2669 = vmatprep.subr.mxu0 0.0
    %2670 = vmatpush1.msra.mxu0 0.0
    %2671 = vmatprep.subr.mxu0 0.0
    %2672 = vmatpush1.msra.mxu0 0.0
    %2673 = vmatprep.subr.mxu0 0.0
    %2674 = vmatpush1.msra.mxu0 0.0
    %2675 = vmatprep.subr.mxu0 0.0
    %2676 = vmatpush1.msra.mxu0 0.0
    %2677 = vmatprep.subr.mxu0 0.0
    %2678 = vmatpush1.msra.mxu0 0.0
    %2679 = vmatprep.subr.mxu0 0.0
    %2680 = vmatpush1.msra.mxu0 0.0
    %2681 = vmatprep.subr.mxu0 0.0
    %2682 = vmatpush1.msra.mxu0 0.0
    %2683 = vmatprep.subr.mxu0 0.0
    %2684 = vmatpush1.msra.mxu0 0.0
    %2685 = vmatprep.subr.mxu0 0.0
    %2686 = vmatpush1.msra.mxu0 0.0
    %2687 = vmatprep.subr.mxu0 0.0
    %2688 = vmatpush1.msra.mxu0 0.0
    %2689 = vmatprep.subr.mxu0 0.0
    %2690 = vmatpush1.msra.mxu0 0.0
    %2691 = vmatprep.subr.mxu0 0.0
    %2692 = vmatpush1.msra.mxu0 0.0
    %2693 = vmatprep.subr.mxu0 0.0
    %2694 = vmatpush1.msra.mxu0 0.0
    %2695 = vmatprep.subr.mxu0 0.0
    %2696 = vmatpush1.msra.mxu0 0.0
    %2697 = vmatprep.subr.mxu0 0.0
    %2698 = vmatpush1.msra.mxu0 %v1420
    %2699 = vmatprep.subr.mxu0 0.0
    %2700 = vmatpush2.msra.mxu0 0.0
    %2701 = vmatprep.subr.mxu0 0.0
    %2702 = vmatpush2.msra.mxu0 0.0
    %2703 = vmatprep.subr.mxu0 0.0
    %2704 = vmatpush2.msra.mxu0 0.0
    %2705 = vmatprep.subr.mxu0 0.0
    %2706 = vmatpush2.msra.mxu0 0.0
    %2707 = vmatprep.subr.mxu0 0.0
    %2708 = vmatpush2.msra.mxu0 0.0
    %2709 = vmatprep.subr.mxu0 0.0
    %2710 = vmatpush2.msra.mxu0 0.0
    %2711 = vmatprep.subr.mxu0 0.0
    %2712 = vmatpush2.msra.mxu0 0.0
    %2713 = vmatprep.subr.mxu0 0.0
    %2714 = vmatpush2.msra.mxu0 0.0
    %2715 = vmatprep.subr.mxu0 0.0
    %2716 = vmatpush2.msra.mxu0 0.0
    %2717 = vmatprep.subr.mxu0 0.0
    %2718 = vmatpush2.msra.mxu0 0.0
    %2719 = vmatprep.subr.mxu0 0.0
    %2720 = vmatpush2.msra.mxu0 0.0
    %2721 = vmatprep.subr.mxu0 0.0
    %2722 = vmatpush2.msra.mxu0 0.0
    %2723 = vmatprep.subr.mxu0 0.0
    %2724 = vmatpush2.msra.mxu0 0.0
    %2725 = vmatprep.subr.mxu0 0.0
    %2726 = vmatpush2.msra.mxu0 0.0
    %2727 = vmatprep.subr.mxu0 0.0
    %2728 = vmatpush2.msra.mxu0 0.0
    %2729 = vmatprep.subr.mxu0 0.0
    %2730 = vmatpush2.msra.mxu0 0.0
    %2731 = vmatprep.mubr.f32.mxu0 0.0
    %2732 = vmatmul.mubr.f32.gmra.mxu0 %v2641
    %v2733 = vpop.f32.mrf.mxu0
    %v2734 = vadd.f32 1e-09, %v2733
    %v2735 = vpop.f32.mrf.mxu0
    %2736 = vmatprep.mubr.f32.mxu0 0.0
    %2737 = vmatmul.mubr.f32.gmra.mxu0 %v2644
    %v2738 = vpop.f32.mrf.mxu0
    %v2739 = vadd.f32 1e-09, %v2738
    %v2740 = vpop.f32.mrf.mxu0
    %2741 = vmatprep.mubr.f32.mxu0 0.0
    %2742 = vmatmul.mubr.f32.gmra.mxu0 %v2647
    %v2743 = vpop.f32.mrf.mxu0
    %v2744 = vadd.f32 1e-09, %v2743
    %v2745 = vpop.f32.mrf.mxu0
    %2746 = vmatprep.mubr.f32.mxu0 0.0
    %2747 = vmatmul.mubr.f32.gmra.mxu0 %v2650
    %v2748 = vpop.f32.mrf.mxu0
    %v2749 = vadd.f32 1e-09, %v2748
    %v2750 = vpop.f32.mrf.mxu0
    %2751 = vmatprep.mubr.f32.mxu0 0.0
    %2752 = vmatmul.mubr.f32.gmra.mxu0 %v2653
    %v2753 = vpop.f32.mrf.mxu0
    %v2754 = vadd.f32 1e-09, %v2753
    %v2755 = vpop.f32.mrf.mxu0
    %2756 = vmatprep.mubr.f32.mxu0 0.0
    %2757 = vmatmul.mubr.f32.gmra.mxu0 %v2656
    %v2758 = vpop.f32.mrf.mxu0
    %v2759 = vadd.f32 1e-09, %v2758
    %v2760 = vpop.f32.mrf.mxu0
    %2761 = vmatprep.mubr.f32.mxu0 0.0
    %2762 = vmatmul.mubr.f32.gmra.mxu0 %v2659
    %v2763 = vpop.f32.mrf.mxu0
    %v2764 = vadd.f32 1e-09, %v2763
    %v2765 = vpop.f32.mrf.mxu0
    %2766 = vmatprep.mubr.f32.mxu0 0.0
    %2767 = vmatmul.mubr.f32.gmra.mxu0 %v2662
    %v2768 = vpop.f32.mrf.mxu0
    %v2769 = vadd.f32 1e-09, %v2768
    %v2770 = vpop.f32.mrf.mxu0
    %2771 = vmatprep.mubr.f32.mxu0 0.0
    %2772 = vmatmul.mubr.f32.gmra.mxu0 %v2665
    %v2773 = vpop.f32.mrf.mxu0
    %v2774 = vadd.f32 1e-09, %v2773
    %v2775 = vpop.f32.mrf.mxu0
    %2776 = vdwg.mxu0
    %v2777 = vlog2.pop %v2734
    %v2778 = vmul.f32 %v2777, 0.6931472
    %v2779 = vlog2.pop %v2739
    %v2780 = vmul.f32 %v2779, 0.6931472
    %v2781 = vlog2.pop %v2744
    %v2782 = vmul.f32 %v2781, 0.6931472
    %v2783 = vlog2.pop %v2749
    %v2784 = vmul.f32 %v2783, 0.6931472
    %v2785 = vlog2.pop %v2754
    %v2786 = vmul.f32 %v2785, 0.6931472
    %v2787 = vlog2.pop %v2759
    %v2788 = vmul.f32 %v2787, 0.6931472
    %v2789 = vlog2.pop %v2764
    %v2790 = vmul.f32 %v2789, 0.6931472
    %v2791 = vlog2.pop %v2769
    %v2792 = vmul.f32 %v2791, 0.6931472
    %v2793 = vlog2.pop %v2774
    %v2794 = vmul.f32 %v2793, 0.6931472
    %2795 = vst.msk [vmem:[%s25] sm:$0xff] %vm1409, %v2778
    %2796 = vst.msk [vmem:[%s25 + $0x8] sm:$0xff] %vm1409, %v2780
    %2797 = vst.msk [vmem:[%s25 + $0x10] sm:$0xff] %vm1409, %v2782
    %2798 = vst.msk [vmem:[%s25 + $0x18] sm:$0xff] %vm1409, %v2784
    %2799 = vst.msk [vmem:[%s25 + $0x20] sm:$0xff] %vm1409, %v2786
    %2800 = vst.msk [vmem:[%s25 + $0x28] sm:$0xff] %vm1409, %v2788
    %2801 = vst.msk [vmem:[%s25 + $0x30] sm:$0xff] %vm1409, %v2790
    %2802 = vst.msk [vmem:[%s25 + $0x38] sm:$0xff] %vm1409, %v2792
    %2803 = vst.msk [vmem:[%s25 + $0x40] sm:$0xff] %vm1409, %v2794
    %2804 = vxpose.xlu0.b32.start [1/16] %v1742, 128
    %2805 = vxpose.xlu0.b32.cont [2/16] 0.0, 128
    %2806 = vxpose.xlu0.b32.cont [3/16] 0.0, 128
    %2807 = vxpose.xlu0.b32.cont [4/16] 0.0, 128
    %2808 = vxpose.xlu0.b32.cont [5/16] 0.0, 128
    %2809 = vxpose.xlu0.b32.cont [6/16] 0.0, 128
    %2810 = vxpose.xlu0.b32.cont [7/16] 0.0, 128
    %2811 = vxpose.xlu0.b32.cont [8/16] 0.0, 128
    %2812 = vxpose.xlu0.b32.cont [9/16] 0.0, 128
    %2813 = vxpose.xlu0.b32.cont [10/16] 0.0, 128
    %2814 = vxpose.xlu0.b32.cont [11/16] 0.0, 128
    %2815 = vxpose.xlu0.b32.cont [12/16] 0.0, 128
    %2816 = vxpose.xlu0.b32.cont [13/16] 0.0, 128
    %2817 = vxpose.xlu0.b32.cont [14/16] 0.0, 128
    %2818 = vxpose.xlu0.b32.cont [15/16] 0.0, 128
    %2819 = vxpose.xlu0.b32.end [16/16] 0.0, 128
    %v2820 = vpop.trf.xlu0
    %v2821 = vpop.trf.xlu0
    %v2822 = vpop.trf.xlu0
    %v2823 = vpop.trf.xlu0
    %v2824 = vpop.trf.xlu0
    %v2825 = vpop.trf.xlu0
    %v2826 = vpop.trf.xlu0
    %v2827 = vpop.trf.xlu0
    %v2828 = vpop.trf.xlu0
    %v2829 = vpop.trf.xlu0
    %v2830 = vpop.trf.xlu0
    %v2831 = vpop.trf.xlu0
    %v2832 = vpop.trf.xlu0
    %v2833 = vpop.trf.xlu0
    %v2834 = vpop.trf.xlu0
    %v2835 = vpop.trf.xlu0
    %v2837 = vsel %vm2639, %v2820, 0
    %v2840 = vsel %vm2639, %v2821, 0
    %2842 = vmatprep.subr.mxu0 0.0
    %2843 = vmatpush1.msra.mxu0 0.0
    %2844 = vmatprep.subr.mxu0 0.0
    %2845 = vmatpush1.msra.mxu0 0.0
    %2846 = vmatprep.subr.mxu0 0.0
    %2847 = vmatpush1.msra.mxu0 0.0
    %2848 = vmatprep.subr.mxu0 0.0
    %2849 = vmatpush1.msra.mxu0 0.0
    %2850 = vmatprep.subr.mxu0 0.0
    %2851 = vmatpush1.msra.mxu0 0.0
    %2852 = vmatprep.subr.mxu0 0.0
    %2853 = vmatpush1.msra.mxu0 0.0
    %2854 = vmatprep.subr.mxu0 0.0
    %2855 = vmatpush1.msra.mxu0 0.0
    %2856 = vmatprep.subr.mxu0 0.0
    %2857 = vmatpush1.msra.mxu0 0.0
    %2858 = vmatprep.subr.mxu0 0.0
    %2859 = vmatpush1.msra.mxu0 0.0
    %2860 = vmatprep.subr.mxu0 0.0
    %2861 = vmatpush1.msra.mxu0 0.0
    %2862 = vmatprep.subr.mxu0 0.0
    %2863 = vmatpush1.msra.mxu0 0.0
    %2864 = vmatprep.subr.mxu0 0.0
    %2865 = vmatpush1.msra.mxu0 0.0
    %2866 = vmatprep.subr.mxu0 0.0
    %2867 = vmatpush1.msra.mxu0 0.0
    %2868 = vmatprep.subr.mxu0 0.0
    %2869 = vmatpush1.msra.mxu0 0.0
    %2870 = vmatprep.subr.mxu0 0.0
    %2871 = vmatpush1.msra.mxu0 0.0
    %2872 = vmatprep.subr.mxu0 0.0
    %2873 = vmatpush1.msra.mxu0 %v1513
    %2874 = vmatprep.subr.mxu0 0.0
    %2875 = vmatpush2.msra.mxu0 0.0
    %2876 = vmatprep.subr.mxu0 0.0
    %2877 = vmatpush2.msra.mxu0 0.0
    %2878 = vmatprep.subr.mxu0 0.0
    %2879 = vmatpush2.msra.mxu0 0.0
    %2880 = vmatprep.subr.mxu0 0.0
    %2881 = vmatpush2.msra.mxu0 0.0
    %2882 = vmatprep.subr.mxu0 0.0
    %2883 = vmatpush2.msra.mxu0 0.0
    %2884 = vmatprep.subr.mxu0 0.0
    %2885 = vmatpush2.msra.mxu0 0.0
    %2886 = vmatprep.subr.mxu0 0.0
    %2887 = vmatpush2.msra.mxu0 0.0
    %2888 = vmatprep.subr.mxu0 0.0
    %2889 = vmatpush2.msra.mxu0 0.0
    %2890 = vmatprep.subr.mxu0 0.0
    %2891 = vmatpush2.msra.mxu0 0.0
    %2892 = vmatprep.subr.mxu0 0.0
    %2893 = vmatpush2.msra.mxu0 0.0
    %2894 = vmatprep.subr.mxu0 0.0
    %2895 = vmatpush2.msra.mxu0 0.0
    %2896 = vmatprep.subr.mxu0 0.0
    %2897 = vmatpush2.msra.mxu0 0.0
    %2898 = vmatprep.subr.mxu0 0.0
    %2899 = vmatpush2.msra.mxu0 0.0
    %2900 = vmatprep.subr.mxu0 0.0
    %2901 = vmatpush2.msra.mxu0 0.0
    %2902 = vmatprep.subr.mxu0 0.0
    %2903 = vmatpush2.msra.mxu0 0.0
    %2904 = vmatprep.subr.mxu0 0.0
    %2905 = vmatpush2.msra.mxu0 0.0
    %2906 = vmatprep.mubr.f32.mxu0 0.0
    %2907 = vmatmul.mubr.f32.gmra.mxu0 %v2837
    %v2908 = vpop.f32.mrf.mxu0
    %v2909 = vadd.f32 1e-09, %v2908
    %v2910 = vpop.f32.mrf.mxu0
    %2911 = vmatprep.mubr.f32.mxu0 0.0
    %2912 = vmatmul.mubr.f32.gmra.mxu0 %v2840
    %v2913 = vpop.f32.mrf.mxu0
    %v2914 = vadd.f32 1e-09, %v2913
    %v2915 = vpop.f32.mrf.mxu0
    %2916 = vdwg.mxu0
    %v2917 = vlog2.pop %v2909
    %v2918 = vmul.f32 %v2917, 0.6931472
    %v2919 = vlog2.pop %v2914
    %v2920 = vmul.f32 %v2919, 0.6931472
    %2921 = vst.msk [vmem:[%s25 + $0x48] sm:$0xff] %vm1409, %v2918
    %2922 = vst.msk [vmem:[%s25 + $0x50] sm:$0xff] %vm1409, %v2920
    %v2924 = vsel %vm2639, %v2606, 0
    %2926 = vmatprep.subr.mxu0 0.0
    %2927 = vmatpush1.msra.mxu0 0.0
    %2928 = vmatprep.subr.mxu0 0.0
    %2929 = vmatpush1.msra.mxu0 0.0
    %2930 = vmatprep.subr.mxu0 0.0
    %2931 = vmatpush1.msra.mxu0 0.0
    %2932 = vmatprep.subr.mxu0 0.0
    %2933 = vmatpush1.msra.mxu0 0.0
    %2934 = vmatprep.subr.mxu0 0.0
    %2935 = vmatpush1.msra.mxu0 0.0
    %2936 = vmatprep.subr.mxu0 0.0
    %2937 = vmatpush1.msra.mxu0 0.0
    %2938 = vmatprep.subr.mxu0 0.0
    %2939 = vmatpush1.msra.mxu0 0.0
    %2940 = vmatprep.subr.mxu0 0.0
    %2941 = vmatpush1.msra.mxu0 0.0
    %2942 = vmatprep.subr.mxu0 0.0
    %2943 = vmatpush1.msra.mxu0 0.0
    %2944 = vmatprep.subr.mxu0 0.0
    %2945 = vmatpush1.msra.mxu0 0.0
    %2946 = vmatprep.subr.mxu0 0.0
    %2947 = vmatpush1.msra.mxu0 0.0
    %2948 = vmatprep.subr.mxu0 0.0
    %2949 = vmatpush1.msra.mxu0 0.0
    %2950 = vmatprep.subr.mxu0 0.0
    %2951 = vmatpush1.msra.mxu0 0.0
    %2952 = vmatprep.subr.mxu0 0.0
    %2953 = vmatpush1.msra.mxu0 0.0
    %2954 = vmatprep.subr.mxu0 0.0
    %2955 = vmatpush1.msra.mxu0 0.0
    %2956 = vmatprep.subr.mxu0 0.0
    %2957 = vmatpush1.msra.mxu0 %v1420
    %2958 = vmatprep.subr.mxu0 0.0
    %2959 = vmatpush2.msra.mxu0 0.0
    %2960 = vmatprep.subr.mxu0 0.0
    %2961 = vmatpush2.msra.mxu0 0.0
    %2962 = vmatprep.subr.mxu0 0.0
    %2963 = vmatpush2.msra.mxu0 0.0
    %2964 = vmatprep.subr.mxu0 0.0
    %2965 = vmatpush2.msra.mxu0 0.0
    %2966 = vmatprep.subr.mxu0 0.0
    %2967 = vmatpush2.msra.mxu0 0.0
    %2968 = vmatprep.subr.mxu0 0.0
    %2969 = vmatpush2.msra.mxu0 0.0
    %2970 = vmatprep.subr.mxu0 0.0
    %2971 = vmatpush2.msra.mxu0 0.0
    %2972 = vmatprep.subr.mxu0 0.0
    %2973 = vmatpush2.msra.mxu0 0.0
    %2974 = vmatprep.subr.mxu0 0.0
    %2975 = vmatpush2.msra.mxu0 0.0
    %2976 = vmatprep.subr.mxu0 0.0
    %2977 = vmatpush2.msra.mxu0 0.0
    %2978 = vmatprep.subr.mxu0 0.0
    %2979 = vmatpush2.msra.mxu0 0.0
    %2980 = vmatprep.subr.mxu0 0.0
    %2981 = vmatpush2.msra.mxu0 0.0
    %2982 = vmatprep.subr.mxu0 0.0
    %2983 = vmatpush2.msra.mxu0 0.0
    %2984 = vmatprep.subr.mxu0 0.0
    %2985 = vmatpush2.msra.mxu0 0.0
    %2986 = vmatprep.subr.mxu0 0.0
    %2987 = vmatpush2.msra.mxu0 0.0
    %2988 = vmatprep.subr.mxu0 0.0
    %2989 = vmatpush2.msra.mxu0 0.0
    %2990 = vmatprep.mubr.f32.mxu0 0.0
    %2991 = vmatmul.mubr.f32.gmra.mxu0 %v2924
    %v2992 = vpop.f32.mrf.mxu0
    %v2993 = vadd.f32 1e-09, %v2992
    %v2994 = vpop.f32.mrf.mxu0
    %2995 = vdwg.mxu0
    %v2996 = vlog2.pop %v2993
    %v2997 = vmul.f32 %v2996, 0.6931472
    %vm2998 = vcmask 122880
    %2999 = vst.msk [vmem:[%s25 + $0x58] sm:$0x1] %vm2998, %v2997
    %3000 = vxpose.xlu0.b32.start [1/16] %v1132, 128
    %3001 = vxpose.xlu0.b32.cont [2/16] %v1137, 128
    %3002 = vxpose.xlu0.b32.cont [3/16] 0.0, 128
    %3003 = vxpose.xlu0.b32.cont [4/16] 0.0, 128
    %3004 = vxpose.xlu0.b32.cont [5/16] 0.0, 128
    %3005 = vxpose.xlu0.b32.cont [6/16] 0.0, 128
    %3006 = vxpose.xlu0.b32.cont [7/16] 0.0, 128
    %3007 = vxpose.xlu0.b32.cont [8/16] 0.0, 128
    %3008 = vxpose.xlu0.b32.cont [9/16] 0.0, 128
    %3009 = vxpose.xlu0.b32.cont [10/16] 0.0, 128
    %3010 = vxpose.xlu0.b32.cont [11/16] 0.0, 128
    %3011 = vxpose.xlu0.b32.cont [12/16] 0.0, 128
    %3012 = vxpose.xlu0.b32.cont [13/16] 0.0, 128
    %3013 = vxpose.xlu0.b32.cont [14/16] 0.0, 128
    %3014 = vxpose.xlu0.b32.cont [15/16] 0.0, 128
    %3015 = vxpose.xlu0.b32.end [16/16] 0.0, 128
    %v3016 = vpop.trf.xlu0
    %v3017 = vpop.trf.xlu0
    %v3018 = vpop.trf.xlu0
    %v3019 = vpop.trf.xlu0
    %v3020 = vpop.trf.xlu0
    %v3021 = vpop.trf.xlu0
    %v3022 = vpop.trf.xlu0
    %v3023 = vpop.trf.xlu0
    %v3024 = vpop.trf.xlu0
    %v3025 = vpop.trf.xlu0
    %v3026 = vpop.trf.xlu0
    %v3027 = vpop.trf.xlu0
    %v3028 = vpop.trf.xlu0
    %v3029 = vpop.trf.xlu0
    %v3030 = vpop.trf.xlu0
    %v3031 = vpop.trf.xlu0
    %v3033 = vsel %vm1409, %v3016, 0
    %v3036 = vsel %vm1409, %v3017, 0
    %3038 = vmatprep.subr.mxu0 0.0
    %3039 = vmatpush1.msra.mxu0 0.0
    %3040 = vmatprep.subr.mxu0 0.0
    %3041 = vmatpush1.msra.mxu0 0.0
    %3042 = vmatprep.subr.mxu0 0.0
    %3043 = vmatpush1.msra.mxu0 0.0
    %3044 = vmatprep.subr.mxu0 0.0
    %3045 = vmatpush1.msra.mxu0 0.0
    %3046 = vmatprep.subr.mxu0 0.0
    %3047 = vmatpush1.msra.mxu0 0.0
    %3048 = vmatprep.subr.mxu0 0.0
    %3049 = vmatpush1.msra.mxu0 0.0
    %3050 = vmatprep.subr.mxu0 0.0
    %3051 = vmatpush1.msra.mxu0 0.0
    %3052 = vmatprep.subr.mxu0 0.0
    %3053 = vmatpush1.msra.mxu0 0.0
    %3054 = vmatprep.subr.mxu0 0.0
    %3055 = vmatpush1.msra.mxu0 0.0
    %3056 = vmatprep.subr.mxu0 0.0
    %3057 = vmatpush1.msra.mxu0 0.0
    %3058 = vmatprep.subr.mxu0 0.0
    %3059 = vmatpush1.msra.mxu0 0.0
    %3060 = vmatprep.subr.mxu0 0.0
    %3061 = vmatpush1.msra.mxu0 0.0
    %3062 = vmatprep.subr.mxu0 0.0
    %3063 = vmatpush1.msra.mxu0 0.0
    %3064 = vmatprep.subr.mxu0 0.0
    %3065 = vmatpush1.msra.mxu0 0.0
    %3066 = vmatprep.subr.mxu0 0.0
    %3067 = vmatpush1.msra.mxu0 %v2111
    %3068 = vmatprep.subr.mxu0 0.0
    %3069 = vmatpush1.msra.mxu0 %v2110
    %3070 = vmatprep.subr.mxu0 0.0
    %3071 = vmatpush2.msra.mxu0 0.0
    %3072 = vmatprep.subr.mxu0 0.0
    %3073 = vmatpush2.msra.mxu0 0.0
    %3074 = vmatprep.subr.mxu0 0.0
    %3075 = vmatpush2.msra.mxu0 0.0
    %3076 = vmatprep.subr.mxu0 0.0
    %3077 = vmatpush2.msra.mxu0 0.0
    %3078 = vmatprep.subr.mxu0 0.0
    %3079 = vmatpush2.msra.mxu0 0.0
    %3080 = vmatprep.subr.mxu0 0.0
    %3081 = vmatpush2.msra.mxu0 0.0
    %3082 = vmatprep.subr.mxu0 0.0
    %3083 = vmatpush2.msra.mxu0 0.0
    %3084 = vmatprep.subr.mxu0 0.0
    %3085 = vmatpush2.msra.mxu0 0.0
    %3086 = vmatprep.subr.mxu0 0.0
    %3087 = vmatpush2.msra.mxu0 0.0
    %3088 = vmatprep.subr.mxu0 0.0
    %3089 = vmatpush2.msra.mxu0 0.0
    %3090 = vmatprep.subr.mxu0 0.0
    %3091 = vmatpush2.msra.mxu0 0.0
    %3092 = vmatprep.subr.mxu0 0.0
    %3093 = vmatpush2.msra.mxu0 0.0
    %3094 = vmatprep.subr.mxu0 0.0
    %3095 = vmatpush2.msra.mxu0 0.0
    %3096 = vmatprep.subr.mxu0 0.0
    %3097 = vmatpush2.msra.mxu0 0.0
    %3098 = vmatprep.subr.mxu0 0.0
    %3099 = vmatpush2.msra.mxu0 0.0
    %3100 = vmatprep.subr.mxu0 0.0
    %3101 = vmatpush2.msra.mxu0 0.0
    %3102 = vmatprep.mubr.f32.mxu0 0.0
    %3103 = vmatmul.mubr.f32.gmra.mxu0 %v3033
    %v3104 = vpop.f32.mrf.mxu0
    %v3105 = vadd.f32 1e-09, %v3104
    %v3106 = vpop.f32.mrf.mxu0
    %3107 = vmatprep.mubr.f32.mxu0 0.0
    %3108 = vmatmul.mubr.f32.gmra.mxu0 %v3036
    %v3109 = vpop.f32.mrf.mxu0
    %v3110 = vadd.f32 1e-09, %v3109
    %v3111 = vpop.f32.mrf.mxu0
    %3112 = vdwg.mxu0
    %v3113 = vlog2.pop %v3105
    %v3114 = vmul.f32 %v3113, 0.6931472
    %v3115 = vlog2.pop %v3110
    %v3116 = vmul.f32 %v3115, 0.6931472
    %3117 = vst.msk [vmem:[%s25 + $0x60] sm:$0xff] %vm1610, %v3114
    %3118 = vst.msk [vmem:[%s25 + $0x68] sm:$0xff] %vm1610, %v3116
    // Predicated region
    $region146: #{forward.1} parent=1 // pred_check
      _
    $region147: #{forward.1} parent=1 // pred_check_branch
      %3120 = sbr.rel (0) target = $region149
    $region148: #{forward.1} parent=1 // pred_region
      _
    $region149: #{forward.1} parent=1 // pred_fallthru
      _
    // Predicated region
    $region150: #{forward.1} parent=1 // pred_check
      _
    $region151: #{forward.1} parent=1 // pred_check_branch
      %3122 = sbr.rel (0) target = $region153
    $region152: #{forward.1} parent=1 // pred_region
      _
    $region153: #{forward.1} parent=1 // pred_fallthru
      _
    %3123 = vsyncpa [#allocation3], 1
    %3124 = vsyncpa [#allocation5], 1
    %3125 = vsyncpa [#allocation8], 1
    %3126 = vsyncpa [#allocation11], 1
    %3127 = vsyncpa [#allocation14], 1
    %3128 = vsyncpa [#allocation17], 1

</llo_original>
